<compile_context>
chip_gen: v5e
topology: v5e:2x2
jax: 0.10.0
libtpu: 0.0.40
codegen_flags: <defaults>
</compile_context>

<pallas_src>
import functools

import jax
import jax.numpy as jnp
from jax.experimental import pallas as pl
from jax.experimental.pallas import tpu as pltpu


# ----------------------------------------------------------------------------
# elementwise helpers (run on the VPU/EUP inside the kernel)
# ----------------------------------------------------------------------------
def _erf(x):
    # Abramowitz & Stegun 7.1.26 polynomial, max abs error ~1.5e-7 (~f32 eps).
    # TODO(synk): use an exact lax.erf lowering in Mosaic once available.
    p = 0.3275911
    a1, a2, a3, a4, a5 = (0.254829592, -0.284496736, 1.421413741,
                          -1.453152027, 1.061405429)
    ax = jnp.abs(x)
    t = 1.0 / (1.0 + p * ax)
    poly = ((((a5 * t + a4) * t + a3) * t + a2) * t + a1) * t
    y = 1.0 - poly * jnp.exp(-ax * ax)
    return jnp.where(x >= 0, y, -y)


def _gelu_exact(x):
    # nn.GELU() default = erf-based ("exact") GELU.
    return 0.5 * x * (1.0 + _erf(x * 0.7071067811865476))


# ----------------------------------------------------------------------------
# fused FeedForward kernel:  o = GELU(x @ W1 + b1) @ W2 + b2
# ----------------------------------------------------------------------------
def _ff_fused_kernel(x_ref, w1_ref, b1_ref, w2_ref, b2_ref, o_ref):
    x = x_ref[...].astype(jnp.float32)

    # Linear1 (+bias) — weights may arrive as bf16; upcast, accumulate in f32.
    h = jnp.dot(x, w1_ref[...].astype(jnp.float32),
                preferred_element_type=jnp.float32)
    h = h + b1_ref[...].astype(jnp.float32)

    # GELU (exact / erf form).  Dropout(p=0) is the identity -> no-op.
    h = _gelu_exact(h)

    # Linear2 (+bias).  The (rows, hidden) intermediate never leaves VMEM.
    y = jnp.dot(h, w2_ref[...].astype(jnp.float32),
                preferred_element_type=jnp.float32)
    y = y + b2_ref[...].astype(jnp.float32)

    o_ref[...] = y.astype(o_ref.dtype)


# ----------------------------------------------------------------------------
# wrapper
# ----------------------------------------------------------------------------
def feed_forward(x, params, *, weight_dtype=jnp.bfloat16, block_rows=256):
    """FeedForward forward pass.

    x:      (..., dim) float32 activations.
    params: dict with w1 (dim, hidden), b1 (hidden,), w2 (hidden, dim), b2 (dim,).
    weight_dtype: dtype used for the weight stream to the kernel (bf16 halves
                  HBM traffic; accumulation stays f32 inside the kernel).
    """
    orig_shape = x.shape
    dim = orig_shape[-1]
    hidden = params["w1"].shape[1]
    assert params["w1"].shape == (dim, hidden)
    assert params["w2"].shape == (hidden, dim)

    x2 = x.reshape(-1, dim)
    m = x2.shape[0]

    # Weights streamed in the requested dtype; biases stay tiny f32 rows.
    w1 = params["w1"].astype(weight_dtype)
    w2 = params["w2"].astype(weight_dtype)
    b1 = params["b1"].reshape(1, hidden).astype(jnp.float32)
    b2 = params["b2"].reshape(1, dim).astype(jnp.float32)

    # Row tiling: single block for small inputs, block_rows otherwise.
    tm = block_rows if (m > block_rows and m % block_rows == 0) else m
    grid = (m // tm,)

    out = pl.pallas_call(
        _ff_fused_kernel,
        out_shape=jax.ShapeDtypeStruct((m, dim), x.dtype),
        grid_spec=pltpu.PrefetchScalarGridSpec(
            num_scalar_prefetch=0,
            grid=grid,
            in_specs=[
                pl.BlockSpec((tm, dim), lambda i: (i, 0)),        # x tile
                pl.BlockSpec((dim, hidden), lambda i: (0, 0)),    # W1 (resident)
                pl.BlockSpec((1, hidden), lambda i: (0, 0)),      # b1
                pl.BlockSpec((hidden, dim), lambda i: (0, 0)),    # W2 (resident)
                pl.BlockSpec((1, dim), lambda i: (0, 0)),         # b2
            ],
            out_specs=pl.BlockSpec((tm, dim), lambda i: (i, 0)),
        ),
        compiler_params=pltpu.CompilerParams(
            dimension_semantics=("parallel",)),
    )(x2, w1, b1, w2, b2)

    return out.reshape(orig_shape)


# ----------------------------------------------------------------------------
# pure-JAX reference (for correctness checking)
# ----------------------------------------------------------------------------
def reference_forward(x, params):
    h = x @ params["w1"] + params["b1"]
    h = jax.nn.gelu(h, approximate=False)     # nn.GELU() exact form
    return h @ params["w2"] + params["b2"]    # dropout(p=0) == identity


# ----------------------------------------------------------------------------
# deterministic small example
# ----------------------------------------------------------------------------
if __name__ == "__main__":
    # Shapes consistent with the module's use in the prompter: dim = mlp_dim = 768.
    B, S, DIM, HIDDEN = 2, 8, 768, 768

    key = jax.random.PRNGKey(0)
    kx, k1, k2, k3, k4 = jax.random.split(key, 5)
    x = jax.random.normal(kx, (B, S, DIM), jnp.float32)
    params = {
        "w1": 0.02 * jax.random.normal(k1, (DIM, HIDDEN), jnp.float32),
        "b1": 0.02 * jax.random.normal(k2, (HIDDEN,), jnp.float32),
        "w2": 0.02 * jax.random.normal(k3, (HIDDEN, DIM), jnp.float32),
        "b2": 0.02 * jax.random.normal(k4, (DIM,), jnp.float32),
    }

    # 1) f32 weight stream: tight check against the pure-JAX reference.
    ff_f32 = jax.jit(functools.partial(feed_forward, weight_dtype=jnp.float32))
    out_f32 = jax.block_until_ready(ff_f32(x, params))
    ref_f32 = reference_forward(x, params)
    assert out_f32.shape == (B, S, DIM) and out_f32.dtype == jnp.float32
    assert bool(jnp.allclose(out_f32, ref_f32, atol=1e-3, rtol=1e-3)), \
        "f32 kernel mismatch vs reference"

    # 2) bf16 weight stream (perf mode): compare against a reference that uses
    #    the SAME bf16-rounded weights, isolating kernel error from the
    #    intentional weight quantization.
    ff_bf16 = jax.jit(functools.partial(feed_forward, weight_dtype=jnp.bfloat16))
    out_bf16 = jax.block_until_ready(ff_bf16(x, params))
    params_rounded = {
        "w1": params["w1"].astype(jnp.bfloat16).astype(jnp.float32),
        "b1": params["b1"],
        "w2": params["w2"].astype(jnp.bfloat16).astype(jnp.float32),
        "b2": params["b2"],
    }
    ref_bf16 = reference_forward(x, params_rounded)
    assert bool(jnp.allclose(out_bf16, ref_bf16, atol=1e-3, rtol=1e-3)), \
        "bf16-weight kernel mismatch vs reference"

    print("KERNEL_OK")
</pallas_src>

<mosaic_0001>
module attributes {stable_mosaic.version = 11 : i64} {
  func.func @_ff_fused_kernel(%arg0: i32, %arg1: memref<16x768xf32, #tpu.memory_space<vmem>>, %arg2: memref<768x768xf32, #tpu.memory_space<vmem>>, %arg3: memref<1x768xf32, #tpu.memory_space<vmem>>, %arg4: memref<768x768xf32, #tpu.memory_space<vmem>>, %arg5: memref<1x768xf32, #tpu.memory_space<vmem>>, %arg6: memref<16x768xf32, #tpu.memory_space<vmem>>) attributes {dimension_semantics = [#tpu.dimension_semantics<parallel>], iteration_bounds = array<i64: 1>, scalar_prefetch = 0 : i64, scratch_operands = 0 : i64, tpu.core_type = #tpu.core_type<tc>, window_params = [{transform_indices = @transform_0, window_bounds = array<i64: 16, 768>}, {pipeline_mode = #tpu.pipeline_mode<synchronous>, transform_indices = @transform_1, window_bounds = array<i64: 768, 768>}, {pipeline_mode = #tpu.pipeline_mode<synchronous>, transform_indices = @transform_2, window_bounds = array<i64: 1, 768>}, {pipeline_mode = #tpu.pipeline_mode<synchronous>, transform_indices = @transform_3, window_bounds = array<i64: 768, 768>}, {pipeline_mode = #tpu.pipeline_mode<synchronous>, transform_indices = @transform_4, window_bounds = array<i64: 1, 768>}, {transform_indices = @transform_5, window_bounds = array<i64: 16, 768>}]} {
    %c0 = arith.constant 0 : index
    %c0_0 = arith.constant 0 : index
    %0 = vector.load %arg1[%c0, %c0_0] : memref<16x768xf32, #tpu.memory_space<vmem>>, vector<16x768xf32>
    %c0_1 = arith.constant 0 : index
    %c0_2 = arith.constant 0 : index
    %1 = vector.load %arg2[%c0_1, %c0_2] : memref<768x768xf32, #tpu.memory_space<vmem>>, vector<768x768xf32>
    %cst = arith.constant dense<0.000000e+00> : vector<16x768xf32>
    %2 = tpu.matmul %0, %1, %cst {dimension_numbers = #tpu.dot_dimension_numbers<[1], [0], [0], [1], [0, 0, 1, 1], [], []>} : vector<16x768xf32>, vector<768x768xf32>, vector<16x768xf32> -> vector<16x768xf32>
    %c0_3 = arith.constant 0 : index
    %c0_4 = arith.constant 0 : index
    %3 = vector.load %arg3[%c0_3, %c0_4] : memref<1x768xf32, #tpu.memory_space<vmem>>, vector<1x768xf32>
    %4 = vector.broadcast %3 : vector<1x768xf32> to vector<16x768xf32>
    %5 = arith.addf %2, %4 : vector<16x768xf32>
    %cst_5 = arith.constant 5.000000e-01 : f32
    %6 = vector.broadcast %cst_5 : f32 to vector<16x768xf32>
    %7 = arith.mulf %6, %5 : vector<16x768xf32>
    %cst_6 = arith.constant 0.707106769 : f32
    %8 = vector.broadcast %cst_6 : f32 to vector<16x768xf32>
    %9 = arith.mulf %5, %8 : vector<16x768xf32>
    %10 = math.absf %9 : vector<16x768xf32>
    %cst_7 = arith.constant 0.327591091 : f32
    %11 = vector.broadcast %cst_7 : f32 to vector<16x768xf32>
    %12 = arith.mulf %11, %10 : vector<16x768xf32>
    %cst_8 = arith.constant 1.000000e+00 : f32
    %13 = vector.broadcast %cst_8 : f32 to vector<16x768xf32>
    %14 = arith.addf %13, %12 : vector<16x768xf32>
    %cst_9 = arith.constant 1.000000e+00 : f32
    %15 = vector.broadcast %cst_9 : f32 to vector<16x768xf32>
    %16 = arith.divf %15, %14 : vector<16x768xf32>
    %cst_10 = arith.constant 1.06140542 : f32
    %17 = vector.broadcast %cst_10 : f32 to vector<16x768xf32>
    %18 = arith.mulf %17, %16 : vector<16x768xf32>
    %cst_11 = arith.constant -1.45315206 : f32
    %19 = vector.broadcast %cst_11 : f32 to vector<16x768xf32>
    %20 = arith.addf %18, %19 : vector<16x768xf32>
    %21 = arith.mulf %20, %16 : vector<16x768xf32>
    %cst_12 = arith.constant 1.42141378 : f32
    %22 = vector.broadcast %cst_12 : f32 to vector<16x768xf32>
    %23 = arith.addf %21, %22 : vector<16x768xf32>
    %24 = arith.mulf %23, %16 : vector<16x768xf32>
    %cst_13 = arith.constant -0.284496725 : f32
    %25 = vector.broadcast %cst_13 : f32 to vector<16x768xf32>
    %26 = arith.addf %24, %25 : vector<16x768xf32>
    %27 = arith.mulf %26, %16 : vector<16x768xf32>
    %cst_14 = arith.constant 0.254829586 : f32
    %28 = vector.broadcast %cst_14 : f32 to vector<16x768xf32>
    %29 = arith.addf %27, %28 : vector<16x768xf32>
    %30 = arith.mulf %29, %16 : vector<16x768xf32>
    %cst_15 = arith.constant 0.000000e+00 : f32
    %31 = vector.broadcast %cst_15 : f32 to vector<16x768xf32>
    %32 = arith.subf %31, %10 : vector<16x768xf32>
    %33 = arith.mulf %32, %10 : vector<16x768xf32>
    %34 = math.exp %33 : vector<16x768xf32>
    %35 = arith.mulf %30, %34 : vector<16x768xf32>
    %cst_16 = arith.constant 1.000000e+00 : f32
    %36 = vector.broadcast %cst_16 : f32 to vector<16x768xf32>
    %37 = arith.subf %36, %35 : vector<16x768xf32>
    %cst_17 = arith.constant 0.000000e+00 : f32
    %38 = vector.broadcast %cst_17 : f32 to vector<16x768xf32>
    %39 = arith.cmpf oge, %9, %38 : vector<16x768xf32>
    %cst_18 = arith.constant 0.000000e+00 : f32
    %40 = vector.broadcast %cst_18 : f32 to vector<16x768xf32>
    %41 = arith.subf %40, %37 : vector<16x768xf32>
    %42 = arith.select %39, %37, %41 : vector<16x768xi1>, vector<16x768xf32>
    %cst_19 = arith.constant 1.000000e+00 : f32
    %43 = vector.broadcast %cst_19 : f32 to vector<16x768xf32>
    %44 = arith.addf %43, %42 : vector<16x768xf32>
    %45 = arith.mulf %7, %44 : vector<16x768xf32>
    %c0_20 = arith.constant 0 : index
    %c0_21 = arith.constant 0 : index
    %46 = vector.load %arg4[%c0_20, %c0_21] : memref<768x768xf32, #tpu.memory_space<vmem>>, vector<768x768xf32>
    %cst_22 = arith.constant dense<0.000000e+00> : vector<16x768xf32>
    %47 = tpu.matmul %45, %46, %cst_22 {dimension_numbers = #tpu.dot_dimension_numbers<[1], [0], [0], [1], [0, 0, 1, 1], [], []>} : vector<16x768xf32>, vector<768x768xf32>, vector<16x768xf32> -> vector<16x768xf32>
    %c0_23 = arith.constant 0 : index
    %c0_24 = arith.constant 0 : index
    %48 = vector.load %arg5[%c0_23, %c0_24] : memref<1x768xf32, #tpu.memory_space<vmem>>, vector<1x768xf32>
    %49 = vector.broadcast %48 : vector<1x768xf32> to vector<16x768xf32>
    %50 = arith.addf %47, %49 : vector<16x768xf32>
    %c0_25 = arith.constant 0 : index
    %c0_26 = arith.constant 0 : index
    %51 = vector.load %arg6[%c0_25, %c0_26] : memref<16x768xf32, #tpu.memory_space<vmem>>, vector<16x768xf32>
    tpu.vector_store %arg6[%c0_25, %c0_26], %50 {strides = array<i32>} : memref<16x768xf32, #tpu.memory_space<vmem>>, vector<16x768xf32>,
    return
  }
  func.func @transform_0(%arg0: i32) -> (i32, i32) {
    %c0_i32 = arith.constant 0 : i32
    %c0_i32_0 = arith.constant 0 : i32
    return %arg0, %c0_i32 : i32, i32
  }
  func.func @transform_1(%arg0: i32) -> (i32, i32) {
    %c0_i32 = arith.constant 0 : i32
    %c0_i32_0 = arith.constant 0 : i32
    %c0_i32_1 = arith.constant 0 : i32
    return %c0_i32, %c0_i32_0 : i32, i32
  }
  func.func @transform_2(%arg0: i32) -> (i32, i32) {
    %c0_i32 = arith.constant 0 : i32
    %c0_i32_0 = arith.constant 0 : i32
    %c0_i32_1 = arith.constant 0 : i32
    return %c0_i32, %c0_i32_0 : i32, i32
  }
  func.func @transform_3(%arg0: i32) -> (i32, i32) {
    %c0_i32 = arith.constant 0 : i32
    %c0_i32_0 = arith.constant 0 : i32
    %c0_i32_1 = arith.constant 0 : i32
    return %c0_i32, %c0_i32_0 : i32, i32
  }
  func.func @transform_4(%arg0: i32) -> (i32, i32) {
    %c0_i32 = arith.constant 0 : i32
    %c0_i32_0 = arith.constant 0 : i32
    %c0_i32_1 = arith.constant 0 : i32
    return %c0_i32, %c0_i32_0 : i32, i32
  }
  func.func @transform_5(%arg0: i32) -> (i32, i32) {
    %c0_i32 = arith.constant 0 : i32
    %c0_i32_0 = arith.constant 0 : i32
    return %arg0, %c0_i32 : i32, i32
  }
}

</mosaic_0001>

<llo_original>
// kernel: feed_forward.1
$region0: #{feed_forward.1}
  #allocation0 [shape = 'u32[]', space=smem, size = 0x4, offset = 0x4, fixed_abs, tag = 'smem constant byte address 0x4 - core index']
  #allocation1 [shape = 'u32[72,128]{1,0:T(1,128)}', space=vmem, size = 0x9000, scoped, tag = 'internal scratch']
  %s0 = inlined_call_operand.hbm [shape: f32[16,768], index: 0, kind: input, shape index: {}]
  %s1 = inlined_call_operand.hbm [shape: f32[768,768], index: 1, kind: input, shape index: {}]
  %s2 = inlined_call_operand.vmem [shape: f32[1,768], index: 2, kind: input, shape index: {}]
  %s3 = inlined_call_operand.hbm [shape: f32[768,768], index: 3, kind: input, shape index: {}]
  %s4 = inlined_call_operand.vmem [shape: f32[1,768], index: 4, kind: input, shape index: {}]
  %s5 = inlined_call_operand.hbm [shape: f32[16,768], index: 5, kind: output, shape index: {}]
  %s6 = sld [smem:[#allocation0]]
  $region42: #{feed_forward.1} parent=0
    _
  %s8 = ssub.s32 1, %s6
  %s9 = scalar_select 0, %s8, %s6
  $region1: #{feed_forward.1} parent=0
    #allocation2 [shape = 'u8[49152]{0}', space=vmem, size = 0xc000, scoped, tag = 'input window, operand 0, single buffered']
    #allocation3 [shape = 's32[1]{0}', space=sflag, size = 0x4, scoped, tag = 'scoped memory for feed_forward.1']
    #allocation4 [shape = 's32[1]{0}', space=sflag, size = 0x4, scoped, tag = 'scoped memory for feed_forward.1']
    #allocation5 [shape = 'u8[2359296]{0}', space=vmem, size = 0x240000, scoped, tag = 'input window, operand 1, single buffered']
    #allocation6 [shape = 's32[1]{0}', space=sflag, size = 0x4, scoped, tag = 'scoped memory for feed_forward.1']
    #allocation7 [shape = 'u8[2359296]{0}', space=vmem, size = 0x240000, scoped, tag = 'input window, operand 3, single buffered']
    #allocation8 [shape = 'u8[49152]{0}', space=vmem, size = 0xc000, scoped, tag = 'output window, operand 0, single buffered']
    %10 = vsyncpa [#allocation3], 0
    %11 = vsyncpa [#allocation6], 0
    %12 = vsyncpa [#allocation4], 0
    // Predicated region
    $region2: #{feed_forward.1} parent=1 // pred_check
      _
    $region3: #{feed_forward.1} parent=1 // pred_check_branch
      %14 = sbr.rel (0) target = $region5
    $region4: #{feed_forward.1} parent=1 // pred_region
      %16 = vsyncadd [#allocation3], 0
      %s17 = sshll.u32 %s0, 4
      %s18 = int_to_ptr.hbm [resolvable:$true] %s17
      %s19 = sshll.u32 [#allocation2], 4
      %s20 = int_to_ptr.vmem [resolvable:$true] %s19
      %25 = dma.hbm_to_vmem [thread:$0]  %s18, 1536, %s20, [#allocation3], 768, 768, 48
    $region5: #{feed_forward.1} parent=1 // pred_fallthru
      _
    // Predicated region
    $region6: #{feed_forward.1} parent=1 // pred_check
      _
    $region7: #{feed_forward.1} parent=1 // pred_check_branch
      %27 = sbr.rel (0) target = $region9
    $region8: #{feed_forward.1} parent=1 // pred_region
      %29 = vsyncadd [#allocation6], 0
      %s30 = sshll.u32 %s1, 4
      %s31 = int_to_ptr.hbm [resolvable:$true] %s30
      %s32 = sshll.u32 [#allocation5], 4
      %s33 = int_to_ptr.vmem [resolvable:$true] %s32
      %38 = dma.hbm_to_vmem [thread:$0]  %s31, 73728, %s33, [#allocation6], 768, 768, 48
    $region9: #{feed_forward.1} parent=1 // pred_fallthru
      _
    // Predicated region
    $region10: #{feed_forward.1} parent=1 // pred_check
      _
    $region11: #{feed_forward.1} parent=1 // pred_check_branch
      %40 = sbr.rel (0) target = $region13
    $region12: #{feed_forward.1} parent=1 // pred_region
      _
    $region13: #{feed_forward.1} parent=1 // pred_fallthru
      _
    // Predicated region
    $region14: #{feed_forward.1} parent=1 // pred_check
      _
    $region15: #{feed_forward.1} parent=1 // pred_check_branch
      %42 = sbr.rel (0) target = $region17
    $region16: #{feed_forward.1} parent=1 // pred_region
      %44 = vsyncadd [#allocation6], 0
      %s45 = sshll.u32 %s3, 4
      %s46 = int_to_ptr.hbm [resolvable:$true] %s45
      %s47 = sshll.u32 [#allocation7], 4
      %s48 = int_to_ptr.vmem [resolvable:$true] %s47
      %53 = dma.hbm_to_vmem [thread:$0]  %s46, 73728, %s48, [#allocation6], 768, 768, 48
    $region17: #{feed_forward.1} parent=1 // pred_fallthru
      _
    // Predicated region
    $region18: #{feed_forward.1} parent=1 // pred_check
      _
    $region19: #{feed_forward.1} parent=1 // pred_check_branch
      %55 = sbr.rel (0) target = $region21
    $region20: #{feed_forward.1} parent=1 // pred_region
      _
    $region21: #{feed_forward.1} parent=1 // pred_fallthru
      _
    // Predicated region
    $region22: #{feed_forward.1} parent=1 // pred_check
      _
    $region23: #{feed_forward.1} parent=1 // pred_check_branch
      %57 = sbr.rel (0) target = $region25
    $region24: #{feed_forward.1} parent=1 // pred_region
      %59 = dma.done [#allocation3], 1536
    $region25: #{feed_forward.1} parent=1 // pred_fallthru
      _
    // Predicated region
    $region26: #{feed_forward.1} parent=1 // pred_check
      _
    $region27: #{feed_forward.1} parent=1 // pred_check_branch
      %61 = sbr.rel (0) target = $region29
    $region28: #{feed_forward.1} parent=1 // pred_region
      %63 = dma.done [#allocation6], 73728
    $region29: #{feed_forward.1} parent=1 // pred_fallthru
      _
    // Predicated region
    $region30: #{feed_forward.1} parent=1 // pred_check
      _
    $region31: #{feed_forward.1} parent=1 // pred_check_branch
      %65 = sbr.rel (0) target = $region33
    $region32: #{feed_forward.1} parent=1 // pred_region
      %67 = dma.done [#allocation6], 73728
    $region33: #{feed_forward.1} parent=1 // pred_fallthru
      _
    %v68 = vld [vmem:[#allocation2] sm:$0xff]
    %v69 = vld [vmem:[#allocation2 + $0x8] sm:$0xff]
    %v70 = vld [vmem:[#allocation2 + $0x10] sm:$0xff]
    %v71 = vld [vmem:[#allocation2 + $0x18] sm:$0xff]
    %v72 = vld [vmem:[#allocation2 + $0x20] sm:$0xff]
    %v73 = vld [vmem:[#allocation2 + $0x28] sm:$0xff]
    %v74 = vld [vmem:[#allocation2 + $0x30] sm:$0xff]
    %v75 = vld [vmem:[#allocation2 + $0x38] sm:$0xff]
    %v76 = vld [vmem:[#allocation2 + $0x40] sm:$0xff]
    %v77 = vld [vmem:[#allocation2 + $0x48] sm:$0xff]
    %v78 = vld [vmem:[#allocation2 + $0x50] sm:$0xff]
    %v79 = vld [vmem:[#allocation2 + $0x58] sm:$0xff]
    %v80 = vld [vmem:[#allocation5] sm:$0xff]
    %v81 = vld [vmem:[#allocation5 + $0x8] sm:$0xff]
    %v82 = vld [vmem:[#allocation5 + $0x10] sm:$0xff]
    %v83 = vld [vmem:[#allocation5 + $0x18] sm:$0xff]
    %v84 = vld [vmem:[#allocation5 + $0x20] sm:$0xff]
    %v85 = vld [vmem:[#allocation5 + $0x28] sm:$0xff]
    %v86 = vld [vmem:[#allocation5 + $0x30] sm:$0xff]
    %v87 = vld [vmem:[#allocation5 + $0x38] sm:$0xff]
    %v88 = vld [vmem:[#allocation5 + $0x40] sm:$0xff]
    %v89 = vld [vmem:[#allocation5 + $0x48] sm:$0xff]
    %v90 = vld [vmem:[#allocation5 + $0x50] sm:$0xff]
    %v91 = vld [vmem:[#allocation5 + $0x58] sm:$0xff]
    %v92 = vld [vmem:[#allocation5 + $0x60] sm:$0xff]
    %v93 = vld [vmem:[#allocation5 + $0x68] sm:$0xff]
    %v94 = vld [vmem:[#allocation5 + $0x70] sm:$0xff]
    %v95 = vld [vmem:[#allocation5 + $0x78] sm:$0xff]
    %v96 = vld [vmem:[#allocation5 + $0x80] sm:$0xff]
    %v97 = vld [vmem:[#allocation5 + $0x88] sm:$0xff]
    %v98 = vld [vmem:[#allocation5 + $0x90] sm:$0xff]
    %v99 = vld [vmem:[#allocation5 + $0x98] sm:$0xff]
    %v100 = vld [vmem:[#allocation5 + $0xa0] sm:$0xff]
    %v101 = vld [vmem:[#allocation5 + $0xa8] sm:$0xff]
    %v102 = vld [vmem:[#allocation5 + $0xb0] sm:$0xff]
    %v103 = vld [vmem:[#allocation5 + $0xb8] sm:$0xff]
    %v104 = vld [vmem:[#allocation5 + $0xc0] sm:$0xff]
    %v105 = vld [vmem:[#allocation5 + $0xc8] sm:$0xff]
    %v106 = vld [vmem:[#allocation5 + $0xd0] sm:$0xff]
    %v107 = vld [vmem:[#allocation5 + $0xd8] sm:$0xff]
    %v108 = vld [vmem:[#allocation5 + $0xe0] sm:$0xff]
    %v109 = vld [vmem:[#allocation5 + $0xe8] sm:$0xff]
    %v110 = vld [vmem:[#allocation5 + $0xf0] sm:$0xff]
    %v111 = vld [vmem:[#allocation5 + $0xf8] sm:$0xff]
    %v112 = vld [vmem:[#allocation5 + $0x100] sm:$0xff]
    %v113 = vld [vmem:[#allocation5 + $0x108] sm:$0xff]
    %v114 = vld [vmem:[#allocation5 + $0x110] sm:$0xff]
    %v115 = vld [vmem:[#allocation5 + $0x118] sm:$0xff]
    %v116 = vld [vmem:[#allocation5 + $0x120] sm:$0xff]
    %v117 = vld [vmem:[#allocation5 + $0x128] sm:$0xff]
    %v118 = vld [vmem:[#allocation5 + $0x130] sm:$0xff]
    %v119 = vld [vmem:[#allocation5 + $0x138] sm:$0xff]
    %v120 = vld [vmem:[#allocation5 + $0x140] sm:$0xff]
    %v121 = vld [vmem:[#allocation5 + $0x148] sm:$0xff]
    %v122 = vld [vmem:[#allocation5 + $0x150] sm:$0xff]
    %v123 = vld [vmem:[#allocation5 + $0x158] sm:$0xff]
    %v124 = vld [vmem:[#allocation5 + $0x160] sm:$0xff]
    %v125 = vld [vmem:[#allocation5 + $0x168] sm:$0xff]
    %v126 = vld [vmem:[#allocation5 + $0x170] sm:$0xff]
    %v127 = vld [vmem:[#allocation5 + $0x178] sm:$0xff]
    %v128 = vld [vmem:[#allocation5 + $0x180] sm:$0xff]
    %v129 = vld [vmem:[#allocation5 + $0x188] sm:$0xff]
    %v130 = vld [vmem:[#allocation5 + $0x190] sm:$0xff]
    %v131 = vld [vmem:[#allocation5 + $0x198] sm:$0xff]
    %v132 = vld [vmem:[#allocation5 + $0x1a0] sm:$0xff]
    %v133 = vld [vmem:[#allocation5 + $0x1a8] sm:$0xff]
    %v134 = vld [vmem:[#allocation5 + $0x1b0] sm:$0xff]
    %v135 = vld [vmem:[#allocation5 + $0x1b8] sm:$0xff]
    %v136 = vld [vmem:[#allocation5 + $0x1c0] sm:$0xff]
    %v137 = vld [vmem:[#allocation5 + $0x1c8] sm:$0xff]
    %v138 = vld [vmem:[#allocation5 + $0x1d0] sm:$0xff]
    %v139 = vld [vmem:[#allocation5 + $0x1d8] sm:$0xff]
    %v140 = vld [vmem:[#allocation5 + $0x1e0] sm:$0xff]
    %v141 = vld [vmem:[#allocation5 + $0x1e8] sm:$0xff]
    %v142 = vld [vmem:[#allocation5 + $0x1f0] sm:$0xff]
    %v143 = vld [vmem:[#allocation5 + $0x1f8] sm:$0xff]
    %v144 = vld [vmem:[#allocation5 + $0x200] sm:$0xff]
    %v145 = vld [vmem:[#allocation5 + $0x208] sm:$0xff]
    %v146 = vld [vmem:[#allocation5 + $0x210] sm:$0xff]
    %v147 = vld [vmem:[#allocation5 + $0x218] sm:$0xff]
    %v148 = vld [vmem:[#allocation5 + $0x220] sm:$0xff]
    %v149 = vld [vmem:[#allocation5 + $0x228] sm:$0xff]
    %v150 = vld [vmem:[#allocation5 + $0x230] sm:$0xff]
    %v151 = vld [vmem:[#allocation5 + $0x238] sm:$0xff]
    %v152 = vld [vmem:[#allocation5 + $0x240] sm:$0xff]
    %v153 = vld [vmem:[#allocation5 + $0x248] sm:$0xff]
    %v154 = vld [vmem:[#allocation5 + $0x250] sm:$0xff]
    %v155 = vld [vmem:[#allocation5 + $0x258] sm:$0xff]
    %v156 = vld [vmem:[#allocation5 + $0x260] sm:$0xff]
    %v157 = vld [vmem:[#allocation5 + $0x268] sm:$0xff]
    %v158 = vld [vmem:[#allocation5 + $0x270] sm:$0xff]
    %v159 = vld [vmem:[#allocation5 + $0x278] sm:$0xff]
    %v160 = vld [vmem:[#allocation5 + $0x280] sm:$0xff]
    %v161 = vld [vmem:[#allocation5 + $0x288] sm:$0xff]
    %v162 = vld [vmem:[#allocation5 + $0x290] sm:$0xff]
    %v163 = vld [vmem:[#allocation5 + $0x298] sm:$0xff]
    %v164 = vld [vmem:[#allocation5 + $0x2a0] sm:$0xff]
    %v165 = vld [vmem:[#allocation5 + $0x2a8] sm:$0xff]
    %v166 = vld [vmem:[#allocation5 + $0x2b0] sm:$0xff]
    %v167 = vld [vmem:[#allocation5 + $0x2b8] sm:$0xff]
    %v168 = vld [vmem:[#allocation5 + $0x2c0] sm:$0xff]
    %v169 = vld [vmem:[#allocation5 + $0x2c8] sm:$0xff]
    %v170 = vld [vmem:[#allocation5 + $0x2d0] sm:$0xff]
    %v171 = vld [vmem:[#allocation5 + $0x2d8] sm:$0xff]
    %v172 = vld [vmem:[#allocation5 + $0x2e0] sm:$0xff]
    %v173 = vld [vmem:[#allocation5 + $0x2e8] sm:$0xff]
    %v174 = vld [vmem:[#allocation5 + $0x2f0] sm:$0xff]
    %v175 = vld [vmem:[#allocation5 + $0x2f8] sm:$0xff]
    %v176 = vld [vmem:[#allocation5 + $0x300] sm:$0xff]
    %v177 = vld [vmem:[#allocation5 + $0x308] sm:$0xff]
    %v178 = vld [vmem:[#allocation5 + $0x310] sm:$0xff]
    %v179 = vld [vmem:[#allocation5 + $0x318] sm:$0xff]
    %v180 = vld [vmem:[#allocation5 + $0x320] sm:$0xff]
    %v181 = vld [vmem:[#allocation5 + $0x328] sm:$0xff]
    %v182 = vld [vmem:[#allocation5 + $0x330] sm:$0xff]
    %v183 = vld [vmem:[#allocation5 + $0x338] sm:$0xff]
    %v184 = vld [vmem:[#allocation5 + $0x340] sm:$0xff]
    %v185 = vld [vmem:[#allocation5 + $0x348] sm:$0xff]
    %v186 = vld [vmem:[#allocation5 + $0x350] sm:$0xff]
    %v187 = vld [vmem:[#allocation5 + $0x358] sm:$0xff]
    %v188 = vld [vmem:[#allocation5 + $0x360] sm:$0xff]
    %v189 = vld [vmem:[#allocation5 + $0x368] sm:$0xff]
    %v190 = vld [vmem:[#allocation5 + $0x370] sm:$0xff]
    %v191 = vld [vmem:[#allocation5 + $0x378] sm:$0xff]
    %v192 = vld [vmem:[#allocation5 + $0x380] sm:$0xff]
    %v193 = vld [vmem:[#allocation5 + $0x388] sm:$0xff]
    %v194 = vld [vmem:[#allocation5 + $0x390] sm:$0xff]
    %v195 = vld [vmem:[#allocation5 + $0x398] sm:$0xff]
    %v196 = vld [vmem:[#allocation5 + $0x3a0] sm:$0xff]
    %v197 = vld [vmem:[#allocation5 + $0x3a8] sm:$0xff]
    %v198 = vld [vmem:[#allocation5 + $0x3b0] sm:$0xff]
    %v199 = vld [vmem:[#allocation5 + $0x3b8] sm:$0xff]
    %v200 = vld [vmem:[#allocation5 + $0x3c0] sm:$0xff]
    %v201 = vld [vmem:[#allocation5 + $0x3c8] sm:$0xff]
    %v202 = vld [vmem:[#allocation5 + $0x3d0] sm:$0xff]
    %v203 = vld [vmem:[#allocation5 + $0x3d8] sm:$0xff]
    %v204 = vld [vmem:[#allocation5 + $0x3e0] sm:$0xff]
    %v205 = vld [vmem:[#allocation5 + $0x3e8] sm:$0xff]
    %v206 = vld [vmem:[#allocation5 + $0x3f0] sm:$0xff]
    %v207 = vld [vmem:[#allocation5 + $0x3f8] sm:$0xff]
    %v208 = vld [vmem:[#allocation5 + $0x400] sm:$0xff]
    %v209 = vld [vmem:[#allocation5 + $0x408] sm:$0xff]
    %v210 = vld [vmem:[#allocation5 + $0x410] sm:$0xff]
    %v211 = vld [vmem:[#allocation5 + $0x418] sm:$0xff]
    %v212 = vld [vmem:[#allocation5 + $0x420] sm:$0xff]
    %v213 = vld [vmem:[#allocation5 + $0x428] sm:$0xff]
    %v214 = vld [vmem:[#allocation5 + $0x430] sm:$0xff]
    %v215 = vld [vmem:[#allocation5 + $0x438] sm:$0xff]
    %v216 = vld [vmem:[#allocation5 + $0x440] sm:$0xff]
    %v217 = vld [vmem:[#allocation5 + $0x448] sm:$0xff]
    %v218 = vld [vmem:[#allocation5 + $0x450] sm:$0xff]
    %v219 = vld [vmem:[#allocation5 + $0x458] sm:$0xff]
    %v220 = vld [vmem:[#allocation5 + $0x460] sm:$0xff]
    %v221 = vld [vmem:[#allocation5 + $0x468] sm:$0xff]
    %v222 = vld [vmem:[#allocation5 + $0x470] sm:$0xff]
    %v223 = vld [vmem:[#allocation5 + $0x478] sm:$0xff]
    %v224 = vld [vmem:[#allocation5 + $0x480] sm:$0xff]
    %v225 = vld [vmem:[#allocation5 + $0x488] sm:$0xff]
    %v226 = vld [vmem:[#allocation5 + $0x490] sm:$0xff]
    %v227 = vld [vmem:[#allocation5 + $0x498] sm:$0xff]
    %v228 = vld [vmem:[#allocation5 + $0x4a0] sm:$0xff]
    %v229 = vld [vmem:[#allocation5 + $0x4a8] sm:$0xff]
    %v230 = vld [vmem:[#allocation5 + $0x4b0] sm:$0xff]
    %v231 = vld [vmem:[#allocation5 + $0x4b8] sm:$0xff]
    %v232 = vld [vmem:[#allocation5 + $0x4c0] sm:$0xff]
    %v233 = vld [vmem:[#allocation5 + $0x4c8] sm:$0xff]
    %v234 = vld [vmem:[#allocation5 + $0x4d0] sm:$0xff]
    %v235 = vld [vmem:[#allocation5 + $0x4d8] sm:$0xff]
    %v236 = vld [vmem:[#allocation5 + $0x4e0] sm:$0xff]
    %v237 = vld [vmem:[#allocation5 + $0x4e8] sm:$0xff]
    %v238 = vld [vmem:[#allocation5 + $0x4f0] sm:$0xff]
    %v239 = vld [vmem:[#allocation5 + $0x4f8] sm:$0xff]
    %v240 = vld [vmem:[#allocation5 + $0x500] sm:$0xff]
    %v241 = vld [vmem:[#allocation5 + $0x508] sm:$0xff]
    %v242 = vld [vmem:[#allocation5 + $0x510] sm:$0xff]
    %v243 = vld [vmem:[#allocation5 + $0x518] sm:$0xff]
    %v244 = vld [vmem:[#allocation5 + $0x520] sm:$0xff]
    %v245 = vld [vmem:[#allocation5 + $0x528] sm:$0xff]
    %v246 = vld [vmem:[#allocation5 + $0x530] sm:$0xff]
    %v247 = vld [vmem:[#allocation5 + $0x538] sm:$0xff]
    %v248 = vld [vmem:[#allocation5 + $0x540] sm:$0xff]
    %v249 = vld [vmem:[#allocation5 + $0x548] sm:$0xff]
    %v250 = vld [vmem:[#allocation5 + $0x550] sm:$0xff]
    %v251 = vld [vmem:[#allocation5 + $0x558] sm:$0xff]
    %v252 = vld [vmem:[#allocation5 + $0x560] sm:$0xff]
    %v253 = vld [vmem:[#allocation5 + $0x568] sm:$0xff]
    %v254 = vld [vmem:[#allocation5 + $0x570] sm:$0xff]
    %v255 = vld [vmem:[#allocation5 + $0x578] sm:$0xff]
    %v256 = vld [vmem:[#allocation5 + $0x580] sm:$0xff]
    %v257 = vld [vmem:[#allocation5 + $0x588] sm:$0xff]
    %v258 = vld [vmem:[#allocation5 + $0x590] sm:$0xff]
    %v259 = vld [vmem:[#allocation5 + $0x598] sm:$0xff]
    %v260 = vld [vmem:[#allocation5 + $0x5a0] sm:$0xff]
    %v261 = vld [vmem:[#allocation5 + $0x5a8] sm:$0xff]
    %v262 = vld [vmem:[#allocation5 + $0x5b0] sm:$0xff]
    %v263 = vld [vmem:[#allocation5 + $0x5b8] sm:$0xff]
    %v264 = vld [vmem:[#allocation5 + $0x5c0] sm:$0xff]
    %v265 = vld [vmem:[#allocation5 + $0x5c8] sm:$0xff]
    %v266 = vld [vmem:[#allocation5 + $0x5d0] sm:$0xff]
    %v267 = vld [vmem:[#allocation5 + $0x5d8] sm:$0xff]
    %v268 = vld [vmem:[#allocation5 + $0x5e0] sm:$0xff]
    %v269 = vld [vmem:[#allocation5 + $0x5e8] sm:$0xff]
    %v270 = vld [vmem:[#allocation5 + $0x5f0] sm:$0xff]
    %v271 = vld [vmem:[#allocation5 + $0x5f8] sm:$0xff]
    %v272 = vld [vmem:[#allocation5 + $0x600] sm:$0xff]
    %v273 = vld [vmem:[#allocation5 + $0x608] sm:$0xff]
    %v274 = vld [vmem:[#allocation5 + $0x610] sm:$0xff]
    %v275 = vld [vmem:[#allocation5 + $0x618] sm:$0xff]
    %v276 = vld [vmem:[#allocation5 + $0x620] sm:$0xff]
    %v277 = vld [vmem:[#allocation5 + $0x628] sm:$0xff]
    %v278 = vld [vmem:[#allocation5 + $0x630] sm:$0xff]
    %v279 = vld [vmem:[#allocation5 + $0x638] sm:$0xff]
    %v280 = vld [vmem:[#allocation5 + $0x640] sm:$0xff]
    %v281 = vld [vmem:[#allocation5 + $0x648] sm:$0xff]
    %v282 = vld [vmem:[#allocation5 + $0x650] sm:$0xff]
    %v283 = vld [vmem:[#allocation5 + $0x658] sm:$0xff]
    %v284 = vld [vmem:[#allocation5 + $0x660] sm:$0xff]
    %v285 = vld [vmem:[#allocation5 + $0x668] sm:$0xff]
    %v286 = vld [vmem:[#allocation5 + $0x670] sm:$0xff]
    %v287 = vld [vmem:[#allocation5 + $0x678] sm:$0xff]
    %v288 = vld [vmem:[#allocation5 + $0x680] sm:$0xff]
    %v289 = vld [vmem:[#allocation5 + $0x688] sm:$0xff]
    %v290 = vld [vmem:[#allocation5 + $0x690] sm:$0xff]
    %v291 = vld [vmem:[#allocation5 + $0x698] sm:$0xff]
    %v292 = vld [vmem:[#allocation5 + $0x6a0] sm:$0xff]
    %v293 = vld [vmem:[#allocation5 + $0x6a8] sm:$0xff]
    %v294 = vld [vmem:[#allocation5 + $0x6b0] sm:$0xff]
    %v295 = vld [vmem:[#allocation5 + $0x6b8] sm:$0xff]
    %v296 = vld [vmem:[#allocation5 + $0x6c0] sm:$0xff]
    %v297 = vld [vmem:[#allocation5 + $0x6c8] sm:$0xff]
    %v298 = vld [vmem:[#allocation5 + $0x6d0] sm:$0xff]
    %v299 = vld [vmem:[#allocation5 + $0x6d8] sm:$0xff]
    %v300 = vld [vmem:[#allocation5 + $0x6e0] sm:$0xff]
    %v301 = vld [vmem:[#allocation5 + $0x6e8] sm:$0xff]
    %v302 = vld [vmem:[#allocation5 + $0x6f0] sm:$0xff]
    %v303 = vld [vmem:[#allocation5 + $0x6f8] sm:$0xff]
    %v304 = vld [vmem:[#allocation5 + $0x700] sm:$0xff]
    %v305 = vld [vmem:[#allocation5 + $0x708] sm:$0xff]
    %v306 = vld [vmem:[#allocation5 + $0x710] sm:$0xff]
    %v307 = vld [vmem:[#allocation5 + $0x718] sm:$0xff]
    %v308 = vld [vmem:[#allocation5 + $0x720] sm:$0xff]
    %v309 = vld [vmem:[#allocation5 + $0x728] sm:$0xff]
    %v310 = vld [vmem:[#allocation5 + $0x730] sm:$0xff]
    %v311 = vld [vmem:[#allocation5 + $0x738] sm:$0xff]
    %v312 = vld [vmem:[#allocation5 + $0x740] sm:$0xff]
    %v313 = vld [vmem:[#allocation5 + $0x748] sm:$0xff]
    %v314 = vld [vmem:[#allocation5 + $0x750] sm:$0xff]
    %v315 = vld [vmem:[#allocation5 + $0x758] sm:$0xff]
    %v316 = vld [vmem:[#allocation5 + $0x760] sm:$0xff]
    %v317 = vld [vmem:[#allocation5 + $0x768] sm:$0xff]
    %v318 = vld [vmem:[#allocation5 + $0x770] sm:$0xff]
    %v319 = vld [vmem:[#allocation5 + $0x778] sm:$0xff]
    %v320 = vld [vmem:[#allocation5 + $0x780] sm:$0xff]
    %v321 = vld [vmem:[#allocation5 + $0x788] sm:$0xff]
    %v322 = vld [vmem:[#allocation5 + $0x790] sm:$0xff]
    %v323 = vld [vmem:[#allocation5 + $0x798] sm:$0xff]
    %v324 = vld [vmem:[#allocation5 + $0x7a0] sm:$0xff]
    %v325 = vld [vmem:[#allocation5 + $0x7a8] sm:$0xff]
    %v326 = vld [vmem:[#allocation5 + $0x7b0] sm:$0xff]
    %v327 = vld [vmem:[#allocation5 + $0x7b8] sm:$0xff]
    %v328 = vld [vmem:[#allocation5 + $0x7c0] sm:$0xff]
    %v329 = vld [vmem:[#allocation5 + $0x7c8] sm:$0xff]
    %v330 = vld [vmem:[#allocation5 + $0x7d0] sm:$0xff]
    %v331 = vld [vmem:[#allocation5 + $0x7d8] sm:$0xff]
    %v332 = vld [vmem:[#allocation5 + $0x7e0] sm:$0xff]
    %v333 = vld [vmem:[#allocation5 + $0x7e8] sm:$0xff]
    %v334 = vld [vmem:[#allocation5 + $0x7f0] sm:$0xff]
    %v335 = vld [vmem:[#allocation5 + $0x7f8] sm:$0xff]
    %v336 = vld [vmem:[#allocation5 + $0x800] sm:$0xff]
    %v337 = vld [vmem:[#allocation5 + $0x808] sm:$0xff]
    %v338 = vld [vmem:[#allocation5 + $0x810] sm:$0xff]
    %v339 = vld [vmem:[#allocation5 + $0x818] sm:$0xff]
    %v340 = vld [vmem:[#allocation5 + $0x820] sm:$0xff]
    %v341 = vld [vmem:[#allocation5 + $0x828] sm:$0xff]
    %v342 = vld [vmem:[#allocation5 + $0x830] sm:$0xff]
    %v343 = vld [vmem:[#allocation5 + $0x838] sm:$0xff]
    %v344 = vld [vmem:[#allocation5 + $0x840] sm:$0xff]
    %v345 = vld [vmem:[#allocation5 + $0x848] sm:$0xff]
    %v346 = vld [vmem:[#allocation5 + $0x850] sm:$0xff]
    %v347 = vld [vmem:[#allocation5 + $0x858] sm:$0xff]
    %v348 = vld [vmem:[#allocation5 + $0x860] sm:$0xff]
    %v349 = vld [vmem:[#allocation5 + $0x868] sm:$0xff]
    %v350 = vld [vmem:[#allocation5 + $0x870] sm:$0xff]
    %v351 = vld [vmem:[#allocation5 + $0x878] sm:$0xff]
    %v352 = vld [vmem:[#allocation5 + $0x880] sm:$0xff]
    %v353 = vld [vmem:[#allocation5 + $0x888] sm:$0xff]
    %v354 = vld [vmem:[#allocation5 + $0x890] sm:$0xff]
    %v355 = vld [vmem:[#allocation5 + $0x898] sm:$0xff]
    %v356 = vld [vmem:[#allocation5 + $0x8a0] sm:$0xff]
    %v357 = vld [vmem:[#allocation5 + $0x8a8] sm:$0xff]
    %v358 = vld [vmem:[#allocation5 + $0x8b0] sm:$0xff]
    %v359 = vld [vmem:[#allocation5 + $0x8b8] sm:$0xff]
    %v360 = vld [vmem:[#allocation5 + $0x8c0] sm:$0xff]
    %v361 = vld [vmem:[#allocation5 + $0x8c8] sm:$0xff]
    %v362 = vld [vmem:[#allocation5 + $0x8d0] sm:$0xff]
    %v363 = vld [vmem:[#allocation5 + $0x8d8] sm:$0xff]
    %v364 = vld [vmem:[#allocation5 + $0x8e0] sm:$0xff]
    %v365 = vld [vmem:[#allocation5 + $0x8e8] sm:$0xff]
    %v366 = vld [vmem:[#allocation5 + $0x8f0] sm:$0xff]
    %v367 = vld [vmem:[#allocation5 + $0x8f8] sm:$0xff]
    %v368 = vld [vmem:[#allocation5 + $0x900] sm:$0xff]
    %v369 = vld [vmem:[#allocation5 + $0x908] sm:$0xff]
    %v370 = vld [vmem:[#allocation5 + $0x910] sm:$0xff]
    %v371 = vld [vmem:[#allocation5 + $0x918] sm:$0xff]
    %v372 = vld [vmem:[#allocation5 + $0x920] sm:$0xff]
    %v373 = vld [vmem:[#allocation5 + $0x928] sm:$0xff]
    %v374 = vld [vmem:[#allocation5 + $0x930] sm:$0xff]
    %v375 = vld [vmem:[#allocation5 + $0x938] sm:$0xff]
    %v376 = vld [vmem:[#allocation5 + $0x940] sm:$0xff]
    %v377 = vld [vmem:[#allocation5 + $0x948] sm:$0xff]
    %v378 = vld [vmem:[#allocation5 + $0x950] sm:$0xff]
    %v379 = vld [vmem:[#allocation5 + $0x958] sm:$0xff]
    %v380 = vld [vmem:[#allocation5 + $0x960] sm:$0xff]
    %v381 = vld [vmem:[#allocation5 + $0x968] sm:$0xff]
    %v382 = vld [vmem:[#allocation5 + $0x970] sm:$0xff]
    %v383 = vld [vmem:[#allocation5 + $0x978] sm:$0xff]
    %v384 = vld [vmem:[#allocation5 + $0x980] sm:$0xff]
    %v385 = vld [vmem:[#allocation5 + $0x988] sm:$0xff]
    %v386 = vld [vmem:[#allocation5 + $0x990] sm:$0xff]
    %v387 = vld [vmem:[#allocation5 + $0x998] sm:$0xff]
    %v388 = vld [vmem:[#allocation5 + $0x9a0] sm:$0xff]
    %v389 = vld [vmem:[#allocation5 + $0x9a8] sm:$0xff]
    %v390 = vld [vmem:[#allocation5 + $0x9b0] sm:$0xff]
    %v391 = vld [vmem:[#allocation5 + $0x9b8] sm:$0xff]
    %v392 = vld [vmem:[#allocation5 + $0x9c0] sm:$0xff]
    %v393 = vld [vmem:[#allocation5 + $0x9c8] sm:$0xff]
    %v394 = vld [vmem:[#allocation5 + $0x9d0] sm:$0xff]
    %v395 = vld [vmem:[#allocation5 + $0x9d8] sm:$0xff]
    %v396 = vld [vmem:[#allocation5 + $0x9e0] sm:$0xff]
    %v397 = vld [vmem:[#allocation5 + $0x9e8] sm:$0xff]
    %v398 = vld [vmem:[#allocation5 + $0x9f0] sm:$0xff]
    %v399 = vld [vmem:[#allocation5 + $0x9f8] sm:$0xff]
    %v400 = vld [vmem:[#allocation5 + $0xa00] sm:$0xff]
    %v401 = vld [vmem:[#allocation5 + $0xa08] sm:$0xff]
    %v402 = vld [vmem:[#allocation5 + $0xa10] sm:$0xff]
    %v403 = vld [vmem:[#allocation5 + $0xa18] sm:$0xff]
    %v404 = vld [vmem:[#allocation5 + $0xa20] sm:$0xff]
    %v405 = vld [vmem:[#allocation5 + $0xa28] sm:$0xff]
    %v406 = vld [vmem:[#allocation5 + $0xa30] sm:$0xff]
    %v407 = vld [vmem:[#allocation5 + $0xa38] sm:$0xff]
    %v408 = vld [vmem:[#allocation5 + $0xa40] sm:$0xff]
    %v409 = vld [vmem:[#allocation5 + $0xa48] sm:$0xff]
    %v410 = vld [vmem:[#allocation5 + $0xa50] sm:$0xff]
    %v411 = vld [vmem:[#allocation5 + $0xa58] sm:$0xff]
    %v412 = vld [vmem:[#allocation5 + $0xa60] sm:$0xff]
    %v413 = vld [vmem:[#allocation5 + $0xa68] sm:$0xff]
    %v414 = vld [vmem:[#allocation5 + $0xa70] sm:$0xff]
    %v415 = vld [vmem:[#allocation5 + $0xa78] sm:$0xff]
    %v416 = vld [vmem:[#allocation5 + $0xa80] sm:$0xff]
    %v417 = vld [vmem:[#allocation5 + $0xa88] sm:$0xff]
    %v418 = vld [vmem:[#allocation5 + $0xa90] sm:$0xff]
    %v419 = vld [vmem:[#allocation5 + $0xa98] sm:$0xff]
    %v420 = vld [vmem:[#allocation5 + $0xaa0] sm:$0xff]
    %v421 = vld [vmem:[#allocation5 + $0xaa8] sm:$0xff]
    %v422 = vld [vmem:[#allocation5 + $0xab0] sm:$0xff]
    %v423 = vld [vmem:[#allocation5 + $0xab8] sm:$0xff]
    %v424 = vld [vmem:[#allocation5 + $0xac0] sm:$0xff]
    %v425 = vld [vmem:[#allocation5 + $0xac8] sm:$0xff]
    %v426 = vld [vmem:[#allocation5 + $0xad0] sm:$0xff]
    %v427 = vld [vmem:[#allocation5 + $0xad8] sm:$0xff]
    %v428 = vld [vmem:[#allocation5 + $0xae0] sm:$0xff]
    %v429 = vld [vmem:[#allocation5 + $0xae8] sm:$0xff]
    %v430 = vld [vmem:[#allocation5 + $0xaf0] sm:$0xff]
    %v431 = vld [vmem:[#allocation5 + $0xaf8] sm:$0xff]
    %v432 = vld [vmem:[#allocation5 + $0xb00] sm:$0xff]
    %v433 = vld [vmem:[#allocation5 + $0xb08] sm:$0xff]
    %v434 = vld [vmem:[#allocation5 + $0xb10] sm:$0xff]
    %v435 = vld [vmem:[#allocation5 + $0xb18] sm:$0xff]
    %v436 = vld [vmem:[#allocation5 + $0xb20] sm:$0xff]
    %v437 = vld [vmem:[#allocation5 + $0xb28] sm:$0xff]
    %v438 = vld [vmem:[#allocation5 + $0xb30] sm:$0xff]
    %v439 = vld [vmem:[#allocation5 + $0xb38] sm:$0xff]
    %v440 = vld [vmem:[#allocation5 + $0xb40] sm:$0xff]
    %v441 = vld [vmem:[#allocation5 + $0xb48] sm:$0xff]
    %v442 = vld [vmem:[#allocation5 + $0xb50] sm:$0xff]
    %v443 = vld [vmem:[#allocation5 + $0xb58] sm:$0xff]
    %v444 = vld [vmem:[#allocation5 + $0xb60] sm:$0xff]
    %v445 = vld [vmem:[#allocation5 + $0xb68] sm:$0xff]
    %v446 = vld [vmem:[#allocation5 + $0xb70] sm:$0xff]
    %v447 = vld [vmem:[#allocation5 + $0xb78] sm:$0xff]
    %v448 = vld [vmem:[#allocation5 + $0xb80] sm:$0xff]
    %v449 = vld [vmem:[#allocation5 + $0xb88] sm:$0xff]
    %v450 = vld [vmem:[#allocation5 + $0xb90] sm:$0xff]
    %v451 = vld [vmem:[#allocation5 + $0xb98] sm:$0xff]
    %v452 = vld [vmem:[#allocation5 + $0xba0] sm:$0xff]
    %v453 = vld [vmem:[#allocation5 + $0xba8] sm:$0xff]
    %v454 = vld [vmem:[#allocation5 + $0xbb0] sm:$0xff]
    %v455 = vld [vmem:[#allocation5 + $0xbb8] sm:$0xff]
    %v456 = vld [vmem:[#allocation5 + $0xbc0] sm:$0xff]
    %v457 = vld [vmem:[#allocation5 + $0xbc8] sm:$0xff]
    %v458 = vld [vmem:[#allocation5 + $0xbd0] sm:$0xff]
    %v459 = vld [vmem:[#allocation5 + $0xbd8] sm:$0xff]
    %v460 = vld [vmem:[#allocation5 + $0xbe0] sm:$0xff]
    %v461 = vld [vmem:[#allocation5 + $0xbe8] sm:$0xff]
    %v462 = vld [vmem:[#allocation5 + $0xbf0] sm:$0xff]
    %v463 = vld [vmem:[#allocation5 + $0xbf8] sm:$0xff]
    %v464 = vld [vmem:[#allocation5 + $0xc00] sm:$0xff]
    %v465 = vld [vmem:[#allocation5 + $0xc08] sm:$0xff]
    %v466 = vld [vmem:[#allocation5 + $0xc10] sm:$0xff]
    %v467 = vld [vmem:[#allocation5 + $0xc18] sm:$0xff]
    %v468 = vld [vmem:[#allocation5 + $0xc20] sm:$0xff]
    %v469 = vld [vmem:[#allocation5 + $0xc28] sm:$0xff]
    %v470 = vld [vmem:[#allocation5 + $0xc30] sm:$0xff]
    %v471 = vld [vmem:[#allocation5 + $0xc38] sm:$0xff]
    %v472 = vld [vmem:[#allocation5 + $0xc40] sm:$0xff]
    %v473 = vld [vmem:[#allocation5 + $0xc48] sm:$0xff]
    %v474 = vld [vmem:[#allocation5 + $0xc50] sm:$0xff]
    %v475 = vld [vmem:[#allocation5 + $0xc58] sm:$0xff]
    %v476 = vld [vmem:[#allocation5 + $0xc60] sm:$0xff]
    %v477 = vld [vmem:[#allocation5 + $0xc68] sm:$0xff]
    %v478 = vld [vmem:[#allocation5 + $0xc70] sm:$0xff]
    %v479 = vld [vmem:[#allocation5 + $0xc78] sm:$0xff]
    %v480 = vld [vmem:[#allocation5 + $0xc80] sm:$0xff]
    %v481 = vld [vmem:[#allocation5 + $0xc88] sm:$0xff]
    %v482 = vld [vmem:[#allocation5 + $0xc90] sm:$0xff]
    %v483 = vld [vmem:[#allocation5 + $0xc98] sm:$0xff]
    %v484 = vld [vmem:[#allocation5 + $0xca0] sm:$0xff]
    %v485 = vld [vmem:[#allocation5 + $0xca8] sm:$0xff]
    %v486 = vld [vmem:[#allocation5 + $0xcb0] sm:$0xff]
    %v487 = vld [vmem:[#allocation5 + $0xcb8] sm:$0xff]
    %v488 = vld [vmem:[#allocation5 + $0xcc0] sm:$0xff]
    %v489 = vld [vmem:[#allocation5 + $0xcc8] sm:$0xff]
    %v490 = vld [vmem:[#allocation5 + $0xcd0] sm:$0xff]
    %v491 = vld [vmem:[#allocation5 + $0xcd8] sm:$0xff]
    %v492 = vld [vmem:[#allocation5 + $0xce0] sm:$0xff]
    %v493 = vld [vmem:[#allocation5 + $0xce8] sm:$0xff]
    %v494 = vld [vmem:[#allocation5 + $0xcf0] sm:$0xff]
    %v495 = vld [vmem:[#allocation5 + $0xcf8] sm:$0xff]
    %v496 = vld [vmem:[#allocation5 + $0xd00] sm:$0xff]
    %v497 = vld [vmem:[#allocation5 + $0xd08] sm:$0xff]
    %v498 = vld [vmem:[#allocation5 + $0xd10] sm:$0xff]
    %v499 = vld [vmem:[#allocation5 + $0xd18] sm:$0xff]
    %v500 = vld [vmem:[#allocation5 + $0xd20] sm:$0xff]
    %v501 = vld [vmem:[#allocation5 + $0xd28] sm:$0xff]
    %v502 = vld [vmem:[#allocation5 + $0xd30] sm:$0xff]
    %v503 = vld [vmem:[#allocation5 + $0xd38] sm:$0xff]
    %v504 = vld [vmem:[#allocation5 + $0xd40] sm:$0xff]
    %v505 = vld [vmem:[#allocation5 + $0xd48] sm:$0xff]
    %v506 = vld [vmem:[#allocation5 + $0xd50] sm:$0xff]
    %v507 = vld [vmem:[#allocation5 + $0xd58] sm:$0xff]
    %v508 = vld [vmem:[#allocation5 + $0xd60] sm:$0xff]
    %v509 = vld [vmem:[#allocation5 + $0xd68] sm:$0xff]
    %v510 = vld [vmem:[#allocation5 + $0xd70] sm:$0xff]
    %v511 = vld [vmem:[#allocation5 + $0xd78] sm:$0xff]
    %v512 = vld [vmem:[#allocation5 + $0xd80] sm:$0xff]
    %v513 = vld [vmem:[#allocation5 + $0xd88] sm:$0xff]
    %v514 = vld [vmem:[#allocation5 + $0xd90] sm:$0xff]
    %v515 = vld [vmem:[#allocation5 + $0xd98] sm:$0xff]
    %v516 = vld [vmem:[#allocation5 + $0xda0] sm:$0xff]
    %v517 = vld [vmem:[#allocation5 + $0xda8] sm:$0xff]
    %v518 = vld [vmem:[#allocation5 + $0xdb0] sm:$0xff]
    %v519 = vld [vmem:[#allocation5 + $0xdb8] sm:$0xff]
    %v520 = vld [vmem:[#allocation5 + $0xdc0] sm:$0xff]
    %v521 = vld [vmem:[#allocation5 + $0xdc8] sm:$0xff]
    %v522 = vld [vmem:[#allocation5 + $0xdd0] sm:$0xff]
    %v523 = vld [vmem:[#allocation5 + $0xdd8] sm:$0xff]
    %v524 = vld [vmem:[#allocation5 + $0xde0] sm:$0xff]
    %v525 = vld [vmem:[#allocation5 + $0xde8] sm:$0xff]
    %v526 = vld [vmem:[#allocation5 + $0xdf0] sm:$0xff]
    %v527 = vld [vmem:[#allocation5 + $0xdf8] sm:$0xff]
    %v528 = vld [vmem:[#allocation5 + $0xe00] sm:$0xff]
    %v529 = vld [vmem:[#allocation5 + $0xe08] sm:$0xff]
    %v530 = vld [vmem:[#allocation5 + $0xe10] sm:$0xff]
    %v531 = vld [vmem:[#allocation5 + $0xe18] sm:$0xff]
    %v532 = vld [vmem:[#allocation5 + $0xe20] sm:$0xff]
    %v533 = vld [vmem:[#allocation5 + $0xe28] sm:$0xff]
    %v534 = vld [vmem:[#allocation5 + $0xe30] sm:$0xff]
    %v535 = vld [vmem:[#allocation5 + $0xe38] sm:$0xff]
    %v536 = vld [vmem:[#allocation5 + $0xe40] sm:$0xff]
    %v537 = vld [vmem:[#allocation5 + $0xe48] sm:$0xff]
    %v538 = vld [vmem:[#allocation5 + $0xe50] sm:$0xff]
    %v539 = vld [vmem:[#allocation5 + $0xe58] sm:$0xff]
    %v540 = vld [vmem:[#allocation5 + $0xe60] sm:$0xff]
    %v541 = vld [vmem:[#allocation5 + $0xe68] sm:$0xff]
    %v542 = vld [vmem:[#allocation5 + $0xe70] sm:$0xff]
    %v543 = vld [vmem:[#allocation5 + $0xe78] sm:$0xff]
    %v544 = vld [vmem:[#allocation5 + $0xe80] sm:$0xff]
    %v545 = vld [vmem:[#allocation5 + $0xe88] sm:$0xff]
    %v546 = vld [vmem:[#allocation5 + $0xe90] sm:$0xff]
    %v547 = vld [vmem:[#allocation5 + $0xe98] sm:$0xff]
    %v548 = vld [vmem:[#allocation5 + $0xea0] sm:$0xff]
    %v549 = vld [vmem:[#allocation5 + $0xea8] sm:$0xff]
    %v550 = vld [vmem:[#allocation5 + $0xeb0] sm:$0xff]
    %v551 = vld [vmem:[#allocation5 + $0xeb8] sm:$0xff]
    %v552 = vld [vmem:[#allocation5 + $0xec0] sm:$0xff]
    %v553 = vld [vmem:[#allocation5 + $0xec8] sm:$0xff]
    %v554 = vld [vmem:[#allocation5 + $0xed0] sm:$0xff]
    %v555 = vld [vmem:[#allocation5 + $0xed8] sm:$0xff]
    %v556 = vld [vmem:[#allocation5 + $0xee0] sm:$0xff]
    %v557 = vld [vmem:[#allocation5 + $0xee8] sm:$0xff]
    %v558 = vld [vmem:[#allocation5 + $0xef0] sm:$0xff]
    %v559 = vld [vmem:[#allocation5 + $0xef8] sm:$0xff]
    %v560 = vld [vmem:[#allocation5 + $0xf00] sm:$0xff]
    %v561 = vld [vmem:[#allocation5 + $0xf08] sm:$0xff]
    %v562 = vld [vmem:[#allocation5 + $0xf10] sm:$0xff]
    %v563 = vld [vmem:[#allocation5 + $0xf18] sm:$0xff]
    %v564 = vld [vmem:[#allocation5 + $0xf20] sm:$0xff]
    %v565 = vld [vmem:[#allocation5 + $0xf28] sm:$0xff]
    %v566 = vld [vmem:[#allocation5 + $0xf30] sm:$0xff]
    %v567 = vld [vmem:[#allocation5 + $0xf38] sm:$0xff]
    %v568 = vld [vmem:[#allocation5 + $0xf40] sm:$0xff]
    %v569 = vld [vmem:[#allocation5 + $0xf48] sm:$0xff]
    %v570 = vld [vmem:[#allocation5 + $0xf50] sm:$0xff]
    %v571 = vld [vmem:[#allocation5 + $0xf58] sm:$0xff]
    %v572 = vld [vmem:[#allocation5 + $0xf60] sm:$0xff]
    %v573 = vld [vmem:[#allocation5 + $0xf68] sm:$0xff]
    %v574 = vld [vmem:[#allocation5 + $0xf70] sm:$0xff]
    %v575 = vld [vmem:[#allocation5 + $0xf78] sm:$0xff]
    %v576 = vld [vmem:[#allocation5 + $0xf80] sm:$0xff]
    %v577 = vld [vmem:[#allocation5 + $0xf88] sm:$0xff]
    %v578 = vld [vmem:[#allocation5 + $0xf90] sm:$0xff]
    %v579 = vld [vmem:[#allocation5 + $0xf98] sm:$0xff]
    %v580 = vld [vmem:[#allocation5 + $0xfa0] sm:$0xff]
    %v581 = vld [vmem:[#allocation5 + $0xfa8] sm:$0xff]
    %v582 = vld [vmem:[#allocation5 + $0xfb0] sm:$0xff]
    %v583 = vld [vmem:[#allocation5 + $0xfb8] sm:$0xff]
    %v584 = vld [vmem:[#allocation5 + $0xfc0] sm:$0xff]
    %v585 = vld [vmem:[#allocation5 + $0xfc8] sm:$0xff]
    %v586 = vld [vmem:[#allocation5 + $0xfd0] sm:$0xff]
    %v587 = vld [vmem:[#allocation5 + $0xfd8] sm:$0xff]
    %v588 = vld [vmem:[#allocation5 + $0xfe0] sm:$0xff]
    %v589 = vld [vmem:[#allocation5 + $0xfe8] sm:$0xff]
    %v590 = vld [vmem:[#allocation5 + $0xff0] sm:$0xff]
    %v591 = vld [vmem:[#allocation5 + $0xff8] sm:$0xff]
    %v592 = vld [vmem:[#allocation5 + $0x1000] sm:$0xff]
    %v593 = vld [vmem:[#allocation5 + $0x1008] sm:$0xff]
    %v594 = vld [vmem:[#allocation5 + $0x1010] sm:$0xff]
    %v595 = vld [vmem:[#allocation5 + $0x1018] sm:$0xff]
    %v596 = vld [vmem:[#allocation5 + $0x1020] sm:$0xff]
    %v597 = vld [vmem:[#allocation5 + $0x1028] sm:$0xff]
    %v598 = vld [vmem:[#allocation5 + $0x1030] sm:$0xff]
    %v599 = vld [vmem:[#allocation5 + $0x1038] sm:$0xff]
    %v600 = vld [vmem:[#allocation5 + $0x1040] sm:$0xff]
    %v601 = vld [vmem:[#allocation5 + $0x1048] sm:$0xff]
    %v602 = vld [vmem:[#allocation5 + $0x1050] sm:$0xff]
    %v603 = vld [vmem:[#allocation5 + $0x1058] sm:$0xff]
    %v604 = vld [vmem:[#allocation5 + $0x1060] sm:$0xff]
    %v605 = vld [vmem:[#allocation5 + $0x1068] sm:$0xff]
    %v606 = vld [vmem:[#allocation5 + $0x1070] sm:$0xff]
    %v607 = vld [vmem:[#allocation5 + $0x1078] sm:$0xff]
    %v608 = vld [vmem:[#allocation5 + $0x1080] sm:$0xff]
    %v609 = vld [vmem:[#allocation5 + $0x1088] sm:$0xff]
    %v610 = vld [vmem:[#allocation5 + $0x1090] sm:$0xff]
    %v611 = vld [vmem:[#allocation5 + $0x1098] sm:$0xff]
    %v612 = vld [vmem:[#allocation5 + $0x10a0] sm:$0xff]
    %v613 = vld [vmem:[#allocation5 + $0x10a8] sm:$0xff]
    %v614 = vld [vmem:[#allocation5 + $0x10b0] sm:$0xff]
    %v615 = vld [vmem:[#allocation5 + $0x10b8] sm:$0xff]
    %v616 = vld [vmem:[#allocation5 + $0x10c0] sm:$0xff]
    %v617 = vld [vmem:[#allocation5 + $0x10c8] sm:$0xff]
    %v618 = vld [vmem:[#allocation5 + $0x10d0] sm:$0xff]
    %v619 = vld [vmem:[#allocation5 + $0x10d8] sm:$0xff]
    %v620 = vld [vmem:[#allocation5 + $0x10e0] sm:$0xff]
    %v621 = vld [vmem:[#allocation5 + $0x10e8] sm:$0xff]
    %v622 = vld [vmem:[#allocation5 + $0x10f0] sm:$0xff]
    %v623 = vld [vmem:[#allocation5 + $0x10f8] sm:$0xff]
    %v624 = vld [vmem:[#allocation5 + $0x1100] sm:$0xff]
    %v625 = vld [vmem:[#allocation5 + $0x1108] sm:$0xff]
    %v626 = vld [vmem:[#allocation5 + $0x1110] sm:$0xff]
    %v627 = vld [vmem:[#allocation5 + $0x1118] sm:$0xff]
    %v628 = vld [vmem:[#allocation5 + $0x1120] sm:$0xff]
    %v629 = vld [vmem:[#allocation5 + $0x1128] sm:$0xff]
    %v630 = vld [vmem:[#allocation5 + $0x1130] sm:$0xff]
    %v631 = vld [vmem:[#allocation5 + $0x1138] sm:$0xff]
    %v632 = vld [vmem:[#allocation5 + $0x1140] sm:$0xff]
    %v633 = vld [vmem:[#allocation5 + $0x1148] sm:$0xff]
    %v634 = vld [vmem:[#allocation5 + $0x1150] sm:$0xff]
    %v635 = vld [vmem:[#allocation5 + $0x1158] sm:$0xff]
    %v636 = vld [vmem:[#allocation5 + $0x1160] sm:$0xff]
    %v637 = vld [vmem:[#allocation5 + $0x1168] sm:$0xff]
    %v638 = vld [vmem:[#allocation5 + $0x1170] sm:$0xff]
    %v639 = vld [vmem:[#allocation5 + $0x1178] sm:$0xff]
    %v640 = vld [vmem:[#allocation5 + $0x1180] sm:$0xff]
    %v641 = vld [vmem:[#allocation5 + $0x1188] sm:$0xff]
    %v642 = vld [vmem:[#allocation5 + $0x1190] sm:$0xff]
    %v643 = vld [vmem:[#allocation5 + $0x1198] sm:$0xff]
    %v644 = vld [vmem:[#allocation5 + $0x11a0] sm:$0xff]
    %v645 = vld [vmem:[#allocation5 + $0x11a8] sm:$0xff]
    %v646 = vld [vmem:[#allocation5 + $0x11b0] sm:$0xff]
    %v647 = vld [vmem:[#allocation5 + $0x11b8] sm:$0xff]
    %v648 = vld [vmem:[#allocation5 + $0x11c0] sm:$0xff]
    %v649 = vld [vmem:[#allocation5 + $0x11c8] sm:$0xff]
    %v650 = vld [vmem:[#allocation5 + $0x11d0] sm:$0xff]
    %v651 = vld [vmem:[#allocation5 + $0x11d8] sm:$0xff]
    %v652 = vld [vmem:[#allocation5 + $0x11e0] sm:$0xff]
    %v653 = vld [vmem:[#allocation5 + $0x11e8] sm:$0xff]
    %v654 = vld [vmem:[#allocation5 + $0x11f0] sm:$0xff]
    %v655 = vld [vmem:[#allocation5 + $0x11f8] sm:$0xff]
    %v656 = vld [vmem:[%s2] sm:$0x3f]
    %v658 = vperm.slane %v656, 0
    %v659 = vperm.slane %v656, 1
    %v660 = vperm.slane %v656, 2
    %v661 = vperm.slane %v656, 3
    %v662 = vperm.slane %v656, 4
    %v663 = vperm.slane %v656, 5
    %670 = vmatpush.msra.mxu0 %v170
    %671 = vmatpush.msra.mxu0 %v164
    %672 = vmatpush.msra.mxu0 %v158
    %673 = vmatpush.msra.mxu0 %v152
    %674 = vmatpush.msra.mxu0 %v146
    %675 = vmatpush.msra.mxu0 %v140
    %676 = vmatpush.msra.mxu0 %v134
    %677 = vmatpush.msra.mxu0 %v128
    %678 = vmatpush.msra.mxu0 %v122
    %679 = vmatpush.msra.mxu0 %v116
    %680 = vmatpush.msra.mxu0 %v110
    %681 = vmatpush.msra.mxu0 %v104
    %682 = vmatpush.msra.mxu0 %v98
    %683 = vmatpush.msra.mxu0 %v92
    %684 = vmatpush.msra.mxu0 %v86
    %685 = vmatpush.msra.mxu0 %v80
    %686 = vmatmul.f32.gmra.mxu0 %v68
    %v687 = vpop.f32.mrf.mxu0
    %v688 = vadd.f32 %v658, %v687
    %689 = vmatmul.f32.gmra.mxu0 %v74
    %v690 = vpop.f32.mrf.mxu0
    %v691 = vadd.f32 %v658, %v690
    %692 = vdwg.mxu0
    %693 = vmatpush.msra.mxu0 %v266
    %694 = vmatpush.msra.mxu0 %v260
    %695 = vmatpush.msra.mxu0 %v254
    %696 = vmatpush.msra.mxu0 %v248
    %697 = vmatpush.msra.mxu0 %v242
    %698 = vmatpush.msra.mxu0 %v236
    %699 = vmatpush.msra.mxu0 %v230
    %700 = vmatpush.msra.mxu0 %v224
    %701 = vmatpush.msra.mxu0 %v218
    %702 = vmatpush.msra.mxu0 %v212
    %703 = vmatpush.msra.mxu0 %v206
    %704 = vmatpush.msra.mxu0 %v200
    %705 = vmatpush.msra.mxu0 %v194
    %706 = vmatpush.msra.mxu0 %v188
    %707 = vmatpush.msra.mxu0 %v182
    %708 = vmatpush.msra.mxu0 %v176
    %709 = vmatmul.f32.gmra.mxu0 %v69
    %v710 = vpop.f32.mrf.mxu0
    %v711 = vadd.f32 %v688, %v710
    %712 = vmatmul.f32.gmra.mxu0 %v75
    %v713 = vpop.f32.mrf.mxu0
    %v714 = vadd.f32 %v691, %v713
    %715 = vdwg.mxu0
    %716 = vmatpush.msra.mxu0 %v362
    %717 = vmatpush.msra.mxu0 %v356
    %718 = vmatpush.msra.mxu0 %v350
    %719 = vmatpush.msra.mxu0 %v344
    %720 = vmatpush.msra.mxu0 %v338
    %721 = vmatpush.msra.mxu0 %v332
    %722 = vmatpush.msra.mxu0 %v326
    %723 = vmatpush.msra.mxu0 %v320
    %724 = vmatpush.msra.mxu0 %v314
    %725 = vmatpush.msra.mxu0 %v308
    %726 = vmatpush.msra.mxu0 %v302
    %727 = vmatpush.msra.mxu0 %v296
    %728 = vmatpush.msra.mxu0 %v290
    %729 = vmatpush.msra.mxu0 %v284
    %730 = vmatpush.msra.mxu0 %v278
    %731 = vmatpush.msra.mxu0 %v272
    %732 = vmatmul.f32.gmra.mxu0 %v70
    %v733 = vpop.f32.mrf.mxu0
    %v734 = vadd.f32 %v711, %v733
    %735 = vmatmul.f32.gmra.mxu0 %v76
    %v736 = vpop.f32.mrf.mxu0
    %v737 = vadd.f32 %v714, %v736
    %738 = vdwg.mxu0
    %739 = vmatpush.msra.mxu0 %v458
    %740 = vmatpush.msra.mxu0 %v452
    %741 = vmatpush.msra.mxu0 %v446
    %742 = vmatpush.msra.mxu0 %v440
    %743 = vmatpush.msra.mxu0 %v434
    %744 = vmatpush.msra.mxu0 %v428
    %745 = vmatpush.msra.mxu0 %v422
    %746 = vmatpush.msra.mxu0 %v416
    %747 = vmatpush.msra.mxu0 %v410
    %748 = vmatpush.msra.mxu0 %v404
    %749 = vmatpush.msra.mxu0 %v398
    %750 = vmatpush.msra.mxu0 %v392
    %751 = vmatpush.msra.mxu0 %v386
    %752 = vmatpush.msra.mxu0 %v380
    %753 = vmatpush.msra.mxu0 %v374
    %754 = vmatpush.msra.mxu0 %v368
    %755 = vmatmul.f32.gmra.mxu0 %v71
    %v756 = vpop.f32.mrf.mxu0
    %v757 = vadd.f32 %v734, %v756
    %758 = vmatmul.f32.gmra.mxu0 %v77
    %v759 = vpop.f32.mrf.mxu0
    %v760 = vadd.f32 %v737, %v759
    %761 = vdwg.mxu0
    %762 = vmatpush.msra.mxu0 %v554
    %763 = vmatpush.msra.mxu0 %v548
    %764 = vmatpush.msra.mxu0 %v542
    %765 = vmatpush.msra.mxu0 %v536
    %766 = vmatpush.msra.mxu0 %v530
    %767 = vmatpush.msra.mxu0 %v524
    %768 = vmatpush.msra.mxu0 %v518
    %769 = vmatpush.msra.mxu0 %v512
    %770 = vmatpush.msra.mxu0 %v506
    %771 = vmatpush.msra.mxu0 %v500
    %772 = vmatpush.msra.mxu0 %v494
    %773 = vmatpush.msra.mxu0 %v488
    %774 = vmatpush.msra.mxu0 %v482
    %775 = vmatpush.msra.mxu0 %v476
    %776 = vmatpush.msra.mxu0 %v470
    %777 = vmatpush.msra.mxu0 %v464
    %778 = vmatmul.f32.gmra.mxu0 %v72
    %v779 = vpop.f32.mrf.mxu0
    %v780 = vadd.f32 %v757, %v779
    %781 = vmatmul.f32.gmra.mxu0 %v78
    %v782 = vpop.f32.mrf.mxu0
    %v783 = vadd.f32 %v760, %v782
    %784 = vdwg.mxu0
    %785 = vmatpush.msra.mxu0 %v650
    %786 = vmatpush.msra.mxu0 %v644
    %787 = vmatpush.msra.mxu0 %v638
    %788 = vmatpush.msra.mxu0 %v632
    %789 = vmatpush.msra.mxu0 %v626
    %790 = vmatpush.msra.mxu0 %v620
    %791 = vmatpush.msra.mxu0 %v614
    %792 = vmatpush.msra.mxu0 %v608
    %793 = vmatpush.msra.mxu0 %v602
    %794 = vmatpush.msra.mxu0 %v596
    %795 = vmatpush.msra.mxu0 %v590
    %796 = vmatpush.msra.mxu0 %v584
    %797 = vmatpush.msra.mxu0 %v578
    %798 = vmatpush.msra.mxu0 %v572
    %799 = vmatpush.msra.mxu0 %v566
    %800 = vmatpush.msra.mxu0 %v560
    %801 = vmatmul.f32.gmra.mxu0 %v73
    %v802 = vpop.f32.mrf.mxu0
    %v803 = vadd.f32 %v780, %v802
    %804 = vmatmul.f32.gmra.mxu0 %v79
    %v805 = vpop.f32.mrf.mxu0
    %v806 = vadd.f32 %v783, %v805
    %807 = vdwg.mxu0
    %808 = vmatpush.msra.mxu0 %v171
    %809 = vmatpush.msra.mxu0 %v165
    %810 = vmatpush.msra.mxu0 %v159
    %811 = vmatpush.msra.mxu0 %v153
    %812 = vmatpush.msra.mxu0 %v147
    %813 = vmatpush.msra.mxu0 %v141
    %814 = vmatpush.msra.mxu0 %v135
    %815 = vmatpush.msra.mxu0 %v129
    %816 = vmatpush.msra.mxu0 %v123
    %817 = vmatpush.msra.mxu0 %v117
    %818 = vmatpush.msra.mxu0 %v111
    %819 = vmatpush.msra.mxu0 %v105
    %820 = vmatpush.msra.mxu0 %v99
    %821 = vmatpush.msra.mxu0 %v93
    %822 = vmatpush.msra.mxu0 %v87
    %823 = vmatpush.msra.mxu0 %v81
    %824 = vmatmul.f32.gmra.mxu0 %v68
    %v825 = vpop.f32.mrf.mxu0
    %v826 = vadd.f32 %v659, %v825
    %827 = vmatmul.f32.gmra.mxu0 %v74
    %v828 = vpop.f32.mrf.mxu0
    %v829 = vadd.f32 %v659, %v828
    %830 = vdwg.mxu0
    %831 = vmatpush.msra.mxu0 %v267
    %832 = vmatpush.msra.mxu0 %v261
    %833 = vmatpush.msra.mxu0 %v255
    %834 = vmatpush.msra.mxu0 %v249
    %835 = vmatpush.msra.mxu0 %v243
    %836 = vmatpush.msra.mxu0 %v237
    %837 = vmatpush.msra.mxu0 %v231
    %838 = vmatpush.msra.mxu0 %v225
    %839 = vmatpush.msra.mxu0 %v219
    %840 = vmatpush.msra.mxu0 %v213
    %841 = vmatpush.msra.mxu0 %v207
    %842 = vmatpush.msra.mxu0 %v201
    %843 = vmatpush.msra.mxu0 %v195
    %844 = vmatpush.msra.mxu0 %v189
    %845 = vmatpush.msra.mxu0 %v183
    %846 = vmatpush.msra.mxu0 %v177
    %847 = vmatmul.f32.gmra.mxu0 %v69
    %v848 = vpop.f32.mrf.mxu0
    %v849 = vadd.f32 %v826, %v848
    %850 = vmatmul.f32.gmra.mxu0 %v75
    %v851 = vpop.f32.mrf.mxu0
    %v852 = vadd.f32 %v829, %v851
    %853 = vdwg.mxu0
    %854 = vmatpush.msra.mxu0 %v363
    %855 = vmatpush.msra.mxu0 %v357
    %856 = vmatpush.msra.mxu0 %v351
    %857 = vmatpush.msra.mxu0 %v345
    %858 = vmatpush.msra.mxu0 %v339
    %859 = vmatpush.msra.mxu0 %v333
    %860 = vmatpush.msra.mxu0 %v327
    %861 = vmatpush.msra.mxu0 %v321
    %862 = vmatpush.msra.mxu0 %v315
    %863 = vmatpush.msra.mxu0 %v309
    %864 = vmatpush.msra.mxu0 %v303
    %865 = vmatpush.msra.mxu0 %v297
    %866 = vmatpush.msra.mxu0 %v291
    %867 = vmatpush.msra.mxu0 %v285
    %868 = vmatpush.msra.mxu0 %v279
    %869 = vmatpush.msra.mxu0 %v273
    %870 = vmatmul.f32.gmra.mxu0 %v70
    %v871 = vpop.f32.mrf.mxu0
    %v872 = vadd.f32 %v849, %v871
    %873 = vmatmul.f32.gmra.mxu0 %v76
    %v874 = vpop.f32.mrf.mxu0
    %v875 = vadd.f32 %v852, %v874
    %876 = vdwg.mxu0
    %877 = vmatpush.msra.mxu0 %v459
    %878 = vmatpush.msra.mxu0 %v453
    %879 = vmatpush.msra.mxu0 %v447
    %880 = vmatpush.msra.mxu0 %v441
    %881 = vmatpush.msra.mxu0 %v435
    %882 = vmatpush.msra.mxu0 %v429
    %883 = vmatpush.msra.mxu0 %v423
    %884 = vmatpush.msra.mxu0 %v417
    %885 = vmatpush.msra.mxu0 %v411
    %886 = vmatpush.msra.mxu0 %v405
    %887 = vmatpush.msra.mxu0 %v399
    %888 = vmatpush.msra.mxu0 %v393
    %889 = vmatpush.msra.mxu0 %v387
    %890 = vmatpush.msra.mxu0 %v381
    %891 = vmatpush.msra.mxu0 %v375
    %892 = vmatpush.msra.mxu0 %v369
    %893 = vmatmul.f32.gmra.mxu0 %v71
    %v894 = vpop.f32.mrf.mxu0
    %v895 = vadd.f32 %v872, %v894
    %896 = vmatmul.f32.gmra.mxu0 %v77
    %v897 = vpop.f32.mrf.mxu0
    %v898 = vadd.f32 %v875, %v897
    %899 = vdwg.mxu0
    %900 = vmatpush.msra.mxu0 %v555
    %901 = vmatpush.msra.mxu0 %v549
    %902 = vmatpush.msra.mxu0 %v543
    %903 = vmatpush.msra.mxu0 %v537
    %904 = vmatpush.msra.mxu0 %v531
    %905 = vmatpush.msra.mxu0 %v525
    %906 = vmatpush.msra.mxu0 %v519
    %907 = vmatpush.msra.mxu0 %v513
    %908 = vmatpush.msra.mxu0 %v507
    %909 = vmatpush.msra.mxu0 %v501
    %910 = vmatpush.msra.mxu0 %v495
    %911 = vmatpush.msra.mxu0 %v489
    %912 = vmatpush.msra.mxu0 %v483
    %913 = vmatpush.msra.mxu0 %v477
    %914 = vmatpush.msra.mxu0 %v471
    %915 = vmatpush.msra.mxu0 %v465
    %916 = vmatmul.f32.gmra.mxu0 %v72
    %v917 = vpop.f32.mrf.mxu0
    %v918 = vadd.f32 %v895, %v917
    %919 = vmatmul.f32.gmra.mxu0 %v78
    %v920 = vpop.f32.mrf.mxu0
    %v921 = vadd.f32 %v898, %v920
    %922 = vdwg.mxu0
    %923 = vmatpush.msra.mxu0 %v651
    %924 = vmatpush.msra.mxu0 %v645
    %925 = vmatpush.msra.mxu0 %v639
    %926 = vmatpush.msra.mxu0 %v633
    %927 = vmatpush.msra.mxu0 %v627
    %928 = vmatpush.msra.mxu0 %v621
    %929 = vmatpush.msra.mxu0 %v615
    %930 = vmatpush.msra.mxu0 %v609
    %931 = vmatpush.msra.mxu0 %v603
    %932 = vmatpush.msra.mxu0 %v597
    %933 = vmatpush.msra.mxu0 %v591
    %934 = vmatpush.msra.mxu0 %v585
    %935 = vmatpush.msra.mxu0 %v579
    %936 = vmatpush.msra.mxu0 %v573
    %937 = vmatpush.msra.mxu0 %v567
    %938 = vmatpush.msra.mxu0 %v561
    %939 = vmatmul.f32.gmra.mxu0 %v73
    %v940 = vpop.f32.mrf.mxu0
    %v941 = vadd.f32 %v918, %v940
    %942 = vmatmul.f32.gmra.mxu0 %v79
    %v943 = vpop.f32.mrf.mxu0
    %v944 = vadd.f32 %v921, %v943
    %945 = vdwg.mxu0
    %946 = vmatpush.msra.mxu0 %v172
    %947 = vmatpush.msra.mxu0 %v166
    %948 = vmatpush.msra.mxu0 %v160
    %949 = vmatpush.msra.mxu0 %v154
    %950 = vmatpush.msra.mxu0 %v148
    %951 = vmatpush.msra.mxu0 %v142
    %952 = vmatpush.msra.mxu0 %v136
    %953 = vmatpush.msra.mxu0 %v130
    %954 = vmatpush.msra.mxu0 %v124
    %955 = vmatpush.msra.mxu0 %v118
    %956 = vmatpush.msra.mxu0 %v112
    %957 = vmatpush.msra.mxu0 %v106
    %958 = vmatpush.msra.mxu0 %v100
    %959 = vmatpush.msra.mxu0 %v94
    %960 = vmatpush.msra.mxu0 %v88
    %961 = vmatpush.msra.mxu0 %v82
    %962 = vmatmul.f32.gmra.mxu0 %v68
    %v963 = vpop.f32.mrf.mxu0
    %v964 = vadd.f32 %v660, %v963
    %965 = vmatmul.f32.gmra.mxu0 %v74
    %v966 = vpop.f32.mrf.mxu0
    %v967 = vadd.f32 %v660, %v966
    %968 = vdwg.mxu0
    %969 = vmatpush.msra.mxu0 %v268
    %970 = vmatpush.msra.mxu0 %v262
    %971 = vmatpush.msra.mxu0 %v256
    %972 = vmatpush.msra.mxu0 %v250
    %973 = vmatpush.msra.mxu0 %v244
    %974 = vmatpush.msra.mxu0 %v238
    %975 = vmatpush.msra.mxu0 %v232
    %976 = vmatpush.msra.mxu0 %v226
    %977 = vmatpush.msra.mxu0 %v220
    %978 = vmatpush.msra.mxu0 %v214
    %979 = vmatpush.msra.mxu0 %v208
    %980 = vmatpush.msra.mxu0 %v202
    %981 = vmatpush.msra.mxu0 %v196
    %982 = vmatpush.msra.mxu0 %v190
    %983 = vmatpush.msra.mxu0 %v184
    %984 = vmatpush.msra.mxu0 %v178
    %985 = vmatmul.f32.gmra.mxu0 %v69
    %v986 = vpop.f32.mrf.mxu0
    %v987 = vadd.f32 %v964, %v986
    %988 = vmatmul.f32.gmra.mxu0 %v75
    %v989 = vpop.f32.mrf.mxu0
    %v990 = vadd.f32 %v967, %v989
    %991 = vdwg.mxu0
    %992 = vmatpush.msra.mxu0 %v364
    %993 = vmatpush.msra.mxu0 %v358
    %994 = vmatpush.msra.mxu0 %v352
    %995 = vmatpush.msra.mxu0 %v346
    %996 = vmatpush.msra.mxu0 %v340
    %997 = vmatpush.msra.mxu0 %v334
    %998 = vmatpush.msra.mxu0 %v328
    %999 = vmatpush.msra.mxu0 %v322
    %1000 = vmatpush.msra.mxu0 %v316
    %1001 = vmatpush.msra.mxu0 %v310
    %1002 = vmatpush.msra.mxu0 %v304
    %1003 = vmatpush.msra.mxu0 %v298
    %1004 = vmatpush.msra.mxu0 %v292
    %1005 = vmatpush.msra.mxu0 %v286
    %1006 = vmatpush.msra.mxu0 %v280
    %1007 = vmatpush.msra.mxu0 %v274
    %1008 = vmatmul.f32.gmra.mxu0 %v70
    %v1009 = vpop.f32.mrf.mxu0
    %v1010 = vadd.f32 %v987, %v1009
    %1011 = vmatmul.f32.gmra.mxu0 %v76
    %v1012 = vpop.f32.mrf.mxu0
    %v1013 = vadd.f32 %v990, %v1012
    %1014 = vdwg.mxu0
    %1015 = vmatpush.msra.mxu0 %v460
    %1016 = vmatpush.msra.mxu0 %v454
    %1017 = vmatpush.msra.mxu0 %v448
    %1018 = vmatpush.msra.mxu0 %v442
    %1019 = vmatpush.msra.mxu0 %v436
    %1020 = vmatpush.msra.mxu0 %v430
    %1021 = vmatpush.msra.mxu0 %v424
    %1022 = vmatpush.msra.mxu0 %v418
    %1023 = vmatpush.msra.mxu0 %v412
    %1024 = vmatpush.msra.mxu0 %v406
    %1025 = vmatpush.msra.mxu0 %v400
    %1026 = vmatpush.msra.mxu0 %v394
    %1027 = vmatpush.msra.mxu0 %v388
    %1028 = vmatpush.msra.mxu0 %v382
    %1029 = vmatpush.msra.mxu0 %v376
    %1030 = vmatpush.msra.mxu0 %v370
    %1031 = vmatmul.f32.gmra.mxu0 %v71
    %v1032 = vpop.f32.mrf.mxu0
    %v1033 = vadd.f32 %v1010, %v1032
    %1034 = vmatmul.f32.gmra.mxu0 %v77
    %v1035 = vpop.f32.mrf.mxu0
    %v1036 = vadd.f32 %v1013, %v1035
    %1037 = vdwg.mxu0
    %1038 = vmatpush.msra.mxu0 %v556
    %1039 = vmatpush.msra.mxu0 %v550
    %1040 = vmatpush.msra.mxu0 %v544
    %1041 = vmatpush.msra.mxu0 %v538
    %1042 = vmatpush.msra.mxu0 %v532
    %1043 = vmatpush.msra.mxu0 %v526
    %1044 = vmatpush.msra.mxu0 %v520
    %1045 = vmatpush.msra.mxu0 %v514
    %1046 = vmatpush.msra.mxu0 %v508
    %1047 = vmatpush.msra.mxu0 %v502
    %1048 = vmatpush.msra.mxu0 %v496
    %1049 = vmatpush.msra.mxu0 %v490
    %1050 = vmatpush.msra.mxu0 %v484
    %1051 = vmatpush.msra.mxu0 %v478
    %1052 = vmatpush.msra.mxu0 %v472
    %1053 = vmatpush.msra.mxu0 %v466
    %1054 = vmatmul.f32.gmra.mxu0 %v72
    %v1055 = vpop.f32.mrf.mxu0
    %v1056 = vadd.f32 %v1033, %v1055
    %1057 = vmatmul.f32.gmra.mxu0 %v78
    %v1058 = vpop.f32.mrf.mxu0
    %v1059 = vadd.f32 %v1036, %v1058
    %1060 = vdwg.mxu0
    %1061 = vmatpush.msra.mxu0 %v652
    %1062 = vmatpush.msra.mxu0 %v646
    %1063 = vmatpush.msra.mxu0 %v640
    %1064 = vmatpush.msra.mxu0 %v634
    %1065 = vmatpush.msra.mxu0 %v628
    %1066 = vmatpush.msra.mxu0 %v622
    %1067 = vmatpush.msra.mxu0 %v616
    %1068 = vmatpush.msra.mxu0 %v610
    %1069 = vmatpush.msra.mxu0 %v604
    %1070 = vmatpush.msra.mxu0 %v598
    %1071 = vmatpush.msra.mxu0 %v592
    %1072 = vmatpush.msra.mxu0 %v586
    %1073 = vmatpush.msra.mxu0 %v580
    %1074 = vmatpush.msra.mxu0 %v574
    %1075 = vmatpush.msra.mxu0 %v568
    %1076 = vmatpush.msra.mxu0 %v562
    %1077 = vmatmul.f32.gmra.mxu0 %v73
    %v1078 = vpop.f32.mrf.mxu0
    %v1079 = vadd.f32 %v1056, %v1078
    %1080 = vmatmul.f32.gmra.mxu0 %v79
    %v1081 = vpop.f32.mrf.mxu0
    %v1082 = vadd.f32 %v1059, %v1081
    %1083 = vdwg.mxu0
    %1084 = vmatpush.msra.mxu0 %v173
    %1085 = vmatpush.msra.mxu0 %v167
    %1086 = vmatpush.msra.mxu0 %v161
    %1087 = vmatpush.msra.mxu0 %v155
    %1088 = vmatpush.msra.mxu0 %v149
    %1089 = vmatpush.msra.mxu0 %v143
    %1090 = vmatpush.msra.mxu0 %v137
    %1091 = vmatpush.msra.mxu0 %v131
    %1092 = vmatpush.msra.mxu0 %v125
    %1093 = vmatpush.msra.mxu0 %v119
    %1094 = vmatpush.msra.mxu0 %v113
    %1095 = vmatpush.msra.mxu0 %v107
    %1096 = vmatpush.msra.mxu0 %v101
    %1097 = vmatpush.msra.mxu0 %v95
    %1098 = vmatpush.msra.mxu0 %v89
    %1099 = vmatpush.msra.mxu0 %v83
    %1100 = vmatmul.f32.gmra.mxu0 %v68
    %v1101 = vpop.f32.mrf.mxu0
    %v1102 = vadd.f32 %v661, %v1101
    %1103 = vmatmul.f32.gmra.mxu0 %v74
    %v1104 = vpop.f32.mrf.mxu0
    %v1105 = vadd.f32 %v661, %v1104
    %1106 = vdwg.mxu0
    %1107 = vmatpush.msra.mxu0 %v269
    %1108 = vmatpush.msra.mxu0 %v263
    %1109 = vmatpush.msra.mxu0 %v257
    %1110 = vmatpush.msra.mxu0 %v251
    %1111 = vmatpush.msra.mxu0 %v245
    %1112 = vmatpush.msra.mxu0 %v239
    %1113 = vmatpush.msra.mxu0 %v233
    %1114 = vmatpush.msra.mxu0 %v227
    %1115 = vmatpush.msra.mxu0 %v221
    %1116 = vmatpush.msra.mxu0 %v215
    %1117 = vmatpush.msra.mxu0 %v209
    %1118 = vmatpush.msra.mxu0 %v203
    %1119 = vmatpush.msra.mxu0 %v197
    %1120 = vmatpush.msra.mxu0 %v191
    %1121 = vmatpush.msra.mxu0 %v185
    %1122 = vmatpush.msra.mxu0 %v179
    %1123 = vmatmul.f32.gmra.mxu0 %v69
    %v1124 = vpop.f32.mrf.mxu0
    %v1125 = vadd.f32 %v1102, %v1124
    %1126 = vmatmul.f32.gmra.mxu0 %v75
    %v1127 = vpop.f32.mrf.mxu0
    %v1128 = vadd.f32 %v1105, %v1127
    %1129 = vdwg.mxu0
    %1130 = vmatpush.msra.mxu0 %v365
    %1131 = vmatpush.msra.mxu0 %v359
    %1132 = vmatpush.msra.mxu0 %v353
    %1133 = vmatpush.msra.mxu0 %v347
    %1134 = vmatpush.msra.mxu0 %v341
    %1135 = vmatpush.msra.mxu0 %v335
    %1136 = vmatpush.msra.mxu0 %v329
    %1137 = vmatpush.msra.mxu0 %v323
    %1138 = vmatpush.msra.mxu0 %v317
    %1139 = vmatpush.msra.mxu0 %v311
    %1140 = vmatpush.msra.mxu0 %v305
    %1141 = vmatpush.msra.mxu0 %v299
    %1142 = vmatpush.msra.mxu0 %v293
    %1143 = vmatpush.msra.mxu0 %v287
    %1144 = vmatpush.msra.mxu0 %v281
    %1145 = vmatpush.msra.mxu0 %v275
    %1146 = vmatmul.f32.gmra.mxu0 %v70
    %v1147 = vpop.f32.mrf.mxu0
    %v1148 = vadd.f32 %v1125, %v1147
    %1149 = vmatmul.f32.gmra.mxu0 %v76
    %v1150 = vpop.f32.mrf.mxu0
    %v1151 = vadd.f32 %v1128, %v1150
    %1152 = vdwg.mxu0
    %1153 = vmatpush.msra.mxu0 %v461
    %1154 = vmatpush.msra.mxu0 %v455
    %1155 = vmatpush.msra.mxu0 %v449
    %1156 = vmatpush.msra.mxu0 %v443
    %1157 = vmatpush.msra.mxu0 %v437
    %1158 = vmatpush.msra.mxu0 %v431
    %1159 = vmatpush.msra.mxu0 %v425
    %1160 = vmatpush.msra.mxu0 %v419
    %1161 = vmatpush.msra.mxu0 %v413
    %1162 = vmatpush.msra.mxu0 %v407
    %1163 = vmatpush.msra.mxu0 %v401
    %1164 = vmatpush.msra.mxu0 %v395
    %1165 = vmatpush.msra.mxu0 %v389
    %1166 = vmatpush.msra.mxu0 %v383
    %1167 = vmatpush.msra.mxu0 %v377
    %1168 = vmatpush.msra.mxu0 %v371
    %1169 = vmatmul.f32.gmra.mxu0 %v71
    %v1170 = vpop.f32.mrf.mxu0
    %v1171 = vadd.f32 %v1148, %v1170
    %1172 = vmatmul.f32.gmra.mxu0 %v77
    %v1173 = vpop.f32.mrf.mxu0
    %v1174 = vadd.f32 %v1151, %v1173
    %1175 = vdwg.mxu0
    %1176 = vmatpush.msra.mxu0 %v557
    %1177 = vmatpush.msra.mxu0 %v551
    %1178 = vmatpush.msra.mxu0 %v545
    %1179 = vmatpush.msra.mxu0 %v539
    %1180 = vmatpush.msra.mxu0 %v533
    %1181 = vmatpush.msra.mxu0 %v527
    %1182 = vmatpush.msra.mxu0 %v521
    %1183 = vmatpush.msra.mxu0 %v515
    %1184 = vmatpush.msra.mxu0 %v509
    %1185 = vmatpush.msra.mxu0 %v503
    %1186 = vmatpush.msra.mxu0 %v497
    %1187 = vmatpush.msra.mxu0 %v491
    %1188 = vmatpush.msra.mxu0 %v485
    %1189 = vmatpush.msra.mxu0 %v479
    %1190 = vmatpush.msra.mxu0 %v473
    %1191 = vmatpush.msra.mxu0 %v467
    %1192 = vmatmul.f32.gmra.mxu0 %v72
    %v1193 = vpop.f32.mrf.mxu0
    %v1194 = vadd.f32 %v1171, %v1193
    %1195 = vmatmul.f32.gmra.mxu0 %v78
    %v1196 = vpop.f32.mrf.mxu0
    %v1197 = vadd.f32 %v1174, %v1196
    %1198 = vdwg.mxu0
    %1199 = vmatpush.msra.mxu0 %v653
    %1200 = vmatpush.msra.mxu0 %v647
    %1201 = vmatpush.msra.mxu0 %v641
    %1202 = vmatpush.msra.mxu0 %v635
    %1203 = vmatpush.msra.mxu0 %v629
    %1204 = vmatpush.msra.mxu0 %v623
    %1205 = vmatpush.msra.mxu0 %v617
    %1206 = vmatpush.msra.mxu0 %v611
    %1207 = vmatpush.msra.mxu0 %v605
    %1208 = vmatpush.msra.mxu0 %v599
    %1209 = vmatpush.msra.mxu0 %v593
    %1210 = vmatpush.msra.mxu0 %v587
    %1211 = vmatpush.msra.mxu0 %v581
    %1212 = vmatpush.msra.mxu0 %v575
    %1213 = vmatpush.msra.mxu0 %v569
    %1214 = vmatpush.msra.mxu0 %v563
    %1215 = vmatmul.f32.gmra.mxu0 %v73
    %v1216 = vpop.f32.mrf.mxu0
    %v1217 = vadd.f32 %v1194, %v1216
    %1218 = vmatmul.f32.gmra.mxu0 %v79
    %v1219 = vpop.f32.mrf.mxu0
    %v1220 = vadd.f32 %v1197, %v1219
    %1221 = vdwg.mxu0
    %1222 = vmatpush.msra.mxu0 %v174
    %1223 = vmatpush.msra.mxu0 %v168
    %1224 = vmatpush.msra.mxu0 %v162
    %1225 = vmatpush.msra.mxu0 %v156
    %1226 = vmatpush.msra.mxu0 %v150
    %1227 = vmatpush.msra.mxu0 %v144
    %1228 = vmatpush.msra.mxu0 %v138
    %1229 = vmatpush.msra.mxu0 %v132
    %1230 = vmatpush.msra.mxu0 %v126
    %1231 = vmatpush.msra.mxu0 %v120
    %1232 = vmatpush.msra.mxu0 %v114
    %1233 = vmatpush.msra.mxu0 %v108
    %1234 = vmatpush.msra.mxu0 %v102
    %1235 = vmatpush.msra.mxu0 %v96
    %1236 = vmatpush.msra.mxu0 %v90
    %1237 = vmatpush.msra.mxu0 %v84
    %1238 = vmatmul.f32.gmra.mxu0 %v68
    %v1239 = vpop.f32.mrf.mxu0
    %v1240 = vadd.f32 %v662, %v1239
    %1241 = vmatmul.f32.gmra.mxu0 %v74
    %v1242 = vpop.f32.mrf.mxu0
    %v1243 = vadd.f32 %v662, %v1242
    %1244 = vdwg.mxu0
    %1245 = vmatpush.msra.mxu0 %v270
    %1246 = vmatpush.msra.mxu0 %v264
    %1247 = vmatpush.msra.mxu0 %v258
    %1248 = vmatpush.msra.mxu0 %v252
    %1249 = vmatpush.msra.mxu0 %v246
    %1250 = vmatpush.msra.mxu0 %v240
    %1251 = vmatpush.msra.mxu0 %v234
    %1252 = vmatpush.msra.mxu0 %v228
    %1253 = vmatpush.msra.mxu0 %v222
    %1254 = vmatpush.msra.mxu0 %v216
    %1255 = vmatpush.msra.mxu0 %v210
    %1256 = vmatpush.msra.mxu0 %v204
    %1257 = vmatpush.msra.mxu0 %v198
    %1258 = vmatpush.msra.mxu0 %v192
    %1259 = vmatpush.msra.mxu0 %v186
    %1260 = vmatpush.msra.mxu0 %v180
    %1261 = vmatmul.f32.gmra.mxu0 %v69
    %v1262 = vpop.f32.mrf.mxu0
    %v1263 = vadd.f32 %v1240, %v1262
    %1264 = vmatmul.f32.gmra.mxu0 %v75
    %v1265 = vpop.f32.mrf.mxu0
    %v1266 = vadd.f32 %v1243, %v1265
    %1267 = vdwg.mxu0
    %1268 = vmatpush.msra.mxu0 %v366
    %1269 = vmatpush.msra.mxu0 %v360
    %1270 = vmatpush.msra.mxu0 %v354
    %1271 = vmatpush.msra.mxu0 %v348
    %1272 = vmatpush.msra.mxu0 %v342
    %1273 = vmatpush.msra.mxu0 %v336
    %1274 = vmatpush.msra.mxu0 %v330
    %1275 = vmatpush.msra.mxu0 %v324
    %1276 = vmatpush.msra.mxu0 %v318
    %1277 = vmatpush.msra.mxu0 %v312
    %1278 = vmatpush.msra.mxu0 %v306
    %1279 = vmatpush.msra.mxu0 %v300
    %1280 = vmatpush.msra.mxu0 %v294
    %1281 = vmatpush.msra.mxu0 %v288
    %1282 = vmatpush.msra.mxu0 %v282
    %1283 = vmatpush.msra.mxu0 %v276
    %1284 = vmatmul.f32.gmra.mxu0 %v70
    %v1285 = vpop.f32.mrf.mxu0
    %v1286 = vadd.f32 %v1263, %v1285
    %1287 = vmatmul.f32.gmra.mxu0 %v76
    %v1288 = vpop.f32.mrf.mxu0
    %v1289 = vadd.f32 %v1266, %v1288
    %1290 = vdwg.mxu0
    %1291 = vmatpush.msra.mxu0 %v462
    %1292 = vmatpush.msra.mxu0 %v456
    %1293 = vmatpush.msra.mxu0 %v450
    %1294 = vmatpush.msra.mxu0 %v444
    %1295 = vmatpush.msra.mxu0 %v438
    %1296 = vmatpush.msra.mxu0 %v432
    %1297 = vmatpush.msra.mxu0 %v426
    %1298 = vmatpush.msra.mxu0 %v420
    %1299 = vmatpush.msra.mxu0 %v414
    %1300 = vmatpush.msra.mxu0 %v408
    %1301 = vmatpush.msra.mxu0 %v402
    %1302 = vmatpush.msra.mxu0 %v396
    %1303 = vmatpush.msra.mxu0 %v390
    %1304 = vmatpush.msra.mxu0 %v384
    %1305 = vmatpush.msra.mxu0 %v378
    %1306 = vmatpush.msra.mxu0 %v372
    %1307 = vmatmul.f32.gmra.mxu0 %v71
    %v1308 = vpop.f32.mrf.mxu0
    %v1309 = vadd.f32 %v1286, %v1308
    %1310 = vmatmul.f32.gmra.mxu0 %v77
    %v1311 = vpop.f32.mrf.mxu0
    %v1312 = vadd.f32 %v1289, %v1311
    %1313 = vdwg.mxu0
    %1314 = vmatpush.msra.mxu0 %v558
    %1315 = vmatpush.msra.mxu0 %v552
    %1316 = vmatpush.msra.mxu0 %v546
    %1317 = vmatpush.msra.mxu0 %v540
    %1318 = vmatpush.msra.mxu0 %v534
    %1319 = vmatpush.msra.mxu0 %v528
    %1320 = vmatpush.msra.mxu0 %v522
    %1321 = vmatpush.msra.mxu0 %v516
    %1322 = vmatpush.msra.mxu0 %v510
    %1323 = vmatpush.msra.mxu0 %v504
    %1324 = vmatpush.msra.mxu0 %v498
    %1325 = vmatpush.msra.mxu0 %v492
    %1326 = vmatpush.msra.mxu0 %v486
    %1327 = vmatpush.msra.mxu0 %v480
    %1328 = vmatpush.msra.mxu0 %v474
    %1329 = vmatpush.msra.mxu0 %v468
    %1330 = vmatmul.f32.gmra.mxu0 %v72
    %v1331 = vpop.f32.mrf.mxu0
    %v1332 = vadd.f32 %v1309, %v1331
    %1333 = vmatmul.f32.gmra.mxu0 %v78
    %v1334 = vpop.f32.mrf.mxu0
    %v1335 = vadd.f32 %v1312, %v1334
    %1336 = vdwg.mxu0
    %1337 = vmatpush.msra.mxu0 %v654
    %1338 = vmatpush.msra.mxu0 %v648
    %1339 = vmatpush.msra.mxu0 %v642
    %1340 = vmatpush.msra.mxu0 %v636
    %1341 = vmatpush.msra.mxu0 %v630
    %1342 = vmatpush.msra.mxu0 %v624
    %1343 = vmatpush.msra.mxu0 %v618
    %1344 = vmatpush.msra.mxu0 %v612
    %1345 = vmatpush.msra.mxu0 %v606
    %1346 = vmatpush.msra.mxu0 %v600
    %1347 = vmatpush.msra.mxu0 %v594
    %1348 = vmatpush.msra.mxu0 %v588
    %1349 = vmatpush.msra.mxu0 %v582
    %1350 = vmatpush.msra.mxu0 %v576
    %1351 = vmatpush.msra.mxu0 %v570
    %1352 = vmatpush.msra.mxu0 %v564
    %1353 = vmatmul.f32.gmra.mxu0 %v73
    %v1354 = vpop.f32.mrf.mxu0
    %v1355 = vadd.f32 %v1332, %v1354
    %1356 = vmatmul.f32.gmra.mxu0 %v79
    %v1357 = vpop.f32.mrf.mxu0
    %v1358 = vadd.f32 %v1335, %v1357
    %1359 = vdwg.mxu0
    %1360 = vmatpush.msra.mxu0 %v175
    %1361 = vmatpush.msra.mxu0 %v169
    %1362 = vmatpush.msra.mxu0 %v163
    %1363 = vmatpush.msra.mxu0 %v157
    %1364 = vmatpush.msra.mxu0 %v151
    %1365 = vmatpush.msra.mxu0 %v145
    %1366 = vmatpush.msra.mxu0 %v139
    %1367 = vmatpush.msra.mxu0 %v133
    %1368 = vmatpush.msra.mxu0 %v127
    %1369 = vmatpush.msra.mxu0 %v121
    %1370 = vmatpush.msra.mxu0 %v115
    %1371 = vmatpush.msra.mxu0 %v109
    %1372 = vmatpush.msra.mxu0 %v103
    %1373 = vmatpush.msra.mxu0 %v97
    %1374 = vmatpush.msra.mxu0 %v91
    %1375 = vmatpush.msra.mxu0 %v85
    %1376 = vmatmul.f32.gmra.mxu0 %v68
    %v1377 = vpop.f32.mrf.mxu0
    %v1378 = vadd.f32 %v663, %v1377
    %1379 = vmatmul.f32.gmra.mxu0 %v74
    %v1380 = vpop.f32.mrf.mxu0
    %v1381 = vadd.f32 %v663, %v1380
    %1382 = vdwg.mxu0
    %1383 = vmatpush.msra.mxu0 %v271
    %1384 = vmatpush.msra.mxu0 %v265
    %1385 = vmatpush.msra.mxu0 %v259
    %1386 = vmatpush.msra.mxu0 %v253
    %1387 = vmatpush.msra.mxu0 %v247
    %1388 = vmatpush.msra.mxu0 %v241
    %1389 = vmatpush.msra.mxu0 %v235
    %1390 = vmatpush.msra.mxu0 %v229
    %1391 = vmatpush.msra.mxu0 %v223
    %1392 = vmatpush.msra.mxu0 %v217
    %1393 = vmatpush.msra.mxu0 %v211
    %1394 = vmatpush.msra.mxu0 %v205
    %1395 = vmatpush.msra.mxu0 %v199
    %1396 = vmatpush.msra.mxu0 %v193
    %1397 = vmatpush.msra.mxu0 %v187
    %1398 = vmatpush.msra.mxu0 %v181
    %1399 = vmatmul.f32.gmra.mxu0 %v69
    %v1400 = vpop.f32.mrf.mxu0
    %v1401 = vadd.f32 %v1378, %v1400
    %1402 = vmatmul.f32.gmra.mxu0 %v75
    %v1403 = vpop.f32.mrf.mxu0
    %v1404 = vadd.f32 %v1381, %v1403
    %1405 = vdwg.mxu0
    %1406 = vmatpush.msra.mxu0 %v367
    %1407 = vmatpush.msra.mxu0 %v361
    %1408 = vmatpush.msra.mxu0 %v355
    %1409 = vmatpush.msra.mxu0 %v349
    %1410 = vmatpush.msra.mxu0 %v343
    %1411 = vmatpush.msra.mxu0 %v337
    %1412 = vmatpush.msra.mxu0 %v331
    %1413 = vmatpush.msra.mxu0 %v325
    %1414 = vmatpush.msra.mxu0 %v319
    %1415 = vmatpush.msra.mxu0 %v313
    %1416 = vmatpush.msra.mxu0 %v307
    %1417 = vmatpush.msra.mxu0 %v301
    %1418 = vmatpush.msra.mxu0 %v295
    %1419 = vmatpush.msra.mxu0 %v289
    %1420 = vmatpush.msra.mxu0 %v283
    %1421 = vmatpush.msra.mxu0 %v277
    %1422 = vmatmul.f32.gmra.mxu0 %v70
    %v1423 = vpop.f32.mrf.mxu0
    %v1424 = vadd.f32 %v1401, %v1423
    %1425 = vmatmul.f32.gmra.mxu0 %v76
    %v1426 = vpop.f32.mrf.mxu0
    %v1427 = vadd.f32 %v1404, %v1426
    %1428 = vdwg.mxu0
    %1429 = vmatpush.msra.mxu0 %v463
    %1430 = vmatpush.msra.mxu0 %v457
    %1431 = vmatpush.msra.mxu0 %v451
    %1432 = vmatpush.msra.mxu0 %v445
    %1433 = vmatpush.msra.mxu0 %v439
    %1434 = vmatpush.msra.mxu0 %v433
    %1435 = vmatpush.msra.mxu0 %v427
    %1436 = vmatpush.msra.mxu0 %v421
    %1437 = vmatpush.msra.mxu0 %v415
    %1438 = vmatpush.msra.mxu0 %v409
    %1439 = vmatpush.msra.mxu0 %v403
    %1440 = vmatpush.msra.mxu0 %v397
    %1441 = vmatpush.msra.mxu0 %v391
    %1442 = vmatpush.msra.mxu0 %v385
    %1443 = vmatpush.msra.mxu0 %v379
    %1444 = vmatpush.msra.mxu0 %v373
    %1445 = vmatmul.f32.gmra.mxu0 %v71
    %v1446 = vpop.f32.mrf.mxu0
    %v1447 = vadd.f32 %v1424, %v1446
    %1448 = vmatmul.f32.gmra.mxu0 %v77
    %v1449 = vpop.f32.mrf.mxu0
    %v1450 = vadd.f32 %v1427, %v1449
    %1451 = vdwg.mxu0
    %1452 = vmatpush.msra.mxu0 %v559
    %1453 = vmatpush.msra.mxu0 %v553
    %1454 = vmatpush.msra.mxu0 %v547
    %1455 = vmatpush.msra.mxu0 %v541
    %1456 = vmatpush.msra.mxu0 %v535
    %1457 = vmatpush.msra.mxu0 %v529
    %1458 = vmatpush.msra.mxu0 %v523
    %1459 = vmatpush.msra.mxu0 %v517
    %1460 = vmatpush.msra.mxu0 %v511
    %1461 = vmatpush.msra.mxu0 %v505
    %1462 = vmatpush.msra.mxu0 %v499
    %1463 = vmatpush.msra.mxu0 %v493
    %1464 = vmatpush.msra.mxu0 %v487
    %1465 = vmatpush.msra.mxu0 %v481
    %1466 = vmatpush.msra.mxu0 %v475
    %1467 = vmatpush.msra.mxu0 %v469
    %1468 = vmatmul.f32.gmra.mxu0 %v72
    %v1469 = vpop.f32.mrf.mxu0
    %v1470 = vadd.f32 %v1447, %v1469
    %1471 = vmatmul.f32.gmra.mxu0 %v78
    %v1472 = vpop.f32.mrf.mxu0
    %v1473 = vadd.f32 %v1450, %v1472
    %1474 = vdwg.mxu0
    %1475 = vmatpush.msra.mxu0 %v655
    %1476 = vmatpush.msra.mxu0 %v649
    %1477 = vmatpush.msra.mxu0 %v643
    %1478 = vmatpush.msra.mxu0 %v637
    %1479 = vmatpush.msra.mxu0 %v631
    %1480 = vmatpush.msra.mxu0 %v625
    %1481 = vmatpush.msra.mxu0 %v619
    %1482 = vmatpush.msra.mxu0 %v613
    %1483 = vmatpush.msra.mxu0 %v607
    %1484 = vmatpush.msra.mxu0 %v601
    %1485 = vmatpush.msra.mxu0 %v595
    %1486 = vmatpush.msra.mxu0 %v589
    %1487 = vmatpush.msra.mxu0 %v583
    %1488 = vmatpush.msra.mxu0 %v577
    %1489 = vmatpush.msra.mxu0 %v571
    %1490 = vmatpush.msra.mxu0 %v565
    %1491 = vmatmul.f32.gmra.mxu0 %v73
    %v1492 = vpop.f32.mrf.mxu0
    %v1493 = vadd.f32 %v1470, %v1492
    %1494 = vmatmul.f32.gmra.mxu0 %v79
    %v1495 = vpop.f32.mrf.mxu0
    %v1496 = vadd.f32 %v1473, %v1495
    %1497 = vdwg.mxu0
    %v1498 = vmul.f32 %v803, 0.5
    %v1499 = vmul.f32 %v941, 0.5
    %v1500 = vmul.f32 %v1079, 0.5
    %v1501 = vmul.f32 %v1217, 0.5
    %v1502 = vmul.f32 %v1355, 0.5
    %v1503 = vmul.f32 %v1493, 0.5
    %v1504 = vmul.f32 %v806, 0.5
    %v1505 = vmul.f32 %v944, 0.5
    %v1506 = vmul.f32 %v1082, 0.5
    %v1507 = vmul.f32 %v1220, 0.5
    %v1508 = vmul.f32 %v1358, 0.5
    %v1509 = vmul.f32 %v1496, 0.5
    %v1510 = vmul.f32 %v803, 0.70710677
    %v1511 = vmul.f32 %v941, 0.70710677
    %v1512 = vmul.f32 %v1079, 0.70710677
    %v1513 = vmul.f32 %v1217, 0.70710677
    %v1514 = vmul.f32 %v1355, 0.70710677
    %v1515 = vmul.f32 %v1493, 0.70710677
    %v1516 = vmul.f32 %v806, 0.70710677
    %v1517 = vmul.f32 %v944, 0.70710677
    %v1518 = vmul.f32 %v1082, 0.70710677
    %v1519 = vmul.f32 %v1220, 0.70710677
    %v1520 = vmul.f32 %v1358, 0.70710677
    %v1521 = vmul.f32 %v1496, 0.70710677
    %v1522 = vand.u32 2147483647, %v1510
    %v1523 = vand.u32 2147483647, %v1511
    %v1524 = vand.u32 2147483647, %v1512
    %v1525 = vand.u32 2147483647, %v1513
    %v1526 = vand.u32 2147483647, %v1514
    %v1527 = vand.u32 2147483647, %v1515
    %v1528 = vand.u32 2147483647, %v1516
    %v1529 = vand.u32 2147483647, %v1517
    %v1530 = vand.u32 2147483647, %v1518
    %v1531 = vand.u32 2147483647, %v1519
    %v1532 = vand.u32 2147483647, %v1520
    %v1533 = vand.u32 2147483647, %v1521
    %v1534 = vmul.f32 %v1522, 0.3275911
    %v1535 = vmul.f32 %v1523, 0.3275911
    %v1536 = vmul.f32 %v1524, 0.3275911
    %v1537 = vmul.f32 %v1525, 0.3275911
    %v1538 = vmul.f32 %v1526, 0.3275911
    %v1539 = vmul.f32 %v1527, 0.3275911
    %v1540 = vmul.f32 %v1528, 0.3275911
    %v1541 = vmul.f32 %v1529, 0.3275911
    %v1542 = vmul.f32 %v1530, 0.3275911
    %v1543 = vmul.f32 %v1531, 0.3275911
    %v1544 = vmul.f32 %v1532, 0.3275911
    %v1545 = vmul.f32 %v1533, 0.3275911
    %v1546 = vadd.f32 %v1534, 1.0
    %v1547 = vadd.f32 %v1535, 1.0
    %v1548 = vadd.f32 %v1536, 1.0
    %v1549 = vadd.f32 %v1537, 1.0
    %v1550 = vadd.f32 %v1538, 1.0
    %v1551 = vadd.f32 %v1539, 1.0
    %v1552 = vadd.f32 %v1540, 1.0
    %v1553 = vadd.f32 %v1541, 1.0
    %v1554 = vadd.f32 %v1542, 1.0
    %v1555 = vadd.f32 %v1543, 1.0
    %v1556 = vadd.f32 %v1544, 1.0
    %v1557 = vadd.f32 %v1545, 1.0
    %v1558 = vrcp.pop %v1546
    %v1559 = vmul.f32 %v1546, %v1558
    %v1560 = vsub.f32 1.0, %v1559
    %v1561 = vmul.f32 %v1558, %v1560
    %v1562 = vadd.f32 %v1558, %v1561
    %vm1563 = vweird.f32 %v1546
    %vm1564 = vweird.f32 %v1558
    %vm1565 = vmor %vm1563, %vm1564
    %v1566 = vsel %vm1565, %v1558, %v1562
    %v1567 = vand.u32 2147483647, %v1546
    %vm1568 = vcmp.eq.f32.partialorder %v1567, 8.507059e+37
    %v1569 = vand.u32 %v1546, 2147483648
    %v1570 = vor.u32 1.1754944e-38, %v1569
    %v1571 = vsel %vm1568, %v1570, %v1566
    %v1572 = vmul.f32 1.0, %v1571
    %v1573 = vrcp.pop %v1547
    %v1574 = vmul.f32 %v1547, %v1573
    %v1575 = vsub.f32 1.0, %v1574
    %v1576 = vmul.f32 %v1573, %v1575
    %v1577 = vadd.f32 %v1573, %v1576
    %vm1578 = vweird.f32 %v1547
    %vm1579 = vweird.f32 %v1573
    %vm1580 = vmor %vm1578, %vm1579
    %v1581 = vsel %vm1580, %v1573, %v1577
    %v1582 = vand.u32 2147483647, %v1547
    %vm1583 = vcmp.eq.f32.partialorder %v1582, 8.507059e+37
    %v1584 = vand.u32 %v1547, 2147483648
    %v1585 = vor.u32 1.1754944e-38, %v1584
    %v1586 = vsel %vm1583, %v1585, %v1581
    %v1587 = vmul.f32 1.0, %v1586
    %v1588 = vrcp.pop %v1548
    %v1589 = vmul.f32 %v1548, %v1588
    %v1590 = vsub.f32 1.0, %v1589
    %v1591 = vmul.f32 %v1588, %v1590
    %v1592 = vadd.f32 %v1588, %v1591
    %vm1593 = vweird.f32 %v1548
    %vm1594 = vweird.f32 %v1588
    %vm1595 = vmor %vm1593, %vm1594
    %v1596 = vsel %vm1595, %v1588, %v1592
    %v1597 = vand.u32 2147483647, %v1548
    %vm1598 = vcmp.eq.f32.partialorder %v1597, 8.507059e+37
    %v1599 = vand.u32 %v1548, 2147483648
    %v1600 = vor.u32 1.1754944e-38, %v1599
    %v1601 = vsel %vm1598, %v1600, %v1596
    %v1602 = vmul.f32 1.0, %v1601
    %v1603 = vrcp.pop %v1549
    %v1604 = vmul.f32 %v1549, %v1603
    %v1605 = vsub.f32 1.0, %v1604
    %v1606 = vmul.f32 %v1603, %v1605
    %v1607 = vadd.f32 %v1603, %v1606
    %vm1608 = vweird.f32 %v1549
    %vm1609 = vweird.f32 %v1603
    %vm1610 = vmor %vm1608, %vm1609
    %v1611 = vsel %vm1610, %v1603, %v1607
    %v1612 = vand.u32 2147483647, %v1549
    %vm1613 = vcmp.eq.f32.partialorder %v1612, 8.507059e+37
    %v1614 = vand.u32 %v1549, 2147483648
    %v1615 = vor.u32 1.1754944e-38, %v1614
    %v1616 = vsel %vm1613, %v1615, %v1611
    %v1617 = vmul.f32 1.0, %v1616
    %v1618 = vrcp.pop %v1550
    %v1619 = vmul.f32 %v1550, %v1618
    %v1620 = vsub.f32 1.0, %v1619
    %v1621 = vmul.f32 %v1618, %v1620
    %v1622 = vadd.f32 %v1618, %v1621
    %vm1623 = vweird.f32 %v1550
    %vm1624 = vweird.f32 %v1618
    %vm1625 = vmor %vm1623, %vm1624
    %v1626 = vsel %vm1625, %v1618, %v1622
    %v1627 = vand.u32 2147483647, %v1550
    %vm1628 = vcmp.eq.f32.partialorder %v1627, 8.507059e+37
    %v1629 = vand.u32 %v1550, 2147483648
    %v1630 = vor.u32 1.1754944e-38, %v1629
    %v1631 = vsel %vm1628, %v1630, %v1626
    %v1632 = vmul.f32 1.0, %v1631
    %v1633 = vrcp.pop %v1551
    %v1634 = vmul.f32 %v1551, %v1633
    %v1635 = vsub.f32 1.0, %v1634
    %v1636 = vmul.f32 %v1633, %v1635
    %v1637 = vadd.f32 %v1633, %v1636
    %vm1638 = vweird.f32 %v1551
    %vm1639 = vweird.f32 %v1633
    %vm1640 = vmor %vm1638, %vm1639
    %v1641 = vsel %vm1640, %v1633, %v1637
    %v1642 = vand.u32 2147483647, %v1551
    %vm1643 = vcmp.eq.f32.partialorder %v1642, 8.507059e+37
    %v1644 = vand.u32 %v1551, 2147483648
    %v1645 = vor.u32 1.1754944e-38, %v1644
    %v1646 = vsel %vm1643, %v1645, %v1641
    %v1647 = vmul.f32 1.0, %v1646
    %v1648 = vrcp.pop %v1552
    %v1649 = vmul.f32 %v1552, %v1648
    %v1650 = vsub.f32 1.0, %v1649
    %v1651 = vmul.f32 %v1648, %v1650
    %v1652 = vadd.f32 %v1648, %v1651
    %vm1653 = vweird.f32 %v1552
    %vm1654 = vweird.f32 %v1648
    %vm1655 = vmor %vm1653, %vm1654
    %v1656 = vsel %vm1655, %v1648, %v1652
    %v1657 = vand.u32 2147483647, %v1552
    %vm1658 = vcmp.eq.f32.partialorder %v1657, 8.507059e+37
    %v1659 = vand.u32 %v1552, 2147483648
    %v1660 = vor.u32 1.1754944e-38, %v1659
    %v1661 = vsel %vm1658, %v1660, %v1656
    %v1662 = vmul.f32 1.0, %v1661
    %v1663 = vrcp.pop %v1553
    %v1664 = vmul.f32 %v1553, %v1663
    %v1665 = vsub.f32 1.0, %v1664
    %v1666 = vmul.f32 %v1663, %v1665
    %v1667 = vadd.f32 %v1663, %v1666
    %vm1668 = vweird.f32 %v1553
    %vm1669 = vweird.f32 %v1663
    %vm1670 = vmor %vm1668, %vm1669
    %v1671 = vsel %vm1670, %v1663, %v1667
    %v1672 = vand.u32 2147483647, %v1553
    %vm1673 = vcmp.eq.f32.partialorder %v1672, 8.507059e+37
    %v1674 = vand.u32 %v1553, 2147483648
    %v1675 = vor.u32 1.1754944e-38, %v1674
    %v1676 = vsel %vm1673, %v1675, %v1671
    %v1677 = vmul.f32 1.0, %v1676
    %v1678 = vrcp.pop %v1554
    %v1679 = vmul.f32 %v1554, %v1678
    %v1680 = vsub.f32 1.0, %v1679
    %v1681 = vmul.f32 %v1678, %v1680
    %v1682 = vadd.f32 %v1678, %v1681
    %vm1683 = vweird.f32 %v1554
    %vm1684 = vweird.f32 %v1678
    %vm1685 = vmor %vm1683, %vm1684
    %v1686 = vsel %vm1685, %v1678, %v1682
    %v1687 = vand.u32 2147483647, %v1554
    %vm1688 = vcmp.eq.f32.partialorder %v1687, 8.507059e+37
    %v1689 = vand.u32 %v1554, 2147483648
    %v1690 = vor.u32 1.1754944e-38, %v1689
    %v1691 = vsel %vm1688, %v1690, %v1686
    %v1692 = vmul.f32 1.0, %v1691
    %v1693 = vrcp.pop %v1555
    %v1694 = vmul.f32 %v1555, %v1693
    %v1695 = vsub.f32 1.0, %v1694
    %v1696 = vmul.f32 %v1693, %v1695
    %v1697 = vadd.f32 %v1693, %v1696
    %vm1698 = vweird.f32 %v1555
    %vm1699 = vweird.f32 %v1693
    %vm1700 = vmor %vm1698, %vm1699
    %v1701 = vsel %vm1700, %v1693, %v1697
    %v1702 = vand.u32 2147483647, %v1555
    %vm1703 = vcmp.eq.f32.partialorder %v1702, 8.507059e+37
    %v1704 = vand.u32 %v1555, 2147483648
    %v1705 = vor.u32 1.1754944e-38, %v1704
    %v1706 = vsel %vm1703, %v1705, %v1701
    %v1707 = vmul.f32 1.0, %v1706
    %v1708 = vrcp.pop %v1556
    %v1709 = vmul.f32 %v1556, %v1708
    %v1710 = vsub.f32 1.0, %v1709
    %v1711 = vmul.f32 %v1708, %v1710
    %v1712 = vadd.f32 %v1708, %v1711
    %vm1713 = vweird.f32 %v1556
    %vm1714 = vweird.f32 %v1708
    %vm1715 = vmor %vm1713, %vm1714
    %v1716 = vsel %vm1715, %v1708, %v1712
    %v1717 = vand.u32 2147483647, %v1556
    %vm1718 = vcmp.eq.f32.partialorder %v1717, 8.507059e+37
    %v1719 = vand.u32 %v1556, 2147483648
    %v1720 = vor.u32 1.1754944e-38, %v1719
    %v1721 = vsel %vm1718, %v1720, %v1716
    %v1722 = vmul.f32 1.0, %v1721
    %v1723 = vrcp.pop %v1557
    %v1724 = vmul.f32 %v1557, %v1723
    %v1725 = vsub.f32 1.0, %v1724
    %v1726 = vmul.f32 %v1723, %v1725
    %v1727 = vadd.f32 %v1723, %v1726
    %vm1728 = vweird.f32 %v1557
    %vm1729 = vweird.f32 %v1723
    %vm1730 = vmor %vm1728, %vm1729
    %v1731 = vsel %vm1730, %v1723, %v1727
    %v1732 = vand.u32 2147483647, %v1557
    %vm1733 = vcmp.eq.f32.partialorder %v1732, 8.507059e+37
    %v1734 = vand.u32 %v1557, 2147483648
    %v1735 = vor.u32 1.1754944e-38, %v1734
    %v1736 = vsel %vm1733, %v1735, %v1731
    %v1737 = vmul.f32 1.0, %v1736
    %v1738 = vmul.f32 %v1572, 1.0614054
    %v1739 = vmul.f32 %v1587, 1.0614054
    %v1740 = vmul.f32 %v1602, 1.0614054
    %v1741 = vmul.f32 %v1617, 1.0614054
    %v1742 = vmul.f32 %v1632, 1.0614054
    %v1743 = vmul.f32 %v1647, 1.0614054
    %v1744 = vmul.f32 %v1662, 1.0614054
    %v1745 = vmul.f32 %v1677, 1.0614054
    %v1746 = vmul.f32 %v1692, 1.0614054
    %v1747 = vmul.f32 %v1707, 1.0614054
    %v1748 = vmul.f32 %v1722, 1.0614054
    %v1749 = vmul.f32 %v1737, 1.0614054
    %v1750 = vadd.f32 %v1738, -1.4531521
    %v1751 = vadd.f32 %v1739, -1.4531521
    %v1752 = vadd.f32 %v1740, -1.4531521
    %v1753 = vadd.f32 %v1741, -1.4531521
    %v1754 = vadd.f32 %v1742, -1.4531521
    %v1755 = vadd.f32 %v1743, -1.4531521
    %v1756 = vadd.f32 %v1744, -1.4531521
    %v1757 = vadd.f32 %v1745, -1.4531521
    %v1758 = vadd.f32 %v1746, -1.4531521
    %v1759 = vadd.f32 %v1747, -1.4531521
    %v1760 = vadd.f32 %v1748, -1.4531521
    %v1761 = vadd.f32 %v1749, -1.4531521
    %v1762 = vmul.f32 %v1750, %v1572
    %v1763 = vmul.f32 %v1751, %v1587
    %v1764 = vmul.f32 %v1752, %v1602
    %v1765 = vmul.f32 %v1753, %v1617
    %v1766 = vmul.f32 %v1754, %v1632
    %v1767 = vmul.f32 %v1755, %v1647
    %v1768 = vmul.f32 %v1756, %v1662
    %v1769 = vmul.f32 %v1757, %v1677
    %v1770 = vmul.f32 %v1758, %v1692
    %v1771 = vmul.f32 %v1759, %v1707
    %v1772 = vmul.f32 %v1760, %v1722
    %v1773 = vmul.f32 %v1761, %v1737
    %v1774 = vadd.f32 %v1762, 1.4214138
    %v1775 = vadd.f32 %v1763, 1.4214138
    %v1776 = vadd.f32 %v1764, 1.4214138
    %v1777 = vadd.f32 %v1765, 1.4214138
    %v1778 = vadd.f32 %v1766, 1.4214138
    %v1779 = vadd.f32 %v1767, 1.4214138
    %v1780 = vadd.f32 %v1768, 1.4214138
    %v1781 = vadd.f32 %v1769, 1.4214138
    %v1782 = vadd.f32 %v1770, 1.4214138
    %v1783 = vadd.f32 %v1771, 1.4214138
    %v1784 = vadd.f32 %v1772, 1.4214138
    %v1785 = vadd.f32 %v1773, 1.4214138
    %v1786 = vmul.f32 %v1774, %v1572
    %v1787 = vmul.f32 %v1775, %v1587
    %v1788 = vmul.f32 %v1776, %v1602
    %v1789 = vmul.f32 %v1777, %v1617
    %v1790 = vmul.f32 %v1778, %v1632
    %v1791 = vmul.f32 %v1779, %v1647
    %v1792 = vmul.f32 %v1780, %v1662
    %v1793 = vmul.f32 %v1781, %v1677
    %v1794 = vmul.f32 %v1782, %v1692
    %v1795 = vmul.f32 %v1783, %v1707
    %v1796 = vmul.f32 %v1784, %v1722
    %v1797 = vmul.f32 %v1785, %v1737
    %v1798 = vadd.f32 %v1786, -0.28449672
    %v1799 = vadd.f32 %v1787, -0.28449672
    %v1800 = vadd.f32 %v1788, -0.28449672
    %v1801 = vadd.f32 %v1789, -0.28449672
    %v1802 = vadd.f32 %v1790, -0.28449672
    %v1803 = vadd.f32 %v1791, -0.28449672
    %v1804 = vadd.f32 %v1792, -0.28449672
    %v1805 = vadd.f32 %v1793, -0.28449672
    %v1806 = vadd.f32 %v1794, -0.28449672
    %v1807 = vadd.f32 %v1795, -0.28449672
    %v1808 = vadd.f32 %v1796, -0.28449672
    %v1809 = vadd.f32 %v1797, -0.28449672
    %v1810 = vmul.f32 %v1798, %v1572
    %v1811 = vmul.f32 %v1799, %v1587
    %v1812 = vmul.f32 %v1800, %v1602
    %v1813 = vmul.f32 %v1801, %v1617
    %v1814 = vmul.f32 %v1802, %v1632
    %v1815 = vmul.f32 %v1803, %v1647
    %v1816 = vmul.f32 %v1804, %v1662
    %v1817 = vmul.f32 %v1805, %v1677
    %v1818 = vmul.f32 %v1806, %v1692
    %v1819 = vmul.f32 %v1807, %v1707
    %v1820 = vmul.f32 %v1808, %v1722
    %v1821 = vmul.f32 %v1809, %v1737
    %v1822 = vadd.f32 %v1810, 0.2548296
    %v1823 = vadd.f32 %v1811, 0.2548296
    %v1824 = vadd.f32 %v1812, 0.2548296
    %v1825 = vadd.f32 %v1813, 0.2548296
    %v1826 = vadd.f32 %v1814, 0.2548296
    %v1827 = vadd.f32 %v1815, 0.2548296
    %v1828 = vadd.f32 %v1816, 0.2548296
    %v1829 = vadd.f32 %v1817, 0.2548296
    %v1830 = vadd.f32 %v1818, 0.2548296
    %v1831 = vadd.f32 %v1819, 0.2548296
    %v1832 = vadd.f32 %v1820, 0.2548296
    %v1833 = vadd.f32 %v1821, 0.2548296
    %v1834 = vmul.f32 %v1822, %v1572
    %v1835 = vmul.f32 %v1823, %v1587
    %v1836 = vmul.f32 %v1824, %v1602
    %v1837 = vmul.f32 %v1825, %v1617
    %v1838 = vmul.f32 %v1826, %v1632
    %v1839 = vmul.f32 %v1827, %v1647
    %v1840 = vmul.f32 %v1828, %v1662
    %v1841 = vmul.f32 %v1829, %v1677
    %v1842 = vmul.f32 %v1830, %v1692
    %v1843 = vmul.f32 %v1831, %v1707
    %v1844 = vmul.f32 %v1832, %v1722
    %v1845 = vmul.f32 %v1833, %v1737
    %v1846 = vsub.f32 0.0, %v1522
    %v1847 = vsub.f32 0.0, %v1523
    %v1848 = vsub.f32 0.0, %v1524
    %v1849 = vsub.f32 0.0, %v1525
    %v1850 = vsub.f32 0.0, %v1526
    %v1851 = vsub.f32 0.0, %v1527
    %v1852 = vsub.f32 0.0, %v1528
    %v1853 = vsub.f32 0.0, %v1529
    %v1854 = vsub.f32 0.0, %v1530
    %v1855 = vsub.f32 0.0, %v1531
    %v1856 = vsub.f32 0.0, %v1532
    %v1857 = vsub.f32 0.0, %v1533
    %v1858 = vmul.f32 %v1846, %v1522
    %v1859 = vmul.f32 %v1847, %v1523
    %v1860 = vmul.f32 %v1848, %v1524
    %v1861 = vmul.f32 %v1849, %v1525
    %v1862 = vmul.f32 %v1850, %v1526
    %v1863 = vmul.f32 %v1851, %v1527
    %v1864 = vmul.f32 %v1852, %v1528
    %v1865 = vmul.f32 %v1853, %v1529
    %v1866 = vmul.f32 %v1854, %v1530
    %v1867 = vmul.f32 %v1855, %v1531
    %v1868 = vmul.f32 %v1856, %v1532
    %v1869 = vmul.f32 %v1857, %v1533
    %v1870 = vmul.f32 %v1858, 1.442695
    %v1871 = vpow.pop %v1870
    %v1872 = vmul.f32 %v1859, 1.442695
    %v1873 = vpow.pop %v1872
    %v1874 = vmul.f32 %v1860, 1.442695
    %v1875 = vpow.pop %v1874
    %v1876 = vmul.f32 %v1861, 1.442695
    %v1877 = vpow.pop %v1876
    %v1878 = vmul.f32 %v1862, 1.442695
    %v1879 = vpow.pop %v1878
    %v1880 = vmul.f32 %v1863, 1.442695
    %v1881 = vpow.pop %v1880
    %v1882 = vmul.f32 %v1864, 1.442695
    %v1883 = vpow.pop %v1882
    %v1884 = vmul.f32 %v1865, 1.442695
    %v1885 = vpow.pop %v1884
    %v1886 = vmul.f32 %v1866, 1.442695
    %v1887 = vpow.pop %v1886
    %v1888 = vmul.f32 %v1867, 1.442695
    %v1889 = vpow.pop %v1888
    %v1890 = vmul.f32 %v1868, 1.442695
    %v1891 = vpow.pop %v1890
    %v1892 = vmul.f32 %v1869, 1.442695
    %v1893 = vpow.pop %v1892
    %v1894 = vmul.f32 %v1834, %v1871
    %v1895 = vmul.f32 %v1835, %v1873
    %v1896 = vmul.f32 %v1836, %v1875
    %v1897 = vmul.f32 %v1837, %v1877
    %v1898 = vmul.f32 %v1838, %v1879
    %v1899 = vmul.f32 %v1839, %v1881
    %v1900 = vmul.f32 %v1840, %v1883
    %v1901 = vmul.f32 %v1841, %v1885
    %v1902 = vmul.f32 %v1842, %v1887
    %v1903 = vmul.f32 %v1843, %v1889
    %v1904 = vmul.f32 %v1844, %v1891
    %v1905 = vmul.f32 %v1845, %v1893
    %v1906 = vsub.f32 1.0, %v1894
    %v1907 = vsub.f32 1.0, %v1895
    %v1908 = vsub.f32 1.0, %v1896
    %v1909 = vsub.f32 1.0, %v1897
    %v1910 = vsub.f32 1.0, %v1898
    %v1911 = vsub.f32 1.0, %v1899
    %v1912 = vsub.f32 1.0, %v1900
    %v1913 = vsub.f32 1.0, %v1901
    %v1914 = vsub.f32 1.0, %v1902
    %v1915 = vsub.f32 1.0, %v1903
    %v1916 = vsub.f32 1.0, %v1904
    %v1917 = vsub.f32 1.0, %v1905
    %vm1918 = vcmp.ge.f32.partialorder %v1510, 0.0
    %vm1919 = vcmp.ge.f32.partialorder %v1511, 0.0
    %vm1920 = vcmp.ge.f32.partialorder %v1512, 0.0
    %vm1921 = vcmp.ge.f32.partialorder %v1513, 0.0
    %vm1922 = vcmp.ge.f32.partialorder %v1514, 0.0
    %vm1923 = vcmp.ge.f32.partialorder %v1515, 0.0
    %vm1924 = vcmp.ge.f32.partialorder %v1516, 0.0
    %vm1925 = vcmp.ge.f32.partialorder %v1517, 0.0
    %vm1926 = vcmp.ge.f32.partialorder %v1518, 0.0
    %vm1927 = vcmp.ge.f32.partialorder %v1519, 0.0
    %vm1928 = vcmp.ge.f32.partialorder %v1520, 0.0
    %vm1929 = vcmp.ge.f32.partialorder %v1521, 0.0
    %v1930 = vsub.f32 0.0, %v1906
    %v1931 = vsub.f32 0.0, %v1907
    %v1932 = vsub.f32 0.0, %v1908
    %v1933 = vsub.f32 0.0, %v1909
    %v1934 = vsub.f32 0.0, %v1910
    %v1935 = vsub.f32 0.0, %v1911
    %v1936 = vsub.f32 0.0, %v1912
    %v1937 = vsub.f32 0.0, %v1913
    %v1938 = vsub.f32 0.0, %v1914
    %v1939 = vsub.f32 0.0, %v1915
    %v1940 = vsub.f32 0.0, %v1916
    %v1941 = vsub.f32 0.0, %v1917
    %v1942 = vsel %vm1918, %v1906, %v1930
    %v1943 = vsel %vm1919, %v1907, %v1931
    %v1944 = vsel %vm1920, %v1908, %v1932
    %v1945 = vsel %vm1921, %v1909, %v1933
    %v1946 = vsel %vm1922, %v1910, %v1934
    %v1947 = vsel %vm1923, %v1911, %v1935
    %v1948 = vsel %vm1924, %v1912, %v1936
    %v1949 = vsel %vm1925, %v1913, %v1937
    %v1950 = vsel %vm1926, %v1914, %v1938
    %v1951 = vsel %vm1927, %v1915, %v1939
    %v1952 = vsel %vm1928, %v1916, %v1940
    %v1953 = vsel %vm1929, %v1917, %v1941
    %v1954 = vadd.f32 %v1942, 1.0
    %v1955 = vadd.f32 %v1943, 1.0
    %v1956 = vadd.f32 %v1944, 1.0
    %v1957 = vadd.f32 %v1945, 1.0
    %v1958 = vadd.f32 %v1946, 1.0
    %v1959 = vadd.f32 %v1947, 1.0
    %v1960 = vadd.f32 %v1948, 1.0
    %v1961 = vadd.f32 %v1949, 1.0
    %v1962 = vadd.f32 %v1950, 1.0
    %v1963 = vadd.f32 %v1951, 1.0
    %v1964 = vadd.f32 %v1952, 1.0
    %v1965 = vadd.f32 %v1953, 1.0
    %v1966 = vmul.f32 %v1498, %v1954
    %v1967 = vmul.f32 %v1499, %v1955
    %v1968 = vmul.f32 %v1500, %v1956
    %v1969 = vmul.f32 %v1501, %v1957
    %v1970 = vmul.f32 %v1502, %v1958
    %v1971 = vmul.f32 %v1503, %v1959
    %v1972 = vmul.f32 %v1504, %v1960
    %v1973 = vmul.f32 %v1505, %v1961
    %v1974 = vmul.f32 %v1506, %v1962
    %v1975 = vmul.f32 %v1507, %v1963
    %v1976 = vmul.f32 %v1508, %v1964
    %v1977 = vmul.f32 %v1509, %v1965
    %v1978 = vld [vmem:[#allocation7] sm:$0xff]
    %v1979 = vld [vmem:[#allocation7 + $0x8] sm:$0xff]
    %v1980 = vld [vmem:[#allocation7 + $0x10] sm:$0xff]
    %v1981 = vld [vmem:[#allocation7 + $0x18] sm:$0xff]
    %v1982 = vld [vmem:[#allocation7 + $0x20] sm:$0xff]
    %v1983 = vld [vmem:[#allocation7 + $0x28] sm:$0xff]
    %v1984 = vld [vmem:[#allocation7 + $0x30] sm:$0xff]
    %v1985 = vld [vmem:[#allocation7 + $0x38] sm:$0xff]
    %v1986 = vld [vmem:[#allocation7 + $0x40] sm:$0xff]
    %v1987 = vld [vmem:[#allocation7 + $0x48] sm:$0xff]
    %v1988 = vld [vmem:[#allocation7 + $0x50] sm:$0xff]
    %v1989 = vld [vmem:[#allocation7 + $0x58] sm:$0xff]
    %v1990 = vld [vmem:[#allocation7 + $0x60] sm:$0xff]
    %v1991 = vld [vmem:[#allocation7 + $0x68] sm:$0xff]
    %v1992 = vld [vmem:[#allocation7 + $0x70] sm:$0xff]
    %v1993 = vld [vmem:[#allocation7 + $0x78] sm:$0xff]
    %v1994 = vld [vmem:[#allocation7 + $0x80] sm:$0xff]
    %v1995 = vld [vmem:[#allocation7 + $0x88] sm:$0xff]
    %v1996 = vld [vmem:[#allocation7 + $0x90] sm:$0xff]
    %v1997 = vld [vmem:[#allocation7 + $0x98] sm:$0xff]
    %v1998 = vld [vmem:[#allocation7 + $0xa0] sm:$0xff]
    %v1999 = vld [vmem:[#allocation7 + $0xa8] sm:$0xff]
    %v2000 = vld [vmem:[#allocation7 + $0xb0] sm:$0xff]
    %v2001 = vld [vmem:[#allocation7 + $0xb8] sm:$0xff]
    %v2002 = vld [vmem:[#allocation7 + $0xc0] sm:$0xff]
    %v2003 = vld [vmem:[#allocation7 + $0xc8] sm:$0xff]
    %v2004 = vld [vmem:[#allocation7 + $0xd0] sm:$0xff]
    %v2005 = vld [vmem:[#allocation7 + $0xd8] sm:$0xff]
    %v2006 = vld [vmem:[#allocation7 + $0xe0] sm:$0xff]
    %v2007 = vld [vmem:[#allocation7 + $0xe8] sm:$0xff]
    %v2008 = vld [vmem:[#allocation7 + $0xf0] sm:$0xff]
    %v2009 = vld [vmem:[#allocation7 + $0xf8] sm:$0xff]
    %v2010 = vld [vmem:[#allocation7 + $0x100] sm:$0xff]
    %v2011 = vld [vmem:[#allocation7 + $0x108] sm:$0xff]
    %v2012 = vld [vmem:[#allocation7 + $0x110] sm:$0xff]
    %v2013 = vld [vmem:[#allocation7 + $0x118] sm:$0xff]
    %v2014 = vld [vmem:[#allocation7 + $0x120] sm:$0xff]
    %v2015 = vld [vmem:[#allocation7 + $0x128] sm:$0xff]
    %v2016 = vld [vmem:[#allocation7 + $0x130] sm:$0xff]
    %v2017 = vld [vmem:[#allocation7 + $0x138] sm:$0xff]
    %v2018 = vld [vmem:[#allocation7 + $0x140] sm:$0xff]
    %v2019 = vld [vmem:[#allocation7 + $0x148] sm:$0xff]
    %v2020 = vld [vmem:[#allocation7 + $0x150] sm:$0xff]
    %v2021 = vld [vmem:[#allocation7 + $0x158] sm:$0xff]
    %v2022 = vld [vmem:[#allocation7 + $0x160] sm:$0xff]
    %v2023 = vld [vmem:[#allocation7 + $0x168] sm:$0xff]
    %v2024 = vld [vmem:[#allocation7 + $0x170] sm:$0xff]
    %v2025 = vld [vmem:[#allocation7 + $0x178] sm:$0xff]
    %v2026 = vld [vmem:[#allocation7 + $0x180] sm:$0xff]
    %v2027 = vld [vmem:[#allocation7 + $0x188] sm:$0xff]
    %v2028 = vld [vmem:[#allocation7 + $0x190] sm:$0xff]
    %v2029 = vld [vmem:[#allocation7 + $0x198] sm:$0xff]
    %v2030 = vld [vmem:[#allocation7 + $0x1a0] sm:$0xff]
    %v2031 = vld [vmem:[#allocation7 + $0x1a8] sm:$0xff]
    %v2032 = vld [vmem:[#allocation7 + $0x1b0] sm:$0xff]
    %v2033 = vld [vmem:[#allocation7 + $0x1b8] sm:$0xff]
    %v2034 = vld [vmem:[#allocation7 + $0x1c0] sm:$0xff]
    %v2035 = vld [vmem:[#allocation7 + $0x1c8] sm:$0xff]
    %v2036 = vld [vmem:[#allocation7 + $0x1d0] sm:$0xff]
    %v2037 = vld [vmem:[#allocation7 + $0x1d8] sm:$0xff]
    %v2038 = vld [vmem:[#allocation7 + $0x1e0] sm:$0xff]
    %v2039 = vld [vmem:[#allocation7 + $0x1e8] sm:$0xff]
    %v2040 = vld [vmem:[#allocation7 + $0x1f0] sm:$0xff]
    %v2041 = vld [vmem:[#allocation7 + $0x1f8] sm:$0xff]
    %v2042 = vld [vmem:[#allocation7 + $0x200] sm:$0xff]
    %v2043 = vld [vmem:[#allocation7 + $0x208] sm:$0xff]
    %v2044 = vld [vmem:[#allocation7 + $0x210] sm:$0xff]
    %v2045 = vld [vmem:[#allocation7 + $0x218] sm:$0xff]
    %v2046 = vld [vmem:[#allocation7 + $0x220] sm:$0xff]
    %v2047 = vld [vmem:[#allocation7 + $0x228] sm:$0xff]
    %v2048 = vld [vmem:[#allocation7 + $0x230] sm:$0xff]
    %v2049 = vld [vmem:[#allocation7 + $0x238] sm:$0xff]
    %v2050 = vld [vmem:[#allocation7 + $0x240] sm:$0xff]
    %v2051 = vld [vmem:[#allocation7 + $0x248] sm:$0xff]
    %v2052 = vld [vmem:[#allocation7 + $0x250] sm:$0xff]
    %v2053 = vld [vmem:[#allocation7 + $0x258] sm:$0xff]
    %v2054 = vld [vmem:[#allocation7 + $0x260] sm:$0xff]
    %v2055 = vld [vmem:[#allocation7 + $0x268] sm:$0xff]
    %v2056 = vld [vmem:[#allocation7 + $0x270] sm:$0xff]
    %v2057 = vld [vmem:[#allocation7 + $0x278] sm:$0xff]
    %v2058 = vld [vmem:[#allocation7 + $0x280] sm:$0xff]
    %v2059 = vld [vmem:[#allocation7 + $0x288] sm:$0xff]
    %v2060 = vld [vmem:[#allocation7 + $0x290] sm:$0xff]
    %v2061 = vld [vmem:[#allocation7 + $0x298] sm:$0xff]
    %v2062 = vld [vmem:[#allocation7 + $0x2a0] sm:$0xff]
    %v2063 = vld [vmem:[#allocation7 + $0x2a8] sm:$0xff]
    %v2064 = vld [vmem:[#allocation7 + $0x2b0] sm:$0xff]
    %v2065 = vld [vmem:[#allocation7 + $0x2b8] sm:$0xff]
    %v2066 = vld [vmem:[#allocation7 + $0x2c0] sm:$0xff]
    %v2067 = vld [vmem:[#allocation7 + $0x2c8] sm:$0xff]
    %v2068 = vld [vmem:[#allocation7 + $0x2d0] sm:$0xff]
    %v2069 = vld [vmem:[#allocation7 + $0x2d8] sm:$0xff]
    %v2070 = vld [vmem:[#allocation7 + $0x2e0] sm:$0xff]
    %v2071 = vld [vmem:[#allocation7 + $0x2e8] sm:$0xff]
    %v2072 = vld [vmem:[#allocation7 + $0x2f0] sm:$0xff]
    %v2073 = vld [vmem:[#allocation7 + $0x2f8] sm:$0xff]
    %v2074 = vld [vmem:[#allocation7 + $0x300] sm:$0xff]
    %v2075 = vld [vmem:[#allocation7 + $0x308] sm:$0xff]
    %v2076 = vld [vmem:[#allocation7 + $0x310] sm:$0xff]
    %v2077 = vld [vmem:[#allocation7 + $0x318] sm:$0xff]
    %v2078 = vld [vmem:[#allocation7 + $0x320] sm:$0xff]
    %v2079 = vld [vmem:[#allocation7 + $0x328] sm:$0xff]
    %v2080 = vld [vmem:[#allocation7 + $0x330] sm:$0xff]
    %v2081 = vld [vmem:[#allocation7 + $0x338] sm:$0xff]
    %v2082 = vld [vmem:[#allocation7 + $0x340] sm:$0xff]
    %v2083 = vld [vmem:[#allocation7 + $0x348] sm:$0xff]
    %v2084 = vld [vmem:[#allocation7 + $0x350] sm:$0xff]
    %v2085 = vld [vmem:[#allocation7 + $0x358] sm:$0xff]
    %v2086 = vld [vmem:[#allocation7 + $0x360] sm:$0xff]
    %v2087 = vld [vmem:[#allocation7 + $0x368] sm:$0xff]
    %v2088 = vld [vmem:[#allocation7 + $0x370] sm:$0xff]
    %v2089 = vld [vmem:[#allocation7 + $0x378] sm:$0xff]
    %v2090 = vld [vmem:[#allocation7 + $0x380] sm:$0xff]
    %v2091 = vld [vmem:[#allocation7 + $0x388] sm:$0xff]
    %v2092 = vld [vmem:[#allocation7 + $0x390] sm:$0xff]
    %v2093 = vld [vmem:[#allocation7 + $0x398] sm:$0xff]
    %v2094 = vld [vmem:[#allocation7 + $0x3a0] sm:$0xff]
    %v2095 = vld [vmem:[#allocation7 + $0x3a8] sm:$0xff]
    %v2096 = vld [vmem:[#allocation7 + $0x3b0] sm:$0xff]
    %v2097 = vld [vmem:[#allocation7 + $0x3b8] sm:$0xff]
    %v2098 = vld [vmem:[#allocation7 + $0x3c0] sm:$0xff]
    %v2099 = vld [vmem:[#allocation7 + $0x3c8] sm:$0xff]
    %v2100 = vld [vmem:[#allocation7 + $0x3d0] sm:$0xff]
    %v2101 = vld [vmem:[#allocation7 + $0x3d8] sm:$0xff]
    %v2102 = vld [vmem:[#allocation7 + $0x3e0] sm:$0xff]
    %v2103 = vld [vmem:[#allocation7 + $0x3e8] sm:$0xff]
    %v2104 = vld [vmem:[#allocation7 + $0x3f0] sm:$0xff]
    %v2105 = vld [vmem:[#allocation7 + $0x3f8] sm:$0xff]
    %v2106 = vld [vmem:[#allocation7 + $0x400] sm:$0xff]
    %v2107 = vld [vmem:[#allocation7 + $0x408] sm:$0xff]
    %v2108 = vld [vmem:[#allocation7 + $0x410] sm:$0xff]
    %v2109 = vld [vmem:[#allocation7 + $0x418] sm:$0xff]
    %v2110 = vld [vmem:[#allocation7 + $0x420] sm:$0xff]
    %v2111 = vld [vmem:[#allocation7 + $0x428] sm:$0xff]
    %v2112 = vld [vmem:[#allocation7 + $0x430] sm:$0xff]
    %v2113 = vld [vmem:[#allocation7 + $0x438] sm:$0xff]
    %v2114 = vld [vmem:[#allocation7 + $0x440] sm:$0xff]
    %v2115 = vld [vmem:[#allocation7 + $0x448] sm:$0xff]
    %v2116 = vld [vmem:[#allocation7 + $0x450] sm:$0xff]
    %v2117 = vld [vmem:[#allocation7 + $0x458] sm:$0xff]
    %v2118 = vld [vmem:[#allocation7 + $0x460] sm:$0xff]
    %v2119 = vld [vmem:[#allocation7 + $0x468] sm:$0xff]
    %v2120 = vld [vmem:[#allocation7 + $0x470] sm:$0xff]
    %v2121 = vld [vmem:[#allocation7 + $0x478] sm:$0xff]
    %v2122 = vld [vmem:[#allocation7 + $0x480] sm:$0xff]
    %v2123 = vld [vmem:[#allocation7 + $0x488] sm:$0xff]
    %v2124 = vld [vmem:[#allocation7 + $0x490] sm:$0xff]
    %v2125 = vld [vmem:[#allocation7 + $0x498] sm:$0xff]
    %v2126 = vld [vmem:[#allocation7 + $0x4a0] sm:$0xff]
    %v2127 = vld [vmem:[#allocation7 + $0x4a8] sm:$0xff]
    %v2128 = vld [vmem:[#allocation7 + $0x4b0] sm:$0xff]
    %v2129 = vld [vmem:[#allocation7 + $0x4b8] sm:$0xff]
    %v2130 = vld [vmem:[#allocation7 + $0x4c0] sm:$0xff]
    %v2131 = vld [vmem:[#allocation7 + $0x4c8] sm:$0xff]
    %v2132 = vld [vmem:[#allocation7 + $0x4d0] sm:$0xff]
    %v2133 = vld [vmem:[#allocation7 + $0x4d8] sm:$0xff]
    %v2134 = vld [vmem:[#allocation7 + $0x4e0] sm:$0xff]
    %v2135 = vld [vmem:[#allocation7 + $0x4e8] sm:$0xff]
    %v2136 = vld [vmem:[#allocation7 + $0x4f0] sm:$0xff]
    %v2137 = vld [vmem:[#allocation7 + $0x4f8] sm:$0xff]
    %v2138 = vld [vmem:[#allocation7 + $0x500] sm:$0xff]
    %v2139 = vld [vmem:[#allocation7 + $0x508] sm:$0xff]
    %v2140 = vld [vmem:[#allocation7 + $0x510] sm:$0xff]
    %v2141 = vld [vmem:[#allocation7 + $0x518] sm:$0xff]
    %v2142 = vld [vmem:[#allocation7 + $0x520] sm:$0xff]
    %v2143 = vld [vmem:[#allocation7 + $0x528] sm:$0xff]
    %v2144 = vld [vmem:[#allocation7 + $0x530] sm:$0xff]
    %v2145 = vld [vmem:[#allocation7 + $0x538] sm:$0xff]
    %v2146 = vld [vmem:[#allocation7 + $0x540] sm:$0xff]
    %v2147 = vld [vmem:[#allocation7 + $0x548] sm:$0xff]
    %v2148 = vld [vmem:[#allocation7 + $0x550] sm:$0xff]
    %v2149 = vld [vmem:[#allocation7 + $0x558] sm:$0xff]
    %v2150 = vld [vmem:[#allocation7 + $0x560] sm:$0xff]
    %v2151 = vld [vmem:[#allocation7 + $0x568] sm:$0xff]
    %v2152 = vld [vmem:[#allocation7 + $0x570] sm:$0xff]
    %v2153 = vld [vmem:[#allocation7 + $0x578] sm:$0xff]
    %v2154 = vld [vmem:[#allocation7 + $0x580] sm:$0xff]
    %v2155 = vld [vmem:[#allocation7 + $0x588] sm:$0xff]
    %v2156 = vld [vmem:[#allocation7 + $0x590] sm:$0xff]
    %v2157 = vld [vmem:[#allocation7 + $0x598] sm:$0xff]
    %v2158 = vld [vmem:[#allocation7 + $0x5a0] sm:$0xff]
    %v2159 = vld [vmem:[#allocation7 + $0x5a8] sm:$0xff]
    %v2160 = vld [vmem:[#allocation7 + $0x5b0] sm:$0xff]
    %v2161 = vld [vmem:[#allocation7 + $0x5b8] sm:$0xff]
    %v2162 = vld [vmem:[#allocation7 + $0x5c0] sm:$0xff]
    %v2163 = vld [vmem:[#allocation7 + $0x5c8] sm:$0xff]
    %v2164 = vld [vmem:[#allocation7 + $0x5d0] sm:$0xff]
    %v2165 = vld [vmem:[#allocation7 + $0x5d8] sm:$0xff]
    %v2166 = vld [vmem:[#allocation7 + $0x5e0] sm:$0xff]
    %v2167 = vld [vmem:[#allocation7 + $0x5e8] sm:$0xff]
    %v2168 = vld [vmem:[#allocation7 + $0x5f0] sm:$0xff]
    %v2169 = vld [vmem:[#allocation7 + $0x5f8] sm:$0xff]
    %v2170 = vld [vmem:[#allocation7 + $0x600] sm:$0xff]
    %v2171 = vld [vmem:[#allocation7 + $0x608] sm:$0xff]
    %v2172 = vld [vmem:[#allocation7 + $0x610] sm:$0xff]
    %v2173 = vld [vmem:[#allocation7 + $0x618] sm:$0xff]
    %v2174 = vld [vmem:[#allocation7 + $0x620] sm:$0xff]
    %v2175 = vld [vmem:[#allocation7 + $0x628] sm:$0xff]
    %v2176 = vld [vmem:[#allocation7 + $0x630] sm:$0xff]
    %v2177 = vld [vmem:[#allocation7 + $0x638] sm:$0xff]
    %v2178 = vld [vmem:[#allocation7 + $0x640] sm:$0xff]
    %v2179 = vld [vmem:[#allocation7 + $0x648] sm:$0xff]
    %v2180 = vld [vmem:[#allocation7 + $0x650] sm:$0xff]
    %v2181 = vld [vmem:[#allocation7 + $0x658] sm:$0xff]
    %v2182 = vld [vmem:[#allocation7 + $0x660] sm:$0xff]
    %v2183 = vld [vmem:[#allocation7 + $0x668] sm:$0xff]
    %v2184 = vld [vmem:[#allocation7 + $0x670] sm:$0xff]
    %v2185 = vld [vmem:[#allocation7 + $0x678] sm:$0xff]
    %v2186 = vld [vmem:[#allocation7 + $0x680] sm:$0xff]
    %v2187 = vld [vmem:[#allocation7 + $0x688] sm:$0xff]
    %v2188 = vld [vmem:[#allocation7 + $0x690] sm:$0xff]
    %v2189 = vld [vmem:[#allocation7 + $0x698] sm:$0xff]
    %v2190 = vld [vmem:[#allocation7 + $0x6a0] sm:$0xff]
    %v2191 = vld [vmem:[#allocation7 + $0x6a8] sm:$0xff]
    %v2192 = vld [vmem:[#allocation7 + $0x6b0] sm:$0xff]
    %v2193 = vld [vmem:[#allocation7 + $0x6b8] sm:$0xff]
    %v2194 = vld [vmem:[#allocation7 + $0x6c0] sm:$0xff]
    %v2195 = vld [vmem:[#allocation7 + $0x6c8] sm:$0xff]
    %v2196 = vld [vmem:[#allocation7 + $0x6d0] sm:$0xff]
    %v2197 = vld [vmem:[#allocation7 + $0x6d8] sm:$0xff]
    %v2198 = vld [vmem:[#allocation7 + $0x6e0] sm:$0xff]
    %v2199 = vld [vmem:[#allocation7 + $0x6e8] sm:$0xff]
    %v2200 = vld [vmem:[#allocation7 + $0x6f0] sm:$0xff]
    %v2201 = vld [vmem:[#allocation7 + $0x6f8] sm:$0xff]
    %v2202 = vld [vmem:[#allocation7 + $0x700] sm:$0xff]
    %v2203 = vld [vmem:[#allocation7 + $0x708] sm:$0xff]
    %v2204 = vld [vmem:[#allocation7 + $0x710] sm:$0xff]
    %v2205 = vld [vmem:[#allocation7 + $0x718] sm:$0xff]
    %v2206 = vld [vmem:[#allocation7 + $0x720] sm:$0xff]
    %v2207 = vld [vmem:[#allocation7 + $0x728] sm:$0xff]
    %v2208 = vld [vmem:[#allocation7 + $0x730] sm:$0xff]
    %v2209 = vld [vmem:[#allocation7 + $0x738] sm:$0xff]
    %v2210 = vld [vmem:[#allocation7 + $0x740] sm:$0xff]
    %v2211 = vld [vmem:[#allocation7 + $0x748] sm:$0xff]
    %v2212 = vld [vmem:[#allocation7 + $0x750] sm:$0xff]
    %v2213 = vld [vmem:[#allocation7 + $0x758] sm:$0xff]
    %v2214 = vld [vmem:[#allocation7 + $0x760] sm:$0xff]
    %v2215 = vld [vmem:[#allocation7 + $0x768] sm:$0xff]
    %v2216 = vld [vmem:[#allocation7 + $0x770] sm:$0xff]
    %v2217 = vld [vmem:[#allocation7 + $0x778] sm:$0xff]
    %v2218 = vld [vmem:[#allocation7 + $0x780] sm:$0xff]
    %v2219 = vld [vmem:[#allocation7 + $0x788] sm:$0xff]
    %v2220 = vld [vmem:[#allocation7 + $0x790] sm:$0xff]
    %v2221 = vld [vmem:[#allocation7 + $0x798] sm:$0xff]
    %v2222 = vld [vmem:[#allocation7 + $0x7a0] sm:$0xff]
    %v2223 = vld [vmem:[#allocation7 + $0x7a8] sm:$0xff]
    %v2224 = vld [vmem:[#allocation7 + $0x7b0] sm:$0xff]
    %v2225 = vld [vmem:[#allocation7 + $0x7b8] sm:$0xff]
    %v2226 = vld [vmem:[#allocation7 + $0x7c0] sm:$0xff]
    %v2227 = vld [vmem:[#allocation7 + $0x7c8] sm:$0xff]
    %v2228 = vld [vmem:[#allocation7 + $0x7d0] sm:$0xff]
    %v2229 = vld [vmem:[#allocation7 + $0x7d8] sm:$0xff]
    %v2230 = vld [vmem:[#allocation7 + $0x7e0] sm:$0xff]
    %v2231 = vld [vmem:[#allocation7 + $0x7e8] sm:$0xff]
    %v2232 = vld [vmem:[#allocation7 + $0x7f0] sm:$0xff]
    %v2233 = vld [vmem:[#allocation7 + $0x7f8] sm:$0xff]
    %v2234 = vld [vmem:[#allocation7 + $0x800] sm:$0xff]
    %v2235 = vld [vmem:[#allocation7 + $0x808] sm:$0xff]
    %v2236 = vld [vmem:[#allocation7 + $0x810] sm:$0xff]
    %v2237 = vld [vmem:[#allocation7 + $0x818] sm:$0xff]
    %v2238 = vld [vmem:[#allocation7 + $0x820] sm:$0xff]
    %v2239 = vld [vmem:[#allocation7 + $0x828] sm:$0xff]
    %v2240 = vld [vmem:[#allocation7 + $0x830] sm:$0xff]
    %v2241 = vld [vmem:[#allocation7 + $0x838] sm:$0xff]
    %v2242 = vld [vmem:[#allocation7 + $0x840] sm:$0xff]
    %v2243 = vld [vmem:[#allocation7 + $0x848] sm:$0xff]
    %v2244 = vld [vmem:[#allocation7 + $0x850] sm:$0xff]
    %v2245 = vld [vmem:[#allocation7 + $0x858] sm:$0xff]
    %v2246 = vld [vmem:[#allocation7 + $0x860] sm:$0xff]
    %v2247 = vld [vmem:[#allocation7 + $0x868] sm:$0xff]
    %v2248 = vld [vmem:[#allocation7 + $0x870] sm:$0xff]
    %v2249 = vld [vmem:[#allocation7 + $0x878] sm:$0xff]
    %v2250 = vld [vmem:[#allocation7 + $0x880] sm:$0xff]
    %v2251 = vld [vmem:[#allocation7 + $0x888] sm:$0xff]
    %v2252 = vld [vmem:[#allocation7 + $0x890] sm:$0xff]
    %v2253 = vld [vmem:[#allocation7 + $0x898] sm:$0xff]
    %v2254 = vld [vmem:[#allocation7 + $0x8a0] sm:$0xff]
    %v2255 = vld [vmem:[#allocation7 + $0x8a8] sm:$0xff]
    %v2256 = vld [vmem:[#allocation7 + $0x8b0] sm:$0xff]
    %v2257 = vld [vmem:[#allocation7 + $0x8b8] sm:$0xff]
    %v2258 = vld [vmem:[#allocation7 + $0x8c0] sm:$0xff]
    %v2259 = vld [vmem:[#allocation7 + $0x8c8] sm:$0xff]
    %v2260 = vld [vmem:[#allocation7 + $0x8d0] sm:$0xff]
    %v2261 = vld [vmem:[#allocation7 + $0x8d8] sm:$0xff]
    %v2262 = vld [vmem:[#allocation7 + $0x8e0] sm:$0xff]
    %v2263 = vld [vmem:[#allocation7 + $0x8e8] sm:$0xff]
    %v2264 = vld [vmem:[#allocation7 + $0x8f0] sm:$0xff]
    %v2265 = vld [vmem:[#allocation7 + $0x8f8] sm:$0xff]
    %v2266 = vld [vmem:[#allocation7 + $0x900] sm:$0xff]
    %v2267 = vld [vmem:[#allocation7 + $0x908] sm:$0xff]
    %v2268 = vld [vmem:[#allocation7 + $0x910] sm:$0xff]
    %v2269 = vld [vmem:[#allocation7 + $0x918] sm:$0xff]
    %v2270 = vld [vmem:[#allocation7 + $0x920] sm:$0xff]
    %v2271 = vld [vmem:[#allocation7 + $0x928] sm:$0xff]
    %v2272 = vld [vmem:[#allocation7 + $0x930] sm:$0xff]
    %v2273 = vld [vmem:[#allocation7 + $0x938] sm:$0xff]
    %v2274 = vld [vmem:[#allocation7 + $0x940] sm:$0xff]
    %v2275 = vld [vmem:[#allocation7 + $0x948] sm:$0xff]
    %v2276 = vld [vmem:[#allocation7 + $0x950] sm:$0xff]
    %v2277 = vld [vmem:[#allocation7 + $0x958] sm:$0xff]
    %v2278 = vld [vmem:[#allocation7 + $0x960] sm:$0xff]
    %v2279 = vld [vmem:[#allocation7 + $0x968] sm:$0xff]
    %v2280 = vld [vmem:[#allocation7 + $0x970] sm:$0xff]
    %v2281 = vld [vmem:[#allocation7 + $0x978] sm:$0xff]
    %v2282 = vld [vmem:[#allocation7 + $0x980] sm:$0xff]
    %v2283 = vld [vmem:[#allocation7 + $0x988] sm:$0xff]
    %v2284 = vld [vmem:[#allocation7 + $0x990] sm:$0xff]
    %v2285 = vld [vmem:[#allocation7 + $0x998] sm:$0xff]
    %v2286 = vld [vmem:[#allocation7 + $0x9a0] sm:$0xff]
    %v2287 = vld [vmem:[#allocation7 + $0x9a8] sm:$0xff]
    %v2288 = vld [vmem:[#allocation7 + $0x9b0] sm:$0xff]
    %v2289 = vld [vmem:[#allocation7 + $0x9b8] sm:$0xff]
    %v2290 = vld [vmem:[#allocation7 + $0x9c0] sm:$0xff]
    %v2291 = vld [vmem:[#allocation7 + $0x9c8] sm:$0xff]
    %v2292 = vld [vmem:[#allocation7 + $0x9d0] sm:$0xff]
    %v2293 = vld [vmem:[#allocation7 + $0x9d8] sm:$0xff]
    %v2294 = vld [vmem:[#allocation7 + $0x9e0] sm:$0xff]
    %v2295 = vld [vmem:[#allocation7 + $0x9e8] sm:$0xff]
    %v2296 = vld [vmem:[#allocation7 + $0x9f0] sm:$0xff]
    %v2297 = vld [vmem:[#allocation7 + $0x9f8] sm:$0xff]
    %v2298 = vld [vmem:[#allocation7 + $0xa00] sm:$0xff]
    %v2299 = vld [vmem:[#allocation7 + $0xa08] sm:$0xff]
    %v2300 = vld [vmem:[#allocation7 + $0xa10] sm:$0xff]
    %v2301 = vld [vmem:[#allocation7 + $0xa18] sm:$0xff]
    %v2302 = vld [vmem:[#allocation7 + $0xa20] sm:$0xff]
    %v2303 = vld [vmem:[#allocation7 + $0xa28] sm:$0xff]
    %v2304 = vld [vmem:[#allocation7 + $0xa30] sm:$0xff]
    %v2305 = vld [vmem:[#allocation7 + $0xa38] sm:$0xff]
    %v2306 = vld [vmem:[#allocation7 + $0xa40] sm:$0xff]
    %v2307 = vld [vmem:[#allocation7 + $0xa48] sm:$0xff]
    %v2308 = vld [vmem:[#allocation7 + $0xa50] sm:$0xff]
    %v2309 = vld [vmem:[#allocation7 + $0xa58] sm:$0xff]
    %v2310 = vld [vmem:[#allocation7 + $0xa60] sm:$0xff]
    %v2311 = vld [vmem:[#allocation7 + $0xa68] sm:$0xff]
    %v2312 = vld [vmem:[#allocation7 + $0xa70] sm:$0xff]
    %v2313 = vld [vmem:[#allocation7 + $0xa78] sm:$0xff]
    %v2314 = vld [vmem:[#allocation7 + $0xa80] sm:$0xff]
    %v2315 = vld [vmem:[#allocation7 + $0xa88] sm:$0xff]
    %v2316 = vld [vmem:[#allocation7 + $0xa90] sm:$0xff]
    %v2317 = vld [vmem:[#allocation7 + $0xa98] sm:$0xff]
    %v2318 = vld [vmem:[#allocation7 + $0xaa0] sm:$0xff]
    %v2319 = vld [vmem:[#allocation7 + $0xaa8] sm:$0xff]
    %v2320 = vld [vmem:[#allocation7 + $0xab0] sm:$0xff]
    %v2321 = vld [vmem:[#allocation7 + $0xab8] sm:$0xff]
    %v2322 = vld [vmem:[#allocation7 + $0xac0] sm:$0xff]
    %v2323 = vld [vmem:[#allocation7 + $0xac8] sm:$0xff]
    %v2324 = vld [vmem:[#allocation7 + $0xad0] sm:$0xff]
    %v2325 = vld [vmem:[#allocation7 + $0xad8] sm:$0xff]
    %v2326 = vld [vmem:[#allocation7 + $0xae0] sm:$0xff]
    %v2327 = vld [vmem:[#allocation7 + $0xae8] sm:$0xff]
    %v2328 = vld [vmem:[#allocation7 + $0xaf0] sm:$0xff]
    %v2329 = vld [vmem:[#allocation7 + $0xaf8] sm:$0xff]
    %v2330 = vld [vmem:[#allocation7 + $0xb00] sm:$0xff]
    %v2331 = vld [vmem:[#allocation7 + $0xb08] sm:$0xff]
    %v2332 = vld [vmem:[#allocation7 + $0xb10] sm:$0xff]
    %v2333 = vld [vmem:[#allocation7 + $0xb18] sm:$0xff]
    %v2334 = vld [vmem:[#allocation7 + $0xb20] sm:$0xff]
    %v2335 = vld [vmem:[#allocation7 + $0xb28] sm:$0xff]
    %v2336 = vld [vmem:[#allocation7 + $0xb30] sm:$0xff]
    %v2337 = vld [vmem:[#allocation7 + $0xb38] sm:$0xff]
    %v2338 = vld [vmem:[#allocation7 + $0xb40] sm:$0xff]
    %v2339 = vld [vmem:[#allocation7 + $0xb48] sm:$0xff]
    %v2340 = vld [vmem:[#allocation7 + $0xb50] sm:$0xff]
    %v2341 = vld [vmem:[#allocation7 + $0xb58] sm:$0xff]
    %v2342 = vld [vmem:[#allocation7 + $0xb60] sm:$0xff]
    %v2343 = vld [vmem:[#allocation7 + $0xb68] sm:$0xff]
    %v2344 = vld [vmem:[#allocation7 + $0xb70] sm:$0xff]
    %v2345 = vld [vmem:[#allocation7 + $0xb78] sm:$0xff]
    %v2346 = vld [vmem:[#allocation7 + $0xb80] sm:$0xff]
    %v2347 = vld [vmem:[#allocation7 + $0xb88] sm:$0xff]
    %v2348 = vld [vmem:[#allocation7 + $0xb90] sm:$0xff]
    %v2349 = vld [vmem:[#allocation7 + $0xb98] sm:$0xff]
    %v2350 = vld [vmem:[#allocation7 + $0xba0] sm:$0xff]
    %v2351 = vld [vmem:[#allocation7 + $0xba8] sm:$0xff]
    %v2352 = vld [vmem:[#allocation7 + $0xbb0] sm:$0xff]
    %v2353 = vld [vmem:[#allocation7 + $0xbb8] sm:$0xff]
    %v2354 = vld [vmem:[#allocation7 + $0xbc0] sm:$0xff]
    %v2355 = vld [vmem:[#allocation7 + $0xbc8] sm:$0xff]
    %v2356 = vld [vmem:[#allocation7 + $0xbd0] sm:$0xff]
    %v2357 = vld [vmem:[#allocation7 + $0xbd8] sm:$0xff]
    %v2358 = vld [vmem:[#allocation7 + $0xbe0] sm:$0xff]
    %v2359 = vld [vmem:[#allocation7 + $0xbe8] sm:$0xff]
    %v2360 = vld [vmem:[#allocation7 + $0xbf0] sm:$0xff]
    %v2361 = vld [vmem:[#allocation7 + $0xbf8] sm:$0xff]
    %v2362 = vld [vmem:[#allocation7 + $0xc00] sm:$0xff]
    %v2363 = vld [vmem:[#allocation7 + $0xc08] sm:$0xff]
    %v2364 = vld [vmem:[#allocation7 + $0xc10] sm:$0xff]
    %v2365 = vld [vmem:[#allocation7 + $0xc18] sm:$0xff]
    %v2366 = vld [vmem:[#allocation7 + $0xc20] sm:$0xff]
    %v2367 = vld [vmem:[#allocation7 + $0xc28] sm:$0xff]
    %v2368 = vld [vmem:[#allocation7 + $0xc30] sm:$0xff]
    %v2369 = vld [vmem:[#allocation7 + $0xc38] sm:$0xff]
    %v2370 = vld [vmem:[#allocation7 + $0xc40] sm:$0xff]
    %v2371 = vld [vmem:[#allocation7 + $0xc48] sm:$0xff]
    %v2372 = vld [vmem:[#allocation7 + $0xc50] sm:$0xff]
    %v2373 = vld [vmem:[#allocation7 + $0xc58] sm:$0xff]
    %v2374 = vld [vmem:[#allocation7 + $0xc60] sm:$0xff]
    %v2375 = vld [vmem:[#allocation7 + $0xc68] sm:$0xff]
    %v2376 = vld [vmem:[#allocation7 + $0xc70] sm:$0xff]
    %v2377 = vld [vmem:[#allocation7 + $0xc78] sm:$0xff]
    %v2378 = vld [vmem:[#allocation7 + $0xc80] sm:$0xff]
    %v2379 = vld [vmem:[#allocation7 + $0xc88] sm:$0xff]
    %v2380 = vld [vmem:[#allocation7 + $0xc90] sm:$0xff]
    %v2381 = vld [vmem:[#allocation7 + $0xc98] sm:$0xff]
    %v2382 = vld [vmem:[#allocation7 + $0xca0] sm:$0xff]
    %v2383 = vld [vmem:[#allocation7 + $0xca8] sm:$0xff]
    %v2384 = vld [vmem:[#allocation7 + $0xcb0] sm:$0xff]
    %v2385 = vld [vmem:[#allocation7 + $0xcb8] sm:$0xff]
    %v2386 = vld [vmem:[#allocation7 + $0xcc0] sm:$0xff]
    %v2387 = vld [vmem:[#allocation7 + $0xcc8] sm:$0xff]
    %v2388 = vld [vmem:[#allocation7 + $0xcd0] sm:$0xff]
    %v2389 = vld [vmem:[#allocation7 + $0xcd8] sm:$0xff]
    %v2390 = vld [vmem:[#allocation7 + $0xce0] sm:$0xff]
    %v2391 = vld [vmem:[#allocation7 + $0xce8] sm:$0xff]
    %v2392 = vld [vmem:[#allocation7 + $0xcf0] sm:$0xff]
    %v2393 = vld [vmem:[#allocation7 + $0xcf8] sm:$0xff]
    %v2394 = vld [vmem:[#allocation7 + $0xd00] sm:$0xff]
    %v2395 = vld [vmem:[#allocation7 + $0xd08] sm:$0xff]
    %v2396 = vld [vmem:[#allocation7 + $0xd10] sm:$0xff]
    %v2397 = vld [vmem:[#allocation7 + $0xd18] sm:$0xff]
    %v2398 = vld [vmem:[#allocation7 + $0xd20] sm:$0xff]
    %v2399 = vld [vmem:[#allocation7 + $0xd28] sm:$0xff]
    %v2400 = vld [vmem:[#allocation7 + $0xd30] sm:$0xff]
    %v2401 = vld [vmem:[#allocation7 + $0xd38] sm:$0xff]
    %v2402 = vld [vmem:[#allocation7 + $0xd40] sm:$0xff]
    %v2403 = vld [vmem:[#allocation7 + $0xd48] sm:$0xff]
    %v2404 = vld [vmem:[#allocation7 + $0xd50] sm:$0xff]
    %v2405 = vld [vmem:[#allocation7 + $0xd58] sm:$0xff]
    %v2406 = vld [vmem:[#allocation7 + $0xd60] sm:$0xff]
    %v2407 = vld [vmem:[#allocation7 + $0xd68] sm:$0xff]
    %v2408 = vld [vmem:[#allocation7 + $0xd70] sm:$0xff]
    %v2409 = vld [vmem:[#allocation7 + $0xd78] sm:$0xff]
    %v2410 = vld [vmem:[#allocation7 + $0xd80] sm:$0xff]
    %v2411 = vld [vmem:[#allocation7 + $0xd88] sm:$0xff]
    %v2412 = vld [vmem:[#allocation7 + $0xd90] sm:$0xff]
    %v2413 = vld [vmem:[#allocation7 + $0xd98] sm:$0xff]
    %v2414 = vld [vmem:[#allocation7 + $0xda0] sm:$0xff]
    %v2415 = vld [vmem:[#allocation7 + $0xda8] sm:$0xff]
    %v2416 = vld [vmem:[#allocation7 + $0xdb0] sm:$0xff]
    %v2417 = vld [vmem:[#allocation7 + $0xdb8] sm:$0xff]
    %v2418 = vld [vmem:[#allocation7 + $0xdc0] sm:$0xff]
    %v2419 = vld [vmem:[#allocation7 + $0xdc8] sm:$0xff]
    %v2420 = vld [vmem:[#allocation7 + $0xdd0] sm:$0xff]
    %v2421 = vld [vmem:[#allocation7 + $0xdd8] sm:$0xff]
    %v2422 = vld [vmem:[#allocation7 + $0xde0] sm:$0xff]
    %v2423 = vld [vmem:[#allocation7 + $0xde8] sm:$0xff]
    %v2424 = vld [vmem:[#allocation7 + $0xdf0] sm:$0xff]
    %v2425 = vld [vmem:[#allocation7 + $0xdf8] sm:$0xff]
    %v2426 = vld [vmem:[#allocation7 + $0xe00] sm:$0xff]
    %v2427 = vld [vmem:[#allocation7 + $0xe08] sm:$0xff]
    %v2428 = vld [vmem:[#allocation7 + $0xe10] sm:$0xff]
    %v2429 = vld [vmem:[#allocation7 + $0xe18] sm:$0xff]
    %v2430 = vld [vmem:[#allocation7 + $0xe20] sm:$0xff]
    %v2431 = vld [vmem:[#allocation7 + $0xe28] sm:$0xff]
    %v2432 = vld [vmem:[#allocation7 + $0xe30] sm:$0xff]
    %v2433 = vld [vmem:[#allocation7 + $0xe38] sm:$0xff]
    %v2434 = vld [vmem:[#allocation7 + $0xe40] sm:$0xff]
    %v2435 = vld [vmem:[#allocation7 + $0xe48] sm:$0xff]
    %v2436 = vld [vmem:[#allocation7 + $0xe50] sm:$0xff]
    %v2437 = vld [vmem:[#allocation7 + $0xe58] sm:$0xff]
    %v2438 = vld [vmem:[#allocation7 + $0xe60] sm:$0xff]
    %v2439 = vld [vmem:[#allocation7 + $0xe68] sm:$0xff]
    %v2440 = vld [vmem:[#allocation7 + $0xe70] sm:$0xff]
    %v2441 = vld [vmem:[#allocation7 + $0xe78] sm:$0xff]
    %v2442 = vld [vmem:[#allocation7 + $0xe80] sm:$0xff]
    %v2443 = vld [vmem:[#allocation7 + $0xe88] sm:$0xff]
    %v2444 = vld [vmem:[#allocation7 + $0xe90] sm:$0xff]
    %v2445 = vld [vmem:[#allocation7 + $0xe98] sm:$0xff]
    %v2446 = vld [vmem:[#allocation7 + $0xea0] sm:$0xff]
    %v2447 = vld [vmem:[#allocation7 + $0xea8] sm:$0xff]
    %v2448 = vld [vmem:[#allocation7 + $0xeb0] sm:$0xff]
    %v2449 = vld [vmem:[#allocation7 + $0xeb8] sm:$0xff]
    %v2450 = vld [vmem:[#allocation7 + $0xec0] sm:$0xff]
    %v2451 = vld [vmem:[#allocation7 + $0xec8] sm:$0xff]
    %v2452 = vld [vmem:[#allocation7 + $0xed0] sm:$0xff]
    %v2453 = vld [vmem:[#allocation7 + $0xed8] sm:$0xff]
    %v2454 = vld [vmem:[#allocation7 + $0xee0] sm:$0xff]
    %v2455 = vld [vmem:[#allocation7 + $0xee8] sm:$0xff]
    %v2456 = vld [vmem:[#allocation7 + $0xef0] sm:$0xff]
    %v2457 = vld [vmem:[#allocation7 + $0xef8] sm:$0xff]
    %v2458 = vld [vmem:[#allocation7 + $0xf00] sm:$0xff]
    %v2459 = vld [vmem:[#allocation7 + $0xf08] sm:$0xff]
    %v2460 = vld [vmem:[#allocation7 + $0xf10] sm:$0xff]
    %v2461 = vld [vmem:[#allocation7 + $0xf18] sm:$0xff]
    %v2462 = vld [vmem:[#allocation7 + $0xf20] sm:$0xff]
    %v2463 = vld [vmem:[#allocation7 + $0xf28] sm:$0xff]
    %v2464 = vld [vmem:[#allocation7 + $0xf30] sm:$0xff]
    %v2465 = vld [vmem:[#allocation7 + $0xf38] sm:$0xff]
    %v2466 = vld [vmem:[#allocation7 + $0xf40] sm:$0xff]
    %v2467 = vld [vmem:[#allocation7 + $0xf48] sm:$0xff]
    %v2468 = vld [vmem:[#allocation7 + $0xf50] sm:$0xff]
    %v2469 = vld [vmem:[#allocation7 + $0xf58] sm:$0xff]
    %v2470 = vld [vmem:[#allocation7 + $0xf60] sm:$0xff]
    %v2471 = vld [vmem:[#allocation7 + $0xf68] sm:$0xff]
    %v2472 = vld [vmem:[#allocation7 + $0xf70] sm:$0xff]
    %v2473 = vld [vmem:[#allocation7 + $0xf78] sm:$0xff]
    %v2474 = vld [vmem:[#allocation7 + $0xf80] sm:$0xff]
    %v2475 = vld [vmem:[#allocation7 + $0xf88] sm:$0xff]
    %v2476 = vld [vmem:[#allocation7 + $0xf90] sm:$0xff]
    %v2477 = vld [vmem:[#allocation7 + $0xf98] sm:$0xff]
    %v2478 = vld [vmem:[#allocation7 + $0xfa0] sm:$0xff]
    %v2479 = vld [vmem:[#allocation7 + $0xfa8] sm:$0xff]
    %v2480 = vld [vmem:[#allocation7 + $0xfb0] sm:$0xff]
    %v2481 = vld [vmem:[#allocation7 + $0xfb8] sm:$0xff]
    %v2482 = vld [vmem:[#allocation7 + $0xfc0] sm:$0xff]
    %v2483 = vld [vmem:[#allocation7 + $0xfc8] sm:$0xff]
    %v2484 = vld [vmem:[#allocation7 + $0xfd0] sm:$0xff]
    %v2485 = vld [vmem:[#allocation7 + $0xfd8] sm:$0xff]
    %v2486 = vld [vmem:[#allocation7 + $0xfe0] sm:$0xff]
    %v2487 = vld [vmem:[#allocation7 + $0xfe8] sm:$0xff]
    %v2488 = vld [vmem:[#allocation7 + $0xff0] sm:$0xff]
    %v2489 = vld [vmem:[#allocation7 + $0xff8] sm:$0xff]
    %v2490 = vld [vmem:[#allocation7 + $0x1000] sm:$0xff]
    %v2491 = vld [vmem:[#allocation7 + $0x1008] sm:$0xff]
    %v2492 = vld [vmem:[#allocation7 + $0x1010] sm:$0xff]
    %v2493 = vld [vmem:[#allocation7 + $0x1018] sm:$0xff]
    %v2494 = vld [vmem:[#allocation7 + $0x1020] sm:$0xff]
    %v2495 = vld [vmem:[#allocation7 + $0x1028] sm:$0xff]
    %v2496 = vld [vmem:[#allocation7 + $0x1030] sm:$0xff]
    %v2497 = vld [vmem:[#allocation7 + $0x1038] sm:$0xff]
    %v2498 = vld [vmem:[#allocation7 + $0x1040] sm:$0xff]
    %v2499 = vld [vmem:[#allocation7 + $0x1048] sm:$0xff]
    %v2500 = vld [vmem:[#allocation7 + $0x1050] sm:$0xff]
    %v2501 = vld [vmem:[#allocation7 + $0x1058] sm:$0xff]
    %v2502 = vld [vmem:[#allocation7 + $0x1060] sm:$0xff]
    %v2503 = vld [vmem:[#allocation7 + $0x1068] sm:$0xff]
    %v2504 = vld [vmem:[#allocation7 + $0x1070] sm:$0xff]
    %v2505 = vld [vmem:[#allocation7 + $0x1078] sm:$0xff]
    %v2506 = vld [vmem:[#allocation7 + $0x1080] sm:$0xff]
    %v2507 = vld [vmem:[#allocation7 + $0x1088] sm:$0xff]
    %v2508 = vld [vmem:[#allocation7 + $0x1090] sm:$0xff]
    %v2509 = vld [vmem:[#allocation7 + $0x1098] sm:$0xff]
    %v2510 = vld [vmem:[#allocation7 + $0x10a0] sm:$0xff]
    %v2511 = vld [vmem:[#allocation7 + $0x10a8] sm:$0xff]
    %v2512 = vld [vmem:[#allocation7 + $0x10b0] sm:$0xff]
    %v2513 = vld [vmem:[#allocation7 + $0x10b8] sm:$0xff]
    %v2514 = vld [vmem:[#allocation7 + $0x10c0] sm:$0xff]
    %v2515 = vld [vmem:[#allocation7 + $0x10c8] sm:$0xff]
    %v2516 = vld [vmem:[#allocation7 + $0x10d0] sm:$0xff]
    %v2517 = vld [vmem:[#allocation7 + $0x10d8] sm:$0xff]
    %v2518 = vld [vmem:[#allocation7 + $0x10e0] sm:$0xff]
    %v2519 = vld [vmem:[#allocation7 + $0x10e8] sm:$0xff]
    %v2520 = vld [vmem:[#allocation7 + $0x10f0] sm:$0xff]
    %v2521 = vld [vmem:[#allocation7 + $0x10f8] sm:$0xff]
    %v2522 = vld [vmem:[#allocation7 + $0x1100] sm:$0xff]
    %v2523 = vld [vmem:[#allocation7 + $0x1108] sm:$0xff]
    %v2524 = vld [vmem:[#allocation7 + $0x1110] sm:$0xff]
    %v2525 = vld [vmem:[#allocation7 + $0x1118] sm:$0xff]
    %v2526 = vld [vmem:[#allocation7 + $0x1120] sm:$0xff]
    %v2527 = vld [vmem:[#allocation7 + $0x1128] sm:$0xff]
    %v2528 = vld [vmem:[#allocation7 + $0x1130] sm:$0xff]
    %v2529 = vld [vmem:[#allocation7 + $0x1138] sm:$0xff]
    %v2530 = vld [vmem:[#allocation7 + $0x1140] sm:$0xff]
    %v2531 = vld [vmem:[#allocation7 + $0x1148] sm:$0xff]
    %v2532 = vld [vmem:[#allocation7 + $0x1150] sm:$0xff]
    %v2533 = vld [vmem:[#allocation7 + $0x1158] sm:$0xff]
    %v2534 = vld [vmem:[#allocation7 + $0x1160] sm:$0xff]
    %v2535 = vld [vmem:[#allocation7 + $0x1168] sm:$0xff]
    %v2536 = vld [vmem:[#allocation7 + $0x1170] sm:$0xff]
    %v2537 = vld [vmem:[#allocation7 + $0x1178] sm:$0xff]
    %v2538 = vld [vmem:[#allocation7 + $0x1180] sm:$0xff]
    %v2539 = vld [vmem:[#allocation7 + $0x1188] sm:$0xff]
    %v2540 = vld [vmem:[#allocation7 + $0x1190] sm:$0xff]
    %v2541 = vld [vmem:[#allocation7 + $0x1198] sm:$0xff]
    %v2542 = vld [vmem:[#allocation7 + $0x11a0] sm:$0xff]
    %v2543 = vld [vmem:[#allocation7 + $0x11a8] sm:$0xff]
    %v2544 = vld [vmem:[#allocation7 + $0x11b0] sm:$0xff]
    %v2545 = vld [vmem:[#allocation7 + $0x11b8] sm:$0xff]
    %v2546 = vld [vmem:[#allocation7 + $0x11c0] sm:$0xff]
    %v2547 = vld [vmem:[#allocation7 + $0x11c8] sm:$0xff]
    %v2548 = vld [vmem:[#allocation7 + $0x11d0] sm:$0xff]
    %v2549 = vld [vmem:[#allocation7 + $0x11d8] sm:$0xff]
    %v2550 = vld [vmem:[#allocation7 + $0x11e0] sm:$0xff]
    %v2551 = vld [vmem:[#allocation7 + $0x11e8] sm:$0xff]
    %v2552 = vld [vmem:[#allocation7 + $0x11f0] sm:$0xff]
    %v2553 = vld [vmem:[#allocation7 + $0x11f8] sm:$0xff]
    %v2554 = vld [vmem:[%s4] sm:$0x3f]
    %v2556 = vperm.slane %v2554, 0
    %v2557 = vperm.slane %v2554, 1
    %v2558 = vperm.slane %v2554, 2
    %v2559 = vperm.slane %v2554, 3
    %v2560 = vperm.slane %v2554, 4
    %v2561 = vperm.slane %v2554, 5
    %2568 = vmatpush.msra.mxu0 %v2068
    %2569 = vmatpush.msra.mxu0 %v2062
    %2570 = vmatpush.msra.mxu0 %v2056
    %2571 = vmatpush.msra.mxu0 %v2050
    %2572 = vmatpush.msra.mxu0 %v2044
    %2573 = vmatpush.msra.mxu0 %v2038
    %2574 = vmatpush.msra.mxu0 %v2032
    %2575 = vmatpush.msra.mxu0 %v2026
    %2576 = vmatpush.msra.mxu0 %v2020
    %2577 = vmatpush.msra.mxu0 %v2014
    %2578 = vmatpush.msra.mxu0 %v2008
    %2579 = vmatpush.msra.mxu0 %v2002
    %2580 = vmatpush.msra.mxu0 %v1996
    %2581 = vmatpush.msra.mxu0 %v1990
    %2582 = vmatpush.msra.mxu0 %v1984
    %2583 = vmatpush.msra.mxu0 %v1978
    %2584 = vmatmul.f32.gmra.mxu0 %v1966
    %v2585 = vpop.f32.mrf.mxu0
    %v2586 = vadd.f32 %v2556, %v2585
    %2587 = vmatmul.f32.gmra.mxu0 %v1972
    %v2588 = vpop.f32.mrf.mxu0
    %v2589 = vadd.f32 %v2556, %v2588
    %2590 = vdwg.mxu0
    %2591 = vmatpush.msra.mxu0 %v2164
    %2592 = vmatpush.msra.mxu0 %v2158
    %2593 = vmatpush.msra.mxu0 %v2152
    %2594 = vmatpush.msra.mxu0 %v2146
    %2595 = vmatpush.msra.mxu0 %v2140
    %2596 = vmatpush.msra.mxu0 %v2134
    %2597 = vmatpush.msra.mxu0 %v2128
    %2598 = vmatpush.msra.mxu0 %v2122
    %2599 = vmatpush.msra.mxu0 %v2116
    %2600 = vmatpush.msra.mxu0 %v2110
    %2601 = vmatpush.msra.mxu0 %v2104
    %2602 = vmatpush.msra.mxu0 %v2098
    %2603 = vmatpush.msra.mxu0 %v2092
    %2604 = vmatpush.msra.mxu0 %v2086
    %2605 = vmatpush.msra.mxu0 %v2080
    %2606 = vmatpush.msra.mxu0 %v2074
    %2607 = vmatmul.f32.gmra.mxu0 %v1967
    %v2608 = vpop.f32.mrf.mxu0
    %v2609 = vadd.f32 %v2586, %v2608
    %2610 = vmatmul.f32.gmra.mxu0 %v1973
    %v2611 = vpop.f32.mrf.mxu0
    %v2612 = vadd.f32 %v2589, %v2611
    %2613 = vdwg.mxu0
    %2614 = vmatpush.msra.mxu0 %v2260
    %2615 = vmatpush.msra.mxu0 %v2254
    %2616 = vmatpush.msra.mxu0 %v2248
    %2617 = vmatpush.msra.mxu0 %v2242
    %2618 = vmatpush.msra.mxu0 %v2236
    %2619 = vmatpush.msra.mxu0 %v2230
    %2620 = vmatpush.msra.mxu0 %v2224
    %2621 = vmatpush.msra.mxu0 %v2218
    %2622 = vmatpush.msra.mxu0 %v2212
    %2623 = vmatpush.msra.mxu0 %v2206
    %2624 = vmatpush.msra.mxu0 %v2200
    %2625 = vmatpush.msra.mxu0 %v2194
    %2626 = vmatpush.msra.mxu0 %v2188
    %2627 = vmatpush.msra.mxu0 %v2182
    %2628 = vmatpush.msra.mxu0 %v2176
    %2629 = vmatpush.msra.mxu0 %v2170
    %2630 = vmatmul.f32.gmra.mxu0 %v1968
    %v2631 = vpop.f32.mrf.mxu0
    %v2632 = vadd.f32 %v2609, %v2631
    %2633 = vmatmul.f32.gmra.mxu0 %v1974
    %v2634 = vpop.f32.mrf.mxu0
    %v2635 = vadd.f32 %v2612, %v2634
    %2636 = vdwg.mxu0
    %2637 = vmatpush.msra.mxu0 %v2356
    %2638 = vmatpush.msra.mxu0 %v2350
    %2639 = vmatpush.msra.mxu0 %v2344
    %2640 = vmatpush.msra.mxu0 %v2338
    %2641 = vmatpush.msra.mxu0 %v2332
    %2642 = vmatpush.msra.mxu0 %v2326
    %2643 = vmatpush.msra.mxu0 %v2320
    %2644 = vmatpush.msra.mxu0 %v2314
    %2645 = vmatpush.msra.mxu0 %v2308
    %2646 = vmatpush.msra.mxu0 %v2302
    %2647 = vmatpush.msra.mxu0 %v2296
    %2648 = vmatpush.msra.mxu0 %v2290
    %2649 = vmatpush.msra.mxu0 %v2284
    %2650 = vmatpush.msra.mxu0 %v2278
    %2651 = vmatpush.msra.mxu0 %v2272
    %2652 = vmatpush.msra.mxu0 %v2266
    %2653 = vmatmul.f32.gmra.mxu0 %v1969
    %v2654 = vpop.f32.mrf.mxu0
    %v2655 = vadd.f32 %v2632, %v2654
    %2656 = vmatmul.f32.gmra.mxu0 %v1975
    %v2657 = vpop.f32.mrf.mxu0
    %v2658 = vadd.f32 %v2635, %v2657
    %2659 = vdwg.mxu0
    %2660 = vmatpush.msra.mxu0 %v2452
    %2661 = vmatpush.msra.mxu0 %v2446
    %2662 = vmatpush.msra.mxu0 %v2440
    %2663 = vmatpush.msra.mxu0 %v2434
    %2664 = vmatpush.msra.mxu0 %v2428
    %2665 = vmatpush.msra.mxu0 %v2422
    %2666 = vmatpush.msra.mxu0 %v2416
    %2667 = vmatpush.msra.mxu0 %v2410
    %2668 = vmatpush.msra.mxu0 %v2404
    %2669 = vmatpush.msra.mxu0 %v2398
    %2670 = vmatpush.msra.mxu0 %v2392
    %2671 = vmatpush.msra.mxu0 %v2386
    %2672 = vmatpush.msra.mxu0 %v2380
    %2673 = vmatpush.msra.mxu0 %v2374
    %2674 = vmatpush.msra.mxu0 %v2368
    %2675 = vmatpush.msra.mxu0 %v2362
    %2676 = vmatmul.f32.gmra.mxu0 %v1970
    %v2677 = vpop.f32.mrf.mxu0
    %v2678 = vadd.f32 %v2655, %v2677
    %2679 = vmatmul.f32.gmra.mxu0 %v1976
    %v2680 = vpop.f32.mrf.mxu0
    %v2681 = vadd.f32 %v2658, %v2680
    %2682 = vdwg.mxu0
    %2683 = vmatpush.msra.mxu0 %v2548
    %2684 = vmatpush.msra.mxu0 %v2542
    %2685 = vmatpush.msra.mxu0 %v2536
    %2686 = vmatpush.msra.mxu0 %v2530
    %2687 = vmatpush.msra.mxu0 %v2524
    %2688 = vmatpush.msra.mxu0 %v2518
    %2689 = vmatpush.msra.mxu0 %v2512
    %2690 = vmatpush.msra.mxu0 %v2506
    %2691 = vmatpush.msra.mxu0 %v2500
    %2692 = vmatpush.msra.mxu0 %v2494
    %2693 = vmatpush.msra.mxu0 %v2488
    %2694 = vmatpush.msra.mxu0 %v2482
    %2695 = vmatpush.msra.mxu0 %v2476
    %2696 = vmatpush.msra.mxu0 %v2470
    %2697 = vmatpush.msra.mxu0 %v2464
    %2698 = vmatpush.msra.mxu0 %v2458
    %2699 = vmatmul.f32.gmra.mxu0 %v1971
    %v2700 = vpop.f32.mrf.mxu0
    %v2701 = vadd.f32 %v2678, %v2700
    %2702 = vmatmul.f32.gmra.mxu0 %v1977
    %v2703 = vpop.f32.mrf.mxu0
    %v2704 = vadd.f32 %v2681, %v2703
    %2705 = vdwg.mxu0
    %2706 = vmatpush.msra.mxu0 %v2069
    %2707 = vmatpush.msra.mxu0 %v2063
    %2708 = vmatpush.msra.mxu0 %v2057
    %2709 = vmatpush.msra.mxu0 %v2051
    %2710 = vmatpush.msra.mxu0 %v2045
    %2711 = vmatpush.msra.mxu0 %v2039
    %2712 = vmatpush.msra.mxu0 %v2033
    %2713 = vmatpush.msra.mxu0 %v2027
    %2714 = vmatpush.msra.mxu0 %v2021
    %2715 = vmatpush.msra.mxu0 %v2015
    %2716 = vmatpush.msra.mxu0 %v2009
    %2717 = vmatpush.msra.mxu0 %v2003
    %2718 = vmatpush.msra.mxu0 %v1997
    %2719 = vmatpush.msra.mxu0 %v1991
    %2720 = vmatpush.msra.mxu0 %v1985
    %2721 = vmatpush.msra.mxu0 %v1979
    %2722 = vmatmul.f32.gmra.mxu0 %v1966
    %v2723 = vpop.f32.mrf.mxu0
    %v2724 = vadd.f32 %v2557, %v2723
    %2725 = vmatmul.f32.gmra.mxu0 %v1972
    %v2726 = vpop.f32.mrf.mxu0
    %v2727 = vadd.f32 %v2557, %v2726
    %2728 = vdwg.mxu0
    %2729 = vmatpush.msra.mxu0 %v2165
    %2730 = vmatpush.msra.mxu0 %v2159
    %2731 = vmatpush.msra.mxu0 %v2153
    %2732 = vmatpush.msra.mxu0 %v2147
    %2733 = vmatpush.msra.mxu0 %v2141
    %2734 = vmatpush.msra.mxu0 %v2135
    %2735 = vmatpush.msra.mxu0 %v2129
    %2736 = vmatpush.msra.mxu0 %v2123
    %2737 = vmatpush.msra.mxu0 %v2117
    %2738 = vmatpush.msra.mxu0 %v2111
    %2739 = vmatpush.msra.mxu0 %v2105
    %2740 = vmatpush.msra.mxu0 %v2099
    %2741 = vmatpush.msra.mxu0 %v2093
    %2742 = vmatpush.msra.mxu0 %v2087
    %2743 = vmatpush.msra.mxu0 %v2081
    %2744 = vmatpush.msra.mxu0 %v2075
    %2745 = vmatmul.f32.gmra.mxu0 %v1967
    %v2746 = vpop.f32.mrf.mxu0
    %v2747 = vadd.f32 %v2724, %v2746
    %2748 = vmatmul.f32.gmra.mxu0 %v1973
    %v2749 = vpop.f32.mrf.mxu0
    %v2750 = vadd.f32 %v2727, %v2749
    %2751 = vdwg.mxu0
    %2752 = vmatpush.msra.mxu0 %v2261
    %2753 = vmatpush.msra.mxu0 %v2255
    %2754 = vmatpush.msra.mxu0 %v2249
    %2755 = vmatpush.msra.mxu0 %v2243
    %2756 = vmatpush.msra.mxu0 %v2237
    %2757 = vmatpush.msra.mxu0 %v2231
    %2758 = vmatpush.msra.mxu0 %v2225
    %2759 = vmatpush.msra.mxu0 %v2219
    %2760 = vmatpush.msra.mxu0 %v2213
    %2761 = vmatpush.msra.mxu0 %v2207
    %2762 = vmatpush.msra.mxu0 %v2201
    %2763 = vmatpush.msra.mxu0 %v2195
    %2764 = vmatpush.msra.mxu0 %v2189
    %2765 = vmatpush.msra.mxu0 %v2183
    %2766 = vmatpush.msra.mxu0 %v2177
    %2767 = vmatpush.msra.mxu0 %v2171
    %2768 = vmatmul.f32.gmra.mxu0 %v1968
    %v2769 = vpop.f32.mrf.mxu0
    %v2770 = vadd.f32 %v2747, %v2769
    %2771 = vmatmul.f32.gmra.mxu0 %v1974
    %v2772 = vpop.f32.mrf.mxu0
    %v2773 = vadd.f32 %v2750, %v2772
    %2774 = vdwg.mxu0
    %2775 = vmatpush.msra.mxu0 %v2357
    %2776 = vmatpush.msra.mxu0 %v2351
    %2777 = vmatpush.msra.mxu0 %v2345
    %2778 = vmatpush.msra.mxu0 %v2339
    %2779 = vmatpush.msra.mxu0 %v2333
    %2780 = vmatpush.msra.mxu0 %v2327
    %2781 = vmatpush.msra.mxu0 %v2321
    %2782 = vmatpush.msra.mxu0 %v2315
    %2783 = vmatpush.msra.mxu0 %v2309
    %2784 = vmatpush.msra.mxu0 %v2303
    %2785 = vmatpush.msra.mxu0 %v2297
    %2786 = vmatpush.msra.mxu0 %v2291
    %2787 = vmatpush.msra.mxu0 %v2285
    %2788 = vmatpush.msra.mxu0 %v2279
    %2789 = vmatpush.msra.mxu0 %v2273
    %2790 = vmatpush.msra.mxu0 %v2267
    %2791 = vmatmul.f32.gmra.mxu0 %v1969
    %v2792 = vpop.f32.mrf.mxu0
    %v2793 = vadd.f32 %v2770, %v2792
    %2794 = vmatmul.f32.gmra.mxu0 %v1975
    %v2795 = vpop.f32.mrf.mxu0
    %v2796 = vadd.f32 %v2773, %v2795
    %2797 = vdwg.mxu0
    %2798 = vmatpush.msra.mxu0 %v2453
    %2799 = vmatpush.msra.mxu0 %v2447
    %2800 = vmatpush.msra.mxu0 %v2441
    %2801 = vmatpush.msra.mxu0 %v2435
    %2802 = vmatpush.msra.mxu0 %v2429
    %2803 = vmatpush.msra.mxu0 %v2423
    %2804 = vmatpush.msra.mxu0 %v2417
    %2805 = vmatpush.msra.mxu0 %v2411
    %2806 = vmatpush.msra.mxu0 %v2405
    %2807 = vmatpush.msra.mxu0 %v2399
    %2808 = vmatpush.msra.mxu0 %v2393
    %2809 = vmatpush.msra.mxu0 %v2387
    %2810 = vmatpush.msra.mxu0 %v2381
    %2811 = vmatpush.msra.mxu0 %v2375
    %2812 = vmatpush.msra.mxu0 %v2369
    %2813 = vmatpush.msra.mxu0 %v2363
    %2814 = vmatmul.f32.gmra.mxu0 %v1970
    %v2815 = vpop.f32.mrf.mxu0
    %v2816 = vadd.f32 %v2793, %v2815
    %2817 = vmatmul.f32.gmra.mxu0 %v1976
    %v2818 = vpop.f32.mrf.mxu0
    %v2819 = vadd.f32 %v2796, %v2818
    %2820 = vdwg.mxu0
    %2821 = vmatpush.msra.mxu0 %v2549
    %2822 = vmatpush.msra.mxu0 %v2543
    %2823 = vmatpush.msra.mxu0 %v2537
    %2824 = vmatpush.msra.mxu0 %v2531
    %2825 = vmatpush.msra.mxu0 %v2525
    %2826 = vmatpush.msra.mxu0 %v2519
    %2827 = vmatpush.msra.mxu0 %v2513
    %2828 = vmatpush.msra.mxu0 %v2507
    %2829 = vmatpush.msra.mxu0 %v2501
    %2830 = vmatpush.msra.mxu0 %v2495
    %2831 = vmatpush.msra.mxu0 %v2489
    %2832 = vmatpush.msra.mxu0 %v2483
    %2833 = vmatpush.msra.mxu0 %v2477
    %2834 = vmatpush.msra.mxu0 %v2471
    %2835 = vmatpush.msra.mxu0 %v2465
    %2836 = vmatpush.msra.mxu0 %v2459
    %2837 = vmatmul.f32.gmra.mxu0 %v1971
    %v2838 = vpop.f32.mrf.mxu0
    %v2839 = vadd.f32 %v2816, %v2838
    %2840 = vmatmul.f32.gmra.mxu0 %v1977
    %v2841 = vpop.f32.mrf.mxu0
    %v2842 = vadd.f32 %v2819, %v2841
    %2843 = vdwg.mxu0
    %2844 = vmatpush.msra.mxu0 %v2070
    %2845 = vmatpush.msra.mxu0 %v2064
    %2846 = vmatpush.msra.mxu0 %v2058
    %2847 = vmatpush.msra.mxu0 %v2052
    %2848 = vmatpush.msra.mxu0 %v2046
    %2849 = vmatpush.msra.mxu0 %v2040
    %2850 = vmatpush.msra.mxu0 %v2034
    %2851 = vmatpush.msra.mxu0 %v2028
    %2852 = vmatpush.msra.mxu0 %v2022
    %2853 = vmatpush.msra.mxu0 %v2016
    %2854 = vmatpush.msra.mxu0 %v2010
    %2855 = vmatpush.msra.mxu0 %v2004
    %2856 = vmatpush.msra.mxu0 %v1998
    %2857 = vmatpush.msra.mxu0 %v1992
    %2858 = vmatpush.msra.mxu0 %v1986
    %2859 = vmatpush.msra.mxu0 %v1980
    %2860 = vmatmul.f32.gmra.mxu0 %v1966
    %v2861 = vpop.f32.mrf.mxu0
    %v2862 = vadd.f32 %v2558, %v2861
    %2863 = vmatmul.f32.gmra.mxu0 %v1972
    %v2864 = vpop.f32.mrf.mxu0
    %v2865 = vadd.f32 %v2558, %v2864
    %2866 = vdwg.mxu0
    %2867 = vmatpush.msra.mxu0 %v2166
    %2868 = vmatpush.msra.mxu0 %v2160
    %2869 = vmatpush.msra.mxu0 %v2154
    %2870 = vmatpush.msra.mxu0 %v2148
    %2871 = vmatpush.msra.mxu0 %v2142
    %2872 = vmatpush.msra.mxu0 %v2136
    %2873 = vmatpush.msra.mxu0 %v2130
    %2874 = vmatpush.msra.mxu0 %v2124
    %2875 = vmatpush.msra.mxu0 %v2118
    %2876 = vmatpush.msra.mxu0 %v2112
    %2877 = vmatpush.msra.mxu0 %v2106
    %2878 = vmatpush.msra.mxu0 %v2100
    %2879 = vmatpush.msra.mxu0 %v2094
    %2880 = vmatpush.msra.mxu0 %v2088
    %2881 = vmatpush.msra.mxu0 %v2082
    %2882 = vmatpush.msra.mxu0 %v2076
    %2883 = vmatmul.f32.gmra.mxu0 %v1967
    %v2884 = vpop.f32.mrf.mxu0
    %v2885 = vadd.f32 %v2862, %v2884
    %2886 = vmatmul.f32.gmra.mxu0 %v1973
    %v2887 = vpop.f32.mrf.mxu0
    %v2888 = vadd.f32 %v2865, %v2887
    %2889 = vdwg.mxu0
    %2890 = vmatpush.msra.mxu0 %v2262
    %2891 = vmatpush.msra.mxu0 %v2256
    %2892 = vmatpush.msra.mxu0 %v2250
    %2893 = vmatpush.msra.mxu0 %v2244
    %2894 = vmatpush.msra.mxu0 %v2238
    %2895 = vmatpush.msra.mxu0 %v2232
    %2896 = vmatpush.msra.mxu0 %v2226
    %2897 = vmatpush.msra.mxu0 %v2220
    %2898 = vmatpush.msra.mxu0 %v2214
    %2899 = vmatpush.msra.mxu0 %v2208
    %2900 = vmatpush.msra.mxu0 %v2202
    %2901 = vmatpush.msra.mxu0 %v2196
    %2902 = vmatpush.msra.mxu0 %v2190
    %2903 = vmatpush.msra.mxu0 %v2184
    %2904 = vmatpush.msra.mxu0 %v2178
    %2905 = vmatpush.msra.mxu0 %v2172
    %2906 = vmatmul.f32.gmra.mxu0 %v1968
    %v2907 = vpop.f32.mrf.mxu0
    %v2908 = vadd.f32 %v2885, %v2907
    %2909 = vmatmul.f32.gmra.mxu0 %v1974
    %v2910 = vpop.f32.mrf.mxu0
    %v2911 = vadd.f32 %v2888, %v2910
    %2912 = vdwg.mxu0
    %2913 = vmatpush.msra.mxu0 %v2358
    %2914 = vmatpush.msra.mxu0 %v2352
    %2915 = vmatpush.msra.mxu0 %v2346
    %2916 = vmatpush.msra.mxu0 %v2340
    %2917 = vmatpush.msra.mxu0 %v2334
    %2918 = vmatpush.msra.mxu0 %v2328
    %2919 = vmatpush.msra.mxu0 %v2322
    %2920 = vmatpush.msra.mxu0 %v2316
    %2921 = vmatpush.msra.mxu0 %v2310
    %2922 = vmatpush.msra.mxu0 %v2304
    %2923 = vmatpush.msra.mxu0 %v2298
    %2924 = vmatpush.msra.mxu0 %v2292
    %2925 = vmatpush.msra.mxu0 %v2286
    %2926 = vmatpush.msra.mxu0 %v2280
    %2927 = vmatpush.msra.mxu0 %v2274
    %2928 = vmatpush.msra.mxu0 %v2268
    %2929 = vmatmul.f32.gmra.mxu0 %v1969
    %v2930 = vpop.f32.mrf.mxu0
    %v2931 = vadd.f32 %v2908, %v2930
    %2932 = vmatmul.f32.gmra.mxu0 %v1975
    %v2933 = vpop.f32.mrf.mxu0
    %v2934 = vadd.f32 %v2911, %v2933
    %2935 = vdwg.mxu0
    %2936 = vmatpush.msra.mxu0 %v2454
    %2937 = vmatpush.msra.mxu0 %v2448
    %2938 = vmatpush.msra.mxu0 %v2442
    %2939 = vmatpush.msra.mxu0 %v2436
    %2940 = vmatpush.msra.mxu0 %v2430
    %2941 = vmatpush.msra.mxu0 %v2424
    %2942 = vmatpush.msra.mxu0 %v2418
    %2943 = vmatpush.msra.mxu0 %v2412
    %2944 = vmatpush.msra.mxu0 %v2406
    %2945 = vmatpush.msra.mxu0 %v2400
    %2946 = vmatpush.msra.mxu0 %v2394
    %2947 = vmatpush.msra.mxu0 %v2388
    %2948 = vmatpush.msra.mxu0 %v2382
    %2949 = vmatpush.msra.mxu0 %v2376
    %2950 = vmatpush.msra.mxu0 %v2370
    %2951 = vmatpush.msra.mxu0 %v2364
    %2952 = vmatmul.f32.gmra.mxu0 %v1970
    %v2953 = vpop.f32.mrf.mxu0
    %v2954 = vadd.f32 %v2931, %v2953
    %2955 = vmatmul.f32.gmra.mxu0 %v1976
    %v2956 = vpop.f32.mrf.mxu0
    %v2957 = vadd.f32 %v2934, %v2956
    %2958 = vdwg.mxu0
    %2959 = vmatpush.msra.mxu0 %v2550
    %2960 = vmatpush.msra.mxu0 %v2544
    %2961 = vmatpush.msra.mxu0 %v2538
    %2962 = vmatpush.msra.mxu0 %v2532
    %2963 = vmatpush.msra.mxu0 %v2526
    %2964 = vmatpush.msra.mxu0 %v2520
    %2965 = vmatpush.msra.mxu0 %v2514
    %2966 = vmatpush.msra.mxu0 %v2508
    %2967 = vmatpush.msra.mxu0 %v2502
    %2968 = vmatpush.msra.mxu0 %v2496
    %2969 = vmatpush.msra.mxu0 %v2490
    %2970 = vmatpush.msra.mxu0 %v2484
    %2971 = vmatpush.msra.mxu0 %v2478
    %2972 = vmatpush.msra.mxu0 %v2472
    %2973 = vmatpush.msra.mxu0 %v2466
    %2974 = vmatpush.msra.mxu0 %v2460
    %2975 = vmatmul.f32.gmra.mxu0 %v1971
    %v2976 = vpop.f32.mrf.mxu0
    %v2977 = vadd.f32 %v2954, %v2976
    %2978 = vmatmul.f32.gmra.mxu0 %v1977
    %v2979 = vpop.f32.mrf.mxu0
    %v2980 = vadd.f32 %v2957, %v2979
    %2981 = vdwg.mxu0
    %2982 = vmatpush.msra.mxu0 %v2071
    %2983 = vmatpush.msra.mxu0 %v2065
    %2984 = vmatpush.msra.mxu0 %v2059
    %2985 = vmatpush.msra.mxu0 %v2053
    %2986 = vmatpush.msra.mxu0 %v2047
    %2987 = vmatpush.msra.mxu0 %v2041
    %2988 = vmatpush.msra.mxu0 %v2035
    %2989 = vmatpush.msra.mxu0 %v2029
    %2990 = vmatpush.msra.mxu0 %v2023
    %2991 = vmatpush.msra.mxu0 %v2017
    %2992 = vmatpush.msra.mxu0 %v2011
    %2993 = vmatpush.msra.mxu0 %v2005
    %2994 = vmatpush.msra.mxu0 %v1999
    %2995 = vmatpush.msra.mxu0 %v1993
    %2996 = vmatpush.msra.mxu0 %v1987
    %2997 = vmatpush.msra.mxu0 %v1981
    %2998 = vmatmul.f32.gmra.mxu0 %v1966
    %v2999 = vpop.f32.mrf.mxu0
    %v3000 = vadd.f32 %v2559, %v2999
    %3001 = vmatmul.f32.gmra.mxu0 %v1972
    %v3002 = vpop.f32.mrf.mxu0
    %v3003 = vadd.f32 %v2559, %v3002
    %3004 = vdwg.mxu0
    %3005 = vmatpush.msra.mxu0 %v2167
    %3006 = vmatpush.msra.mxu0 %v2161
    %3007 = vmatpush.msra.mxu0 %v2155
    %3008 = vmatpush.msra.mxu0 %v2149
    %3009 = vmatpush.msra.mxu0 %v2143
    %3010 = vmatpush.msra.mxu0 %v2137
    %3011 = vmatpush.msra.mxu0 %v2131
    %3012 = vmatpush.msra.mxu0 %v2125
    %3013 = vmatpush.msra.mxu0 %v2119
    %3014 = vmatpush.msra.mxu0 %v2113
    %3015 = vmatpush.msra.mxu0 %v2107
    %3016 = vmatpush.msra.mxu0 %v2101
    %3017 = vmatpush.msra.mxu0 %v2095
    %3018 = vmatpush.msra.mxu0 %v2089
    %3019 = vmatpush.msra.mxu0 %v2083
    %3020 = vmatpush.msra.mxu0 %v2077
    %3021 = vmatmul.f32.gmra.mxu0 %v1967
    %v3022 = vpop.f32.mrf.mxu0
    %v3023 = vadd.f32 %v3000, %v3022
    %3024 = vmatmul.f32.gmra.mxu0 %v1973
    %v3025 = vpop.f32.mrf.mxu0
    %v3026 = vadd.f32 %v3003, %v3025
    %3027 = vdwg.mxu0
    %3028 = vmatpush.msra.mxu0 %v2263
    %3029 = vmatpush.msra.mxu0 %v2257
    %3030 = vmatpush.msra.mxu0 %v2251
    %3031 = vmatpush.msra.mxu0 %v2245
    %3032 = vmatpush.msra.mxu0 %v2239
    %3033 = vmatpush.msra.mxu0 %v2233
    %3034 = vmatpush.msra.mxu0 %v2227
    %3035 = vmatpush.msra.mxu0 %v2221
    %3036 = vmatpush.msra.mxu0 %v2215
    %3037 = vmatpush.msra.mxu0 %v2209
    %3038 = vmatpush.msra.mxu0 %v2203
    %3039 = vmatpush.msra.mxu0 %v2197
    %3040 = vmatpush.msra.mxu0 %v2191
    %3041 = vmatpush.msra.mxu0 %v2185
    %3042 = vmatpush.msra.mxu0 %v2179
    %3043 = vmatpush.msra.mxu0 %v2173
    %3044 = vmatmul.f32.gmra.mxu0 %v1968
    %v3045 = vpop.f32.mrf.mxu0
    %v3046 = vadd.f32 %v3023, %v3045
    %3047 = vmatmul.f32.gmra.mxu0 %v1974
    %v3048 = vpop.f32.mrf.mxu0
    %v3049 = vadd.f32 %v3026, %v3048
    %3050 = vdwg.mxu0
    %3051 = vmatpush.msra.mxu0 %v2359
    %3052 = vmatpush.msra.mxu0 %v2353
    %3053 = vmatpush.msra.mxu0 %v2347
    %3054 = vmatpush.msra.mxu0 %v2341
    %3055 = vmatpush.msra.mxu0 %v2335
    %3056 = vmatpush.msra.mxu0 %v2329
    %3057 = vmatpush.msra.mxu0 %v2323
    %3058 = vmatpush.msra.mxu0 %v2317
    %3059 = vmatpush.msra.mxu0 %v2311
    %3060 = vmatpush.msra.mxu0 %v2305
    %3061 = vmatpush.msra.mxu0 %v2299
    %3062 = vmatpush.msra.mxu0 %v2293
    %3063 = vmatpush.msra.mxu0 %v2287
    %3064 = vmatpush.msra.mxu0 %v2281
    %3065 = vmatpush.msra.mxu0 %v2275
    %3066 = vmatpush.msra.mxu0 %v2269
    %3067 = vmatmul.f32.gmra.mxu0 %v1969
    %v3068 = vpop.f32.mrf.mxu0
    %v3069 = vadd.f32 %v3046, %v3068
    %3070 = vmatmul.f32.gmra.mxu0 %v1975
    %v3071 = vpop.f32.mrf.mxu0
    %v3072 = vadd.f32 %v3049, %v3071
    %3073 = vdwg.mxu0
    %3074 = vmatpush.msra.mxu0 %v2455
    %3075 = vmatpush.msra.mxu0 %v2449
    %3076 = vmatpush.msra.mxu0 %v2443
    %3077 = vmatpush.msra.mxu0 %v2437
    %3078 = vmatpush.msra.mxu0 %v2431
    %3079 = vmatpush.msra.mxu0 %v2425
    %3080 = vmatpush.msra.mxu0 %v2419
    %3081 = vmatpush.msra.mxu0 %v2413
    %3082 = vmatpush.msra.mxu0 %v2407
    %3083 = vmatpush.msra.mxu0 %v2401
    %3084 = vmatpush.msra.mxu0 %v2395
    %3085 = vmatpush.msra.mxu0 %v2389
    %3086 = vmatpush.msra.mxu0 %v2383
    %3087 = vmatpush.msra.mxu0 %v2377
    %3088 = vmatpush.msra.mxu0 %v2371
    %3089 = vmatpush.msra.mxu0 %v2365
    %3090 = vmatmul.f32.gmra.mxu0 %v1970
    %v3091 = vpop.f32.mrf.mxu0
    %v3092 = vadd.f32 %v3069, %v3091
    %3093 = vmatmul.f32.gmra.mxu0 %v1976
    %v3094 = vpop.f32.mrf.mxu0
    %v3095 = vadd.f32 %v3072, %v3094
    %3096 = vdwg.mxu0
    %3097 = vmatpush.msra.mxu0 %v2551
    %3098 = vmatpush.msra.mxu0 %v2545
    %3099 = vmatpush.msra.mxu0 %v2539
    %3100 = vmatpush.msra.mxu0 %v2533
    %3101 = vmatpush.msra.mxu0 %v2527
    %3102 = vmatpush.msra.mxu0 %v2521
    %3103 = vmatpush.msra.mxu0 %v2515
    %3104 = vmatpush.msra.mxu0 %v2509
    %3105 = vmatpush.msra.mxu0 %v2503
    %3106 = vmatpush.msra.mxu0 %v2497
    %3107 = vmatpush.msra.mxu0 %v2491
    %3108 = vmatpush.msra.mxu0 %v2485
    %3109 = vmatpush.msra.mxu0 %v2479
    %3110 = vmatpush.msra.mxu0 %v2473
    %3111 = vmatpush.msra.mxu0 %v2467
    %3112 = vmatpush.msra.mxu0 %v2461
    %3113 = vmatmul.f32.gmra.mxu0 %v1971
    %v3114 = vpop.f32.mrf.mxu0
    %v3115 = vadd.f32 %v3092, %v3114
    %3116 = vmatmul.f32.gmra.mxu0 %v1977
    %v3117 = vpop.f32.mrf.mxu0
    %v3118 = vadd.f32 %v3095, %v3117
    %3119 = vdwg.mxu0
    %3120 = vmatpush.msra.mxu0 %v2072
    %3121 = vmatpush.msra.mxu0 %v2066
    %3122 = vmatpush.msra.mxu0 %v2060
    %3123 = vmatpush.msra.mxu0 %v2054
    %3124 = vmatpush.msra.mxu0 %v2048
    %3125 = vmatpush.msra.mxu0 %v2042
    %3126 = vmatpush.msra.mxu0 %v2036
    %3127 = vmatpush.msra.mxu0 %v2030
    %3128 = vmatpush.msra.mxu0 %v2024
    %3129 = vmatpush.msra.mxu0 %v2018
    %3130 = vmatpush.msra.mxu0 %v2012
    %3131 = vmatpush.msra.mxu0 %v2006
    %3132 = vmatpush.msra.mxu0 %v2000
    %3133 = vmatpush.msra.mxu0 %v1994
    %3134 = vmatpush.msra.mxu0 %v1988
    %3135 = vmatpush.msra.mxu0 %v1982
    %3136 = vmatmul.f32.gmra.mxu0 %v1966
    %v3137 = vpop.f32.mrf.mxu0
    %v3138 = vadd.f32 %v2560, %v3137
    %3139 = vmatmul.f32.gmra.mxu0 %v1972
    %v3140 = vpop.f32.mrf.mxu0
    %v3141 = vadd.f32 %v2560, %v3140
    %3142 = vdwg.mxu0
    %3143 = vmatpush.msra.mxu0 %v2168
    %3144 = vmatpush.msra.mxu0 %v2162
    %3145 = vmatpush.msra.mxu0 %v2156
    %3146 = vmatpush.msra.mxu0 %v2150
    %3147 = vmatpush.msra.mxu0 %v2144
    %3148 = vmatpush.msra.mxu0 %v2138
    %3149 = vmatpush.msra.mxu0 %v2132
    %3150 = vmatpush.msra.mxu0 %v2126
    %3151 = vmatpush.msra.mxu0 %v2120
    %3152 = vmatpush.msra.mxu0 %v2114
    %3153 = vmatpush.msra.mxu0 %v2108
    %3154 = vmatpush.msra.mxu0 %v2102
    %3155 = vmatpush.msra.mxu0 %v2096
    %3156 = vmatpush.msra.mxu0 %v2090
    %3157 = vmatpush.msra.mxu0 %v2084
    %3158 = vmatpush.msra.mxu0 %v2078
    %3159 = vmatmul.f32.gmra.mxu0 %v1967
    %v3160 = vpop.f32.mrf.mxu0
    %v3161 = vadd.f32 %v3138, %v3160
    %3162 = vmatmul.f32.gmra.mxu0 %v1973
    %v3163 = vpop.f32.mrf.mxu0
    %v3164 = vadd.f32 %v3141, %v3163
    %3165 = vdwg.mxu0
    %3166 = vmatpush.msra.mxu0 %v2264
    %3167 = vmatpush.msra.mxu0 %v2258
    %3168 = vmatpush.msra.mxu0 %v2252
    %3169 = vmatpush.msra.mxu0 %v2246
    %3170 = vmatpush.msra.mxu0 %v2240
    %3171 = vmatpush.msra.mxu0 %v2234
    %3172 = vmatpush.msra.mxu0 %v2228
    %3173 = vmatpush.msra.mxu0 %v2222
    %3174 = vmatpush.msra.mxu0 %v2216
    %3175 = vmatpush.msra.mxu0 %v2210
    %3176 = vmatpush.msra.mxu0 %v2204
    %3177 = vmatpush.msra.mxu0 %v2198
    %3178 = vmatpush.msra.mxu0 %v2192
    %3179 = vmatpush.msra.mxu0 %v2186
    %3180 = vmatpush.msra.mxu0 %v2180
    %3181 = vmatpush.msra.mxu0 %v2174
    %3182 = vmatmul.f32.gmra.mxu0 %v1968
    %v3183 = vpop.f32.mrf.mxu0
    %v3184 = vadd.f32 %v3161, %v3183
    %3185 = vmatmul.f32.gmra.mxu0 %v1974
    %v3186 = vpop.f32.mrf.mxu0
    %v3187 = vadd.f32 %v3164, %v3186
    %3188 = vdwg.mxu0
    %3189 = vmatpush.msra.mxu0 %v2360
    %3190 = vmatpush.msra.mxu0 %v2354
    %3191 = vmatpush.msra.mxu0 %v2348
    %3192 = vmatpush.msra.mxu0 %v2342
    %3193 = vmatpush.msra.mxu0 %v2336
    %3194 = vmatpush.msra.mxu0 %v2330
    %3195 = vmatpush.msra.mxu0 %v2324
    %3196 = vmatpush.msra.mxu0 %v2318
    %3197 = vmatpush.msra.mxu0 %v2312
    %3198 = vmatpush.msra.mxu0 %v2306
    %3199 = vmatpush.msra.mxu0 %v2300
    %3200 = vmatpush.msra.mxu0 %v2294
    %3201 = vmatpush.msra.mxu0 %v2288
    %3202 = vmatpush.msra.mxu0 %v2282
    %3203 = vmatpush.msra.mxu0 %v2276
    %3204 = vmatpush.msra.mxu0 %v2270
    %3205 = vmatmul.f32.gmra.mxu0 %v1969
    %v3206 = vpop.f32.mrf.mxu0
    %v3207 = vadd.f32 %v3184, %v3206
    %3208 = vmatmul.f32.gmra.mxu0 %v1975
    %v3209 = vpop.f32.mrf.mxu0
    %v3210 = vadd.f32 %v3187, %v3209
    %3211 = vdwg.mxu0
    %3212 = vmatpush.msra.mxu0 %v2456
    %3213 = vmatpush.msra.mxu0 %v2450
    %3214 = vmatpush.msra.mxu0 %v2444
    %3215 = vmatpush.msra.mxu0 %v2438
    %3216 = vmatpush.msra.mxu0 %v2432
    %3217 = vmatpush.msra.mxu0 %v2426
    %3218 = vmatpush.msra.mxu0 %v2420
    %3219 = vmatpush.msra.mxu0 %v2414
    %3220 = vmatpush.msra.mxu0 %v2408
    %3221 = vmatpush.msra.mxu0 %v2402
    %3222 = vmatpush.msra.mxu0 %v2396
    %3223 = vmatpush.msra.mxu0 %v2390
    %3224 = vmatpush.msra.mxu0 %v2384
    %3225 = vmatpush.msra.mxu0 %v2378
    %3226 = vmatpush.msra.mxu0 %v2372
    %3227 = vmatpush.msra.mxu0 %v2366
    %3228 = vmatmul.f32.gmra.mxu0 %v1970
    %v3229 = vpop.f32.mrf.mxu0
    %v3230 = vadd.f32 %v3207, %v3229
    %3231 = vmatmul.f32.gmra.mxu0 %v1976
    %v3232 = vpop.f32.mrf.mxu0
    %v3233 = vadd.f32 %v3210, %v3232
    %3234 = vdwg.mxu0
    %3235 = vmatpush.msra.mxu0 %v2552
    %3236 = vmatpush.msra.mxu0 %v2546
    %3237 = vmatpush.msra.mxu0 %v2540
    %3238 = vmatpush.msra.mxu0 %v2534
    %3239 = vmatpush.msra.mxu0 %v2528
    %3240 = vmatpush.msra.mxu0 %v2522
    %3241 = vmatpush.msra.mxu0 %v2516
    %3242 = vmatpush.msra.mxu0 %v2510
    %3243 = vmatpush.msra.mxu0 %v2504
    %3244 = vmatpush.msra.mxu0 %v2498
    %3245 = vmatpush.msra.mxu0 %v2492
    %3246 = vmatpush.msra.mxu0 %v2486
    %3247 = vmatpush.msra.mxu0 %v2480
    %3248 = vmatpush.msra.mxu0 %v2474
    %3249 = vmatpush.msra.mxu0 %v2468
    %3250 = vmatpush.msra.mxu0 %v2462
    %3251 = vmatmul.f32.gmra.mxu0 %v1971
    %v3252 = vpop.f32.mrf.mxu0
    %v3253 = vadd.f32 %v3230, %v3252
    %3254 = vmatmul.f32.gmra.mxu0 %v1977
    %v3255 = vpop.f32.mrf.mxu0
    %v3256 = vadd.f32 %v3233, %v3255
    %3257 = vdwg.mxu0
    %3258 = vmatpush.msra.mxu0 %v2073
    %3259 = vmatpush.msra.mxu0 %v2067
    %3260 = vmatpush.msra.mxu0 %v2061
    %3261 = vmatpush.msra.mxu0 %v2055
    %3262 = vmatpush.msra.mxu0 %v2049
    %3263 = vmatpush.msra.mxu0 %v2043
    %3264 = vmatpush.msra.mxu0 %v2037
    %3265 = vmatpush.msra.mxu0 %v2031
    %3266 = vmatpush.msra.mxu0 %v2025
    %3267 = vmatpush.msra.mxu0 %v2019
    %3268 = vmatpush.msra.mxu0 %v2013
    %3269 = vmatpush.msra.mxu0 %v2007
    %3270 = vmatpush.msra.mxu0 %v2001
    %3271 = vmatpush.msra.mxu0 %v1995
    %3272 = vmatpush.msra.mxu0 %v1989
    %3273 = vmatpush.msra.mxu0 %v1983
    %3274 = vmatmul.f32.gmra.mxu0 %v1966
    %v3275 = vpop.f32.mrf.mxu0
    %v3276 = vadd.f32 %v2561, %v3275
    %3277 = vmatmul.f32.gmra.mxu0 %v1972
    %v3278 = vpop.f32.mrf.mxu0
    %v3279 = vadd.f32 %v2561, %v3278
    %3280 = vdwg.mxu0
    %3281 = vmatpush.msra.mxu0 %v2169
    %3282 = vmatpush.msra.mxu0 %v2163
    %3283 = vmatpush.msra.mxu0 %v2157
    %3284 = vmatpush.msra.mxu0 %v2151
    %3285 = vmatpush.msra.mxu0 %v2145
    %3286 = vmatpush.msra.mxu0 %v2139
    %3287 = vmatpush.msra.mxu0 %v2133
    %3288 = vmatpush.msra.mxu0 %v2127
    %3289 = vmatpush.msra.mxu0 %v2121
    %3290 = vmatpush.msra.mxu0 %v2115
    %3291 = vmatpush.msra.mxu0 %v2109
    %3292 = vmatpush.msra.mxu0 %v2103
    %3293 = vmatpush.msra.mxu0 %v2097
    %3294 = vmatpush.msra.mxu0 %v2091
    %3295 = vmatpush.msra.mxu0 %v2085
    %3296 = vmatpush.msra.mxu0 %v2079
    %3297 = vmatmul.f32.gmra.mxu0 %v1967
    %v3298 = vpop.f32.mrf.mxu0
    %v3299 = vadd.f32 %v3276, %v3298
    %3300 = vmatmul.f32.gmra.mxu0 %v1973
    %v3301 = vpop.f32.mrf.mxu0
    %v3302 = vadd.f32 %v3279, %v3301
    %3303 = vdwg.mxu0
    %3304 = vmatpush.msra.mxu0 %v2265
    %3305 = vmatpush.msra.mxu0 %v2259
    %3306 = vmatpush.msra.mxu0 %v2253
    %3307 = vmatpush.msra.mxu0 %v2247
    %3308 = vmatpush.msra.mxu0 %v2241
    %3309 = vmatpush.msra.mxu0 %v2235
    %3310 = vmatpush.msra.mxu0 %v2229
    %3311 = vmatpush.msra.mxu0 %v2223
    %3312 = vmatpush.msra.mxu0 %v2217
    %3313 = vmatpush.msra.mxu0 %v2211
    %3314 = vmatpush.msra.mxu0 %v2205
    %3315 = vmatpush.msra.mxu0 %v2199
    %3316 = vmatpush.msra.mxu0 %v2193
    %3317 = vmatpush.msra.mxu0 %v2187
    %3318 = vmatpush.msra.mxu0 %v2181
    %3319 = vmatpush.msra.mxu0 %v2175
    %3320 = vmatmul.f32.gmra.mxu0 %v1968
    %v3321 = vpop.f32.mrf.mxu0
    %v3322 = vadd.f32 %v3299, %v3321
    %3323 = vmatmul.f32.gmra.mxu0 %v1974
    %v3324 = vpop.f32.mrf.mxu0
    %v3325 = vadd.f32 %v3302, %v3324
    %3326 = vdwg.mxu0
    %3327 = vmatpush.msra.mxu0 %v2361
    %3328 = vmatpush.msra.mxu0 %v2355
    %3329 = vmatpush.msra.mxu0 %v2349
    %3330 = vmatpush.msra.mxu0 %v2343
    %3331 = vmatpush.msra.mxu0 %v2337
    %3332 = vmatpush.msra.mxu0 %v2331
    %3333 = vmatpush.msra.mxu0 %v2325
    %3334 = vmatpush.msra.mxu0 %v2319
    %3335 = vmatpush.msra.mxu0 %v2313
    %3336 = vmatpush.msra.mxu0 %v2307
    %3337 = vmatpush.msra.mxu0 %v2301
    %3338 = vmatpush.msra.mxu0 %v2295
    %3339 = vmatpush.msra.mxu0 %v2289
    %3340 = vmatpush.msra.mxu0 %v2283
    %3341 = vmatpush.msra.mxu0 %v2277
    %3342 = vmatpush.msra.mxu0 %v2271
    %3343 = vmatmul.f32.gmra.mxu0 %v1969
    %v3344 = vpop.f32.mrf.mxu0
    %v3345 = vadd.f32 %v3322, %v3344
    %3346 = vmatmul.f32.gmra.mxu0 %v1975
    %v3347 = vpop.f32.mrf.mxu0
    %v3348 = vadd.f32 %v3325, %v3347
    %3349 = vdwg.mxu0
    %3350 = vmatpush.msra.mxu0 %v2457
    %3351 = vmatpush.msra.mxu0 %v2451
    %3352 = vmatpush.msra.mxu0 %v2445
    %3353 = vmatpush.msra.mxu0 %v2439
    %3354 = vmatpush.msra.mxu0 %v2433
    %3355 = vmatpush.msra.mxu0 %v2427
    %3356 = vmatpush.msra.mxu0 %v2421
    %3357 = vmatpush.msra.mxu0 %v2415
    %3358 = vmatpush.msra.mxu0 %v2409
    %3359 = vmatpush.msra.mxu0 %v2403
    %3360 = vmatpush.msra.mxu0 %v2397
    %3361 = vmatpush.msra.mxu0 %v2391
    %3362 = vmatpush.msra.mxu0 %v2385
    %3363 = vmatpush.msra.mxu0 %v2379
    %3364 = vmatpush.msra.mxu0 %v2373
    %3365 = vmatpush.msra.mxu0 %v2367
    %3366 = vmatmul.f32.gmra.mxu0 %v1970
    %v3367 = vpop.f32.mrf.mxu0
    %v3368 = vadd.f32 %v3345, %v3367
    %3369 = vmatmul.f32.gmra.mxu0 %v1976
    %v3370 = vpop.f32.mrf.mxu0
    %v3371 = vadd.f32 %v3348, %v3370
    %3372 = vdwg.mxu0
    %3373 = vmatpush.msra.mxu0 %v2553
    %3374 = vmatpush.msra.mxu0 %v2547
    %3375 = vmatpush.msra.mxu0 %v2541
    %3376 = vmatpush.msra.mxu0 %v2535
    %3377 = vmatpush.msra.mxu0 %v2529
    %3378 = vmatpush.msra.mxu0 %v2523
    %3379 = vmatpush.msra.mxu0 %v2517
    %3380 = vmatpush.msra.mxu0 %v2511
    %3381 = vmatpush.msra.mxu0 %v2505
    %3382 = vmatpush.msra.mxu0 %v2499
    %3383 = vmatpush.msra.mxu0 %v2493
    %3384 = vmatpush.msra.mxu0 %v2487
    %3385 = vmatpush.msra.mxu0 %v2481
    %3386 = vmatpush.msra.mxu0 %v2475
    %3387 = vmatpush.msra.mxu0 %v2469
    %3388 = vmatpush.msra.mxu0 %v2463
    %3389 = vmatmul.f32.gmra.mxu0 %v1971
    %v3390 = vpop.f32.mrf.mxu0
    %v3391 = vadd.f32 %v3368, %v3390
    %3392 = vmatmul.f32.gmra.mxu0 %v1977
    %v3393 = vpop.f32.mrf.mxu0
    %v3394 = vadd.f32 %v3371, %v3393
    %3395 = vdwg.mxu0
    %3396 = vst [vmem:[#allocation8] sm:$0xff] %v2701
    %3397 = vst [vmem:[#allocation8 + $0x8] sm:$0xff] %v2839
    %3398 = vst [vmem:[#allocation8 + $0x10] sm:$0xff] %v2977
    %3399 = vst [vmem:[#allocation8 + $0x18] sm:$0xff] %v3115
    %3400 = vst [vmem:[#allocation8 + $0x20] sm:$0xff] %v3253
    %3401 = vst [vmem:[#allocation8 + $0x28] sm:$0xff] %v3391
    %3402 = vst [vmem:[#allocation8 + $0x30] sm:$0xff] %v2704
    %3403 = vst [vmem:[#allocation8 + $0x38] sm:$0xff] %v2842
    %3404 = vst [vmem:[#allocation8 + $0x40] sm:$0xff] %v2980
    %3405 = vst [vmem:[#allocation8 + $0x48] sm:$0xff] %v3118
    %3406 = vst [vmem:[#allocation8 + $0x50] sm:$0xff] %v3256
    %3407 = vst [vmem:[#allocation8 + $0x58] sm:$0xff] %v3394
    // Predicated region
    $region34: #{feed_forward.1} parent=1 // pred_check
      _
    $region35: #{feed_forward.1} parent=1 // pred_check_branch
      %3409 = sbr.rel (0) target = $region37
    $region36: #{feed_forward.1} parent=1 // pred_region
      %3411 = vsyncadd [#allocation4], 0
      %s3412 = sshll.u32 [#allocation8], 4
      %s3413 = int_to_ptr.vmem [resolvable:$true] %s3412
      %s3414 = sshll.u32 %s5, 4
      %s3415 = int_to_ptr.hbm [resolvable:$true] %s3414
      %3420 = dma.vmem_to_hbm [thread:$0]  %s3413, 1536, %s3415, [#allocation4], 768, 768, 48
    $region37: #{feed_forward.1} parent=1 // pred_fallthru
      _
    // Predicated region
    $region38: #{feed_forward.1} parent=1 // pred_check
      _
    $region39: #{feed_forward.1} parent=1 // pred_check_branch
      %3422 = sbr.rel (0) target = $region41
    $region40: #{feed_forward.1} parent=1 // pred_region
      %3424 = dma.done [#allocation4], 1536
    $region41: #{feed_forward.1} parent=1 // pred_fallthru
      _
    %3425 = vsyncpa [#allocation3], 1
    %3426 = vsyncpa [#allocation6], 1
    %3427 = vsyncpa [#allocation4], 1

</llo_original>
